<compile_context>
chip_gen: v7x
topology: tpu7x:2x2x1
jax: 0.10.0
libtpu: 0.0.40
codegen_flags: <defaults>
</compile_context>

<pallas_src>
import functools

import jax
import jax.numpy as jnp
from jax import lax
from jax.experimental import pallas as pl
from jax.experimental.pallas import tpu as pltpu


# -----------------------------------------------------------------------------
# Helpers
# -----------------------------------------------------------------------------
def _pick_lane_tile(n, target=2048):
    """Largest multiple of 128 dividing n (<= target); falls back to n."""
    if n % 128 != 0:
        return n
    t = min(n, target)
    t -= t % 128
    while t > 0 and n % t != 0:
        t -= 128
    return t if t > 0 else n


# -----------------------------------------------------------------------------
# Kernel 1: fused 1x1 Conv2d + BN + ReLU for BOTH views in one pallas_call.
#           Reads NCHW directly (channels on sublanes, flat spatial on lanes)
#           and emits exactly the layout the fused conv3d kernel consumes.
# -----------------------------------------------------------------------------
def downsample_pallas(xl, xr, w_s, sh):
    """xl/xr: (B, Cin, W*H) f32; w_s: (C, Cin) BN-scale folded; sh: (C, 1)."""
    B, Cin, WH = xl.shape
    C = w_s.shape[0]
    pt = _pick_lane_tile(WH)
    grid = (B, WH // pt)

    def kernel(xl_ref, xr_ref, w_ref, sh_ref, ol_ref, or_ref):
        w = w_ref[...]                                   # (C, Cin), scale folded
        s = sh_ref[...]                                  # (C, 1)
        ol_ref[0] = jnp.maximum(
            jnp.dot(w, xl_ref[0], preferred_element_type=jnp.float32) + s, 0.0)
        or_ref[0] = jnp.maximum(
            jnp.dot(w, xr_ref[0], preferred_element_type=jnp.float32) + s, 0.0)

    out_sd = jax.ShapeDtypeStruct((B, C, WH), jnp.float32)
    return pl.pallas_call(
        kernel,
        out_shape=(out_sd, out_sd),
        grid_spec=pltpu.PrefetchScalarGridSpec(
            num_scalar_prefetch=0,
            grid=grid,
            in_specs=[
                pl.BlockSpec((1, Cin, pt), lambda b, j: (b, 0, j)),
                pl.BlockSpec((1, Cin, pt), lambda b, j: (b, 0, j)),
                pl.BlockSpec((C, Cin), lambda b, j: (0, 0)),
                pl.BlockSpec((C, 1), lambda b, j: (0, 0)),
            ],
            out_specs=(
                pl.BlockSpec((1, C, pt), lambda b, j: (b, 0, j)),
                pl.BlockSpec((1, C, pt), lambda b, j: (b, 0, j)),
            ),
        ),
        compiler_params=pltpu.CompilerParams(
            dimension_semantics=("parallel", "parallel"),
            vmem_limit_bytes=48 * 1024 * 1024,
        ),
    )(xl, xr, w_s, sh)


# -----------------------------------------------------------------------------
# Kernel 2: fused cost-volume build + conv3d#1 + BN + ReLU + conv3d#2 + BN +
#           ReLU.  The conv#1 volume lives only in a 3-plane VMEM ring buffer.
# -----------------------------------------------------------------------------
def costvol_conv3d_fused_pallas(lf, rf, w_idx, h_idx, w1t, sh1, w2t, sh2,
                                depth, W, H):
    """lf/rf: (B, C, W*H) flat channel-on-sublane feature planes
       w1t:   (C, 54*C)  BN-scale folded, columns ordered (kd, kw, kh, [L|R] c)
       w2t:   (C, 27*C)  BN-scale folded, columns ordered (kd, kw, kh, c)
       out:   (B, C, D*W*H)  == (B, C, D, W, H) contiguous (free final reshape)
    """
    B, C, WH = lf.shape
    D = depth
    assert WH == W * H
    assert WH % 128 == 0, "TODO(synk): lane-pad W*H for non-128-multiple shapes"
    assert D >= 2
    K1 = w1t.shape[1]
    K2 = w2t.shape[1]

    def kernel(lf_ref, rf_ref, wi_ref, hi_ref, w1_ref, sh1_ref, w2_ref, sh2_ref,
               o_ref, ring_ref, col1_ref, col2_ref):
        d = pl.program_id(1)

        w_i = wi_ref[...]                                 # (1, WH) int32 row idx
        h_i = hi_ref[...]                                 # (1, WH) int32 col idx

        # Static spatial-tap validity masks (conv zero padding along W and H).
        smask = []
        for kw in range(3):
            for kh in range(3):
                dw, dh = kw - 1, kh - 1
                m = ((w_i + dw >= 0) & (w_i + dw <= W - 1) &
                     (h_i + dh >= 0) & (h_i + dh <= H - 1))
                smask.append(m.astype(jnp.float32))

        L = lf_ref[0]                                     # (C, WH)
        R = rf_ref[0]

        def _roll(x, s):
            # lane rotation along the flat spatial axis (XLU; static or dynamic)
            if isinstance(s, int):
                s %= WH
                if s == 0:
                    return x
            return pltpu.roll(x, s, axis=1)

        def conv1_plane(p):
            """Cost planes p-1..p+1 + conv3d#1 + BN + ReLU for output plane p."""
            rp = _roll(R, p)                              # base disparity shift
            for kd in range(3):
                dd = p + kd - 1                           # cost-volume plane idx
                pv = (dd >= 0) & (dd <= D - 1)            # depth zero padding
                hm = ((h_i >= dd) & pv).astype(jnp.float32)
                lpl = L * hm                              # left half of cost vol
                rpl = _roll(rp, kd - 1) * hm              # right half (shifted)
                for kw in range(3):
                    for kh in range(3):
                        off = (kw - 1) * H + (kh - 1)
                        sm = smask[kw * 3 + kh]
                        j = (kd * 3 + kw) * 3 + kh
                        col1_ref[j * 2 * C:j * 2 * C + C, :] = _roll(lpl, -off) * sm
                        col1_ref[j * 2 * C + C:(j + 1) * 2 * C, :] = _roll(rpl, -off) * sm
            y = jnp.dot(w1_ref[...], col1_ref[...],
                        preferred_element_type=jnp.float32)       # (C, WH)
            return jnp.maximum(y + sh1_ref[...], 0.0)

        zero_plane = jnp.zeros((C, WH), jnp.float32)

        # ---- sliding-window (ring) update of conv#1 planes -------------------
        @pl.when(d == 0)
        def _():
            ring_ref[2] = zero_plane                      # plane -1 (depth pad)
            ring_ref[0] = conv1_plane(0)
            ring_ref[1] = conv1_plane(1)

        @pl.when(d > 0)
        def _():
            p = d + 1
            pc = jnp.minimum(p, D - 1)
            keep = (p <= D - 1).astype(jnp.float32)       # plane D -> zeros
            newp = conv1_plane(pc) * keep
            slot = lax.rem(p, 3)
            for k in range(3):
                @pl.when(slot == k)
                def _(k=k):
                    ring_ref[k] = newp

        # ---- conv3d #2 + BN + ReLU for output plane d ------------------------
        for kd in range(3):
            q = d + kd - 1
            slot = lax.rem(q + 3, 3)
            src = ring_ref[slot]                          # (C, WH) conv#1 plane q
            for kw in range(3):
                for kh in range(3):
                    off = (kw - 1) * H + (kh - 1)
                    j = (kd * 3 + kw) * 3 + kh
                    col2_ref[j * C:(j + 1) * C, :] = (
                        _roll(src, -off) * smask[kw * 3 + kh])
        y2 = jnp.dot(w2_ref[...], col2_ref[...],
                     preferred_element_type=jnp.float32)          # (C, WH)
        o_ref[0] = jnp.maximum(y2 + sh2_ref[...], 0.0)

    return pl.pallas_call(
        kernel,
        out_shape=jax.ShapeDtypeStruct((B, C, D * WH), jnp.float32),
        grid_spec=pltpu.PrefetchScalarGridSpec(
            num_scalar_prefetch=0,
            grid=(B, D),
            in_specs=[
                pl.BlockSpec((1, C, WH), lambda b, d: (b, 0, 0)),
                pl.BlockSpec((1, C, WH), lambda b, d: (b, 0, 0)),
                pl.BlockSpec((1, WH), lambda b, d: (0, 0)),
                pl.BlockSpec((1, WH), lambda b, d: (0, 0)),
                pl.BlockSpec((C, K1), lambda b, d: (0, 0)),
                pl.BlockSpec((C, 1), lambda b, d: (0, 0)),
                pl.BlockSpec((C, K2), lambda b, d: (0, 0)),
                pl.BlockSpec((C, 1), lambda b, d: (0, 0)),
            ],
            out_specs=pl.BlockSpec((1, C, WH), lambda b, d: (b, 0, d)),
            scratch_shapes=[
                pltpu.VMEM((3, C, WH), jnp.float32),      # conv#1 plane ring
                pltpu.VMEM((K1, WH), jnp.float32),        # conv#1 im2col columns
                pltpu.VMEM((K2, WH), jnp.float32),        # conv#2 im2col columns
            ],
        ),
        compiler_params=pltpu.CompilerParams(
            dimension_semantics=("parallel", "arbitrary"),
            vmem_limit_bytes=48 * 1024 * 1024,
        ),
    )(lf, rf, w_idx, h_idx, w1t, sh1, w2t, sh2)


# -----------------------------------------------------------------------------
# Full CostVolume forward (Pallas path)
# -----------------------------------------------------------------------------
@functools.partial(jax.jit, static_argnames=("depth_channel",))
def cost_volume_forward(left_nchw, right_nchw, params, depth_channel):
    B, Cin, W, H = left_nchw.shape
    D = depth_channel
    WH = W * H

    xl = left_nchw.reshape(B, Cin, WH)
    xr = right_nchw.reshape(B, Cin, WH)
    lf, rf = downsample_pallas(xl, xr, params["w_ds_s"], params["sh_ds"])

    lane = jnp.arange(WH, dtype=jnp.int32)
    w_idx = (lane // H).reshape(1, WH)
    h_idx = (lane % H).reshape(1, WH)

    out = costvol_conv3d_fused_pallas(
        lf, rf, w_idx, h_idx,
        params["w1t_s"], params["sh1"], params["w2t_s"], params["sh2"],
        D, W, H)
    C = params["sh_ds"].shape[0]
    # (B, C, D*W*H) is already (B, C, D, W, H) contiguously -> free reshape.
    return out.reshape(B, C * D, W, H)


# -----------------------------------------------------------------------------
# Pure-JAX/XLA reference (mirrors the PyTorch module, NCHW / NCDHW)
# -----------------------------------------------------------------------------
def reference_forward(left, right, p, depth_channel, eps=1e-5):
    hi = lax.Precision.HIGHEST

    def ds(x):
        y = lax.conv_general_dilated(
            x, p["w_ds_oihw"], (1, 1), "VALID",
            dimension_numbers=("NCHW", "OIHW", "NCHW"), precision=hi)
        y = y + p["b_ds"][None, :, None, None]
        y = (y - p["m_ds"][None, :, None, None]) / jnp.sqrt(
            p["v_ds"] + eps)[None, :, None, None]
        y = y * p["g_ds"][None, :, None, None] + p["be_ds"][None, :, None, None]
        return jnp.maximum(y, 0.0)

    lf, rf = ds(left), ds(right)
    B, C, W, H = lf.shape
    D = depth_channel
    cost = jnp.zeros((B, 2 * C, D, W, H), jnp.float32)
    for i in range(D):
        if i > 0:
            cost = cost.at[:, :C, i, :, i:].set(lf[:, :, :, i:])
            cost = cost.at[:, C:, i, :, i:].set(rf[:, :, :, :-i])
        else:
            cost = cost.at[:, :C, 0].set(lf)
            cost = cost.at[:, C:, 0].set(rf)

    def c3(x, w, b, g, be, m, v):
        y = lax.conv_general_dilated(
            x, w, (1, 1, 1), [(1, 1), (1, 1), (1, 1)],
            dimension_numbers=("NCDHW", "OIDHW", "NCDHW"), precision=hi)
        y = y + b[None, :, None, None, None]
        y = (y - m[None, :, None, None, None]) / jnp.sqrt(
            v + eps)[None, :, None, None, None]
        y = y * g[None, :, None, None, None] + be[None, :, None, None, None]
        return jnp.maximum(y, 0.0)

    cost = c3(cost, p["w3a_oidhw"], p["b3a"], p["g3a"], p["be3a"], p["m3a"], p["v3a"])
    cost = c3(cost, p["w3b_oidhw"], p["b3b"], p["g3b"], p["be3b"], p["m3b"], p["v3b"])
    return cost.reshape(B, -1, W, H)


# -----------------------------------------------------------------------------
# Deterministic parameter initialization
# -----------------------------------------------------------------------------
def init_params(key, input_features, psm_features, eps=1e-5):
    ks = jax.random.split(key, 18)
    C = psm_features

    def bn(kg, kb, km, kv, c):
        g = jax.random.uniform(kg, (c,), jnp.float32, 0.5, 1.5)
        b = jax.random.normal(kb, (c,), jnp.float32) * 0.1
        m = jax.random.normal(km, (c,), jnp.float32) * 0.1
        v = jax.random.uniform(kv, (c,), jnp.float32, 0.5, 1.5)
        return g, b, m, v

    # down_sample: Conv2d(input_features, C, 1) + BN2d
    w_ds = jax.random.normal(ks[0], (C, input_features, 1, 1)) * 0.1
    b_ds = jax.random.normal(ks[1], (C,)) * 0.1
    g_ds, be_ds, m_ds, v_ds = bn(ks[2], ks[3], ks[4], ks[5], C)

    # conv3d layer 1: Conv3d(2C, C, 3, pad=1) + BN3d
    w3a = jax.random.normal(ks[6], (C, 2 * C, 3, 3, 3)) * 0.05
    b3a = jax.random.normal(ks[7], (C,)) * 0.1
    g3a, be3a, m3a, v3a = bn(ks[8], ks[9], ks[10], ks[11], C)

    # conv3d layer 2: Conv3d(C, C, 3, pad=1) + BN3d
    w3b = jax.random.normal(ks[12], (C, C, 3, 3, 3)) * 0.05
    b3b = jax.random.normal(ks[13], (C,)) * 0.1
    g3b, be3b, m3b, v3b = bn(ks[14], ks[15], ks[16], ks[17], C)

    def fold(bias, g, be, m, v):
        scale = g / jnp.sqrt(v + eps)
        shift = (bias - m) * scale + be
        return scale, shift

    scale_ds, shift_ds = fold(b_ds, g_ds, be_ds, m_ds, v_ds)
    scale3a, shift3a = fold(b3a, g3a, be3a, m3a, v3a)
    scale3b, shift3b = fold(b3b, g3b, be3b, m3b, v3b)

    # (Cout, K) weight layouts with K columns ordered (kd, kw, kh, in-channel),
    # BN scale pre-folded so the in-kernel epilogue is a single add + ReLU.
    w1t = jnp.transpose(w3a, (0, 2, 3, 4, 1)).reshape(C, 27 * 2 * C)
    w2t = jnp.transpose(w3b, (0, 2, 3, 4, 1)).reshape(C, 27 * C)

    pallas_params = {
        "w_ds_s": (scale_ds[:, None] * w_ds[:, :, 0, 0]).astype(jnp.float32),
        "sh_ds": shift_ds[:, None].astype(jnp.float32),
        "w1t_s": (scale3a[:, None] * w1t).astype(jnp.float32),
        "sh1": shift3a[:, None].astype(jnp.float32),
        "w2t_s": (scale3b[:, None] * w2t).astype(jnp.float32),
        "sh2": shift3b[:, None].astype(jnp.float32),
    }
    ref_params = {
        "w_ds_oihw": w_ds.astype(jnp.float32), "b_ds": b_ds,
        "g_ds": g_ds, "be_ds": be_ds, "m_ds": m_ds, "v_ds": v_ds,
        "w3a_oidhw": w3a.astype(jnp.float32), "b3a": b3a,
        "g3a": g3a, "be3a": be3a, "m3a": m3a, "v3a": v3a,
        "w3b_oidhw": w3b.astype(jnp.float32), "b3b": b3b,
        "g3b": g3b, "be3b": be3b, "m3b": m3b, "v3b": v3b,
    }
    return pallas_params, ref_params


# -----------------------------------------------------------------------------
if __name__ == "__main__":
    # Small synthetic configuration consistent with the module:
    #   max_disp=16, downsample_scale=4 -> depth_channel = 4
    #   input_features=16, PSM_features=8
    max_disp = 16
    downsample_scale = 4
    depth_channel = max_disp // downsample_scale
    input_features = 16
    psm_features = 8
    B, W, H = 2, 8, 16

    key = jax.random.PRNGKey(0)
    k_l, k_r, k_p = jax.random.split(key, 3)
    left = jax.random.normal(k_l, (B, input_features, W, H), jnp.float32)
    right = jax.random.normal(k_r, (B, input_features, W, H), jnp.float32)

    pallas_params, ref_params = init_params(k_p, input_features, psm_features)

    out = cost_volume_forward(left, right, pallas_params, depth_channel)
    out = jax.block_until_ready(out)

    expected_shape = (B, psm_features * depth_channel, W, H)
    assert out.shape == expected_shape, (out.shape, expected_shape)

    ref = reference_forward(left, right, ref_params, depth_channel)
    ref = jax.block_until_ready(ref)
    err = float(jnp.max(jnp.abs(out - ref)))
    assert jnp.allclose(out, ref, rtol=5e-4, atol=5e-4), err

    print("KERNEL_OK")
</pallas_src>

<mosaic_0001>
module attributes {stable_mosaic.version = 11 : i64} {
  func.func @kernel(%arg0: i32, %arg1: i32, %arg2: memref<1x16x128xf32, #tpu.memory_space<vmem>>, %arg3: memref<1x16x128xf32, #tpu.memory_space<vmem>>, %arg4: memref<8x16xf32, #tpu.memory_space<vmem>>, %arg5: memref<8x1xf32, #tpu.memory_space<vmem>>, %arg6: memref<1x8x128xf32, #tpu.memory_space<vmem>>, %arg7: memref<1x8x128xf32, #tpu.memory_space<vmem>>) attributes {dimension_semantics = [#tpu.dimension_semantics<parallel>, #tpu.dimension_semantics<parallel>], iteration_bounds = array<i64: 2, 1>, scalar_prefetch = 0 : i64, scratch_operands = 0 : i64, tpu.core_type = #tpu.core_type<tc>, window_params = [{transform_indices = @transform_0, window_bounds = array<i64: 1, 16, 128>}, {transform_indices = @transform_1, window_bounds = array<i64: 1, 16, 128>}, {pipeline_mode = #tpu.pipeline_mode<synchronous>, transform_indices = @transform_2, window_bounds = array<i64: 8, 16>}, {pipeline_mode = #tpu.pipeline_mode<synchronous>, transform_indices = @transform_3, window_bounds = array<i64: 8, 1>}, {transform_indices = @transform_4, window_bounds = array<i64: 1, 8, 128>}, {transform_indices = @transform_5, window_bounds = array<i64: 1, 8, 128>}]} {
    %c0 = arith.constant 0 : index
    %c0_0 = arith.constant 0 : index
    %0 = vector.load %arg4[%c0, %c0_0] : memref<8x16xf32, #tpu.memory_space<vmem>>, vector<8x16xf32>
    %c0_1 = arith.constant 0 : index
    %c0_2 = arith.constant 0 : index
    %1 = vector.load %arg5[%c0_1, %c0_2] : memref<8x1xf32, #tpu.memory_space<vmem>>, vector<8x1xf32>
    %c0_3 = arith.constant 0 : index
    %c0_4 = arith.constant 0 : index
    %c0_5 = arith.constant 0 : index
    %2 = vector.load %arg2[%c0_3, %c0_4, %c0_5] : memref<1x16x128xf32, #tpu.memory_space<vmem>>, vector<1x16x128xf32>
    %3 = vector.shape_cast %2 : vector<1x16x128xf32> to vector<16x128xf32>
    %cst = arith.constant dense<0.000000e+00> : vector<8x128xf32>
    %4 = tpu.matmul %0, %3, %cst {dimension_numbers = #tpu.dot_dimension_numbers<[1], [0], [0], [1], [0, 0, 1, 1], [], []>} : vector<8x16xf32>, vector<16x128xf32>, vector<8x128xf32> -> vector<8x128xf32>
    %5 = vector.broadcast %1 : vector<8x1xf32> to vector<8x128xf32>
    %6 = arith.addf %4, %5 : vector<8x128xf32>
    %cst_6 = arith.constant 0.000000e+00 : f32
    %7 = vector.broadcast %cst_6 : f32 to vector<8x128xf32>
    %8 = arith.maximumf %6, %7 : vector<8x128xf32>
    %c0_7 = arith.constant 0 : index
    %c0_8 = arith.constant 0 : index
    %c0_9 = arith.constant 0 : index
    %9 = vector.load %arg6[%c0_7, %c0_8, %c0_9] : memref<1x8x128xf32, #tpu.memory_space<vmem>>, vector<1x8x128xf32>
    %10 = vector.shape_cast %9 : vector<1x8x128xf32> to vector<8x128xf32>
    %11 = vector.shape_cast %8 : vector<8x128xf32> to vector<1x8x128xf32>
    tpu.vector_store %arg6[%c0_7, %c0_8, %c0_9], %11 {strides = array<i32>} : memref<1x8x128xf32, #tpu.memory_space<vmem>>, vector<1x8x128xf32>,
    %c0_10 = arith.constant 0 : index
    %c0_11 = arith.constant 0 : index
    %c0_12 = arith.constant 0 : index
    %12 = vector.load %arg3[%c0_10, %c0_11, %c0_12] : memref<1x16x128xf32, #tpu.memory_space<vmem>>, vector<1x16x128xf32>
    %13 = vector.shape_cast %12 : vector<1x16x128xf32> to vector<16x128xf32>
    %cst_13 = arith.constant dense<0.000000e+00> : vector<8x128xf32>
    %14 = tpu.matmul %0, %13, %cst_13 {dimension_numbers = #tpu.dot_dimension_numbers<[1], [0], [0], [1], [0, 0, 1, 1], [], []>} : vector<8x16xf32>, vector<16x128xf32>, vector<8x128xf32> -> vector<8x128xf32>
    %15 = vector.broadcast %1 : vector<8x1xf32> to vector<8x128xf32>
    %16 = arith.addf %14, %15 : vector<8x128xf32>
    %cst_14 = arith.constant 0.000000e+00 : f32
    %17 = vector.broadcast %cst_14 : f32 to vector<8x128xf32>
    %18 = arith.maximumf %16, %17 : vector<8x128xf32>
    %c0_15 = arith.constant 0 : index
    %c0_16 = arith.constant 0 : index
    %c0_17 = arith.constant 0 : index
    %19 = vector.load %arg7[%c0_15, %c0_16, %c0_17] : memref<1x8x128xf32, #tpu.memory_space<vmem>>, vector<1x8x128xf32>
    %20 = vector.shape_cast %19 : vector<1x8x128xf32> to vector<8x128xf32>
    %21 = vector.shape_cast %18 : vector<8x128xf32> to vector<1x8x128xf32>
    tpu.vector_store %arg7[%c0_15, %c0_16, %c0_17], %21 {strides = array<i32>} : memref<1x8x128xf32, #tpu.memory_space<vmem>>, vector<1x8x128xf32>,
    return
  }
  func.func @transform_0(%arg0: i32, %arg1: i32) -> (i32, i32, i32) {
    %c0_i32 = arith.constant 0 : i32
    %c0_i32_0 = arith.constant 0 : i32
    return %arg0, %c0_i32, %arg1 : i32, i32, i32
  }
  func.func @transform_1(%arg0: i32, %arg1: i32) -> (i32, i32, i32) {
    %c0_i32 = arith.constant 0 : i32
    %c0_i32_0 = arith.constant 0 : i32
    return %arg0, %c0_i32, %arg1 : i32, i32, i32
  }
  func.func @transform_2(%arg0: i32, %arg1: i32) -> (i32, i32) {
    %c0_i32 = arith.constant 0 : i32
    %c0_i32_0 = arith.constant 0 : i32
    %c0_i32_1 = arith.constant 0 : i32
    return %c0_i32, %c0_i32_0 : i32, i32
  }
  func.func @transform_3(%arg0: i32, %arg1: i32) -> (i32, i32) {
    %c0_i32 = arith.constant 0 : i32
    %c0_i32_0 = arith.constant 0 : i32
    %c0_i32_1 = arith.constant 0 : i32
    return %c0_i32, %c0_i32_0 : i32, i32
  }
  func.func @transform_4(%arg0: i32, %arg1: i32) -> (i32, i32, i32) {
    %c0_i32 = arith.constant 0 : i32
    %c0_i32_0 = arith.constant 0 : i32
    return %arg0, %c0_i32, %arg1 : i32, i32, i32
  }
  func.func @transform_5(%arg0: i32, %arg1: i32) -> (i32, i32, i32) {
    %c0_i32 = arith.constant 0 : i32
    %c0_i32_0 = arith.constant 0 : i32
    return %arg0, %c0_i32, %arg1 : i32, i32, i32
  }
}

module attributes {stable_mosaic.version = 11 : i64} {
  func.func @kernel(%arg0: i32, %arg1: i32, %arg2: memref<1x8x128xf32, #tpu.memory_space<vmem>>, %arg3: memref<1x8x128xf32, #tpu.memory_space<vmem>>, %arg4: memref<1x128xi32, #tpu.memory_space<vmem>>, %arg5: memref<1x128xi32, #tpu.memory_space<vmem>>, %arg6: memref<8x432xf32, #tpu.memory_space<vmem>>, %arg7: memref<8x1xf32, #tpu.memory_space<vmem>>, %arg8: memref<8x216xf32, #tpu.memory_space<vmem>>, %arg9: memref<8x1xf32, #tpu.memory_space<vmem>>, %arg10: memref<1x8x128xf32, #tpu.memory_space<vmem>>, %arg11: memref<3x8x128xf32, #tpu.memory_space<vmem>>, %arg12: memref<432x128xf32, #tpu.memory_space<vmem>>, %arg13: memref<216x128xf32, #tpu.memory_space<vmem>>) attributes {dimension_semantics = [#tpu.dimension_semantics<parallel>, #tpu.dimension_semantics<arbitrary>], iteration_bounds = array<i64: 2, 4>, scalar_prefetch = 0 : i64, scratch_operands = 3 : i64, tpu.core_type = #tpu.core_type<tc>, window_params = [{transform_indices = @transform_0, window_bounds = array<i64: 1, 8, 128>}, {transform_indices = @transform_1, window_bounds = array<i64: 1, 8, 128>}, {pipeline_mode = #tpu.pipeline_mode<synchronous>, transform_indices = @transform_2, window_bounds = array<i64: 1, 128>}, {pipeline_mode = #tpu.pipeline_mode<synchronous>, transform_indices = @transform_3, window_bounds = array<i64: 1, 128>}, {pipeline_mode = #tpu.pipeline_mode<synchronous>, transform_indices = @transform_4, window_bounds = array<i64: 8, 432>}, {pipeline_mode = #tpu.pipeline_mode<synchronous>, transform_indices = @transform_5, window_bounds = array<i64: 8, 1>}, {pipeline_mode = #tpu.pipeline_mode<synchronous>, transform_indices = @transform_6, window_bounds = array<i64: 8, 216>}, {pipeline_mode = #tpu.pipeline_mode<synchronous>, transform_indices = @transform_7, window_bounds = array<i64: 8, 1>}, {transform_indices = @transform_8, window_bounds = array<i64: 1, 8, 128>}]} {
    %c0 = arith.constant 0 : index
    %c0_0 = arith.constant 0 : index
    %0 = vector.load %arg4[%c0, %c0_0] : memref<1x128xi32, #tpu.memory_space<vmem>>, vector<1x128xi32>
    %c0_1 = arith.constant 0 : index
    %c0_2 = arith.constant 0 : index
    %1 = vector.load %arg5[%c0_1, %c0_2] : memref<1x128xi32, #tpu.memory_space<vmem>>, vector<1x128xi32>
    %c-1_i32 = arith.constant -1 : i32
    %2 = vector.broadcast %c-1_i32 : i32 to vector<1x128xi32>
    %3 = arith.addi %0, %2 : vector<1x128xi32>
    %c0_i32 = arith.constant 0 : i32
    %4 = vector.broadcast %c0_i32 : i32 to vector<1x128xi32>
    %5 = arith.cmpi sge, %3, %4 : vector<1x128xi32>
    %c-1_i32_3 = arith.constant -1 : i32
    %6 = vector.broadcast %c-1_i32_3 : i32 to vector<1x128xi32>
    %7 = arith.addi %0, %6 : vector<1x128xi32>
    %c7_i32 = arith.constant 7 : i32
    %8 = vector.broadcast %c7_i32 : i32 to vector<1x128xi32>
    %9 = arith.cmpi sle, %7, %8 : vector<1x128xi32>
    %10 = arith.andi %5, %9 : vector<1x128xi1>
    %c-1_i32_4 = arith.constant -1 : i32
    %11 = vector.broadcast %c-1_i32_4 : i32 to vector<1x128xi32>
    %12 = arith.addi %1, %11 : vector<1x128xi32>
    %c0_i32_5 = arith.constant 0 : i32
    %13 = vector.broadcast %c0_i32_5 : i32 to vector<1x128xi32>
    %14 = arith.cmpi sge, %12, %13 : vector<1x128xi32>
    %15 = arith.andi %10, %14 : vector<1x128xi1>
    %c-1_i32_6 = arith.constant -1 : i32
    %16 = vector.broadcast %c-1_i32_6 : i32 to vector<1x128xi32>
    %17 = arith.addi %1, %16 : vector<1x128xi32>
    %c15_i32 = arith.constant 15 : i32
    %18 = vector.broadcast %c15_i32 : i32 to vector<1x128xi32>
    %19 = arith.cmpi sle, %17, %18 : vector<1x128xi32>
    %20 = arith.andi %15, %19 : vector<1x128xi1>
    %21 = arith.extui %20 : vector<1x128xi1> to vector<1x128xi32>
    %22 = arith.sitofp %21 : vector<1x128xi32> to vector<1x128xf32>
    %c-1_i32_7 = arith.constant -1 : i32
    %23 = vector.broadcast %c-1_i32_7 : i32 to vector<1x128xi32>
    %24 = arith.addi %0, %23 : vector<1x128xi32>
    %c0_i32_8 = arith.constant 0 : i32
    %25 = vector.broadcast %c0_i32_8 : i32 to vector<1x128xi32>
    %26 = arith.cmpi sge, %24, %25 : vector<1x128xi32>
    %c-1_i32_9 = arith.constant -1 : i32
    %27 = vector.broadcast %c-1_i32_9 : i32 to vector<1x128xi32>
    %28 = arith.addi %0, %27 : vector<1x128xi32>
    %c7_i32_10 = arith.constant 7 : i32
    %29 = vector.broadcast %c7_i32_10 : i32 to vector<1x128xi32>
    %30 = arith.cmpi sle, %28, %29 : vector<1x128xi32>
    %31 = arith.andi %26, %30 : vector<1x128xi1>
    %c0_i32_11 = arith.constant 0 : i32
    %32 = vector.broadcast %c0_i32_11 : i32 to vector<1x128xi32>
    %33 = arith.addi %1, %32 : vector<1x128xi32>
    %c0_i32_12 = arith.constant 0 : i32
    %34 = vector.broadcast %c0_i32_12 : i32 to vector<1x128xi32>
    %35 = arith.cmpi sge, %33, %34 : vector<1x128xi32>
    %36 = arith.andi %31, %35 : vector<1x128xi1>
    %c0_i32_13 = arith.constant 0 : i32
    %37 = vector.broadcast %c0_i32_13 : i32 to vector<1x128xi32>
    %38 = arith.addi %1, %37 : vector<1x128xi32>
    %c15_i32_14 = arith.constant 15 : i32
    %39 = vector.broadcast %c15_i32_14 : i32 to vector<1x128xi32>
    %40 = arith.cmpi sle, %38, %39 : vector<1x128xi32>
    %41 = arith.andi %36, %40 : vector<1x128xi1>
    %42 = arith.extui %41 : vector<1x128xi1> to vector<1x128xi32>
    %43 = arith.sitofp %42 : vector<1x128xi32> to vector<1x128xf32>
    %c-1_i32_15 = arith.constant -1 : i32
    %44 = vector.broadcast %c-1_i32_15 : i32 to vector<1x128xi32>
    %45 = arith.addi %0, %44 : vector<1x128xi32>
    %c0_i32_16 = arith.constant 0 : i32
    %46 = vector.broadcast %c0_i32_16 : i32 to vector<1x128xi32>
    %47 = arith.cmpi sge, %45, %46 : vector<1x128xi32>
    %c-1_i32_17 = arith.constant -1 : i32
    %48 = vector.broadcast %c-1_i32_17 : i32 to vector<1x128xi32>
    %49 = arith.addi %0, %48 : vector<1x128xi32>
    %c7_i32_18 = arith.constant 7 : i32
    %50 = vector.broadcast %c7_i32_18 : i32 to vector<1x128xi32>
    %51 = arith.cmpi sle, %49, %50 : vector<1x128xi32>
    %52 = arith.andi %47, %51 : vector<1x128xi1>
    %c1_i32 = arith.constant 1 : i32
    %53 = vector.broadcast %c1_i32 : i32 to vector<1x128xi32>
    %54 = arith.addi %1, %53 : vector<1x128xi32>
    %c0_i32_19 = arith.constant 0 : i32
    %55 = vector.broadcast %c0_i32_19 : i32 to vector<1x128xi32>
    %56 = arith.cmpi sge, %54, %55 : vector<1x128xi32>
    %57 = arith.andi %52, %56 : vector<1x128xi1>
    %c1_i32_20 = arith.constant 1 : i32
    %58 = vector.broadcast %c1_i32_20 : i32 to vector<1x128xi32>
    %59 = arith.addi %1, %58 : vector<1x128xi32>
    %c15_i32_21 = arith.constant 15 : i32
    %60 = vector.broadcast %c15_i32_21 : i32 to vector<1x128xi32>
    %61 = arith.cmpi sle, %59, %60 : vector<1x128xi32>
    %62 = arith.andi %57, %61 : vector<1x128xi1>
    %63 = arith.extui %62 : vector<1x128xi1> to vector<1x128xi32>
    %64 = arith.sitofp %63 : vector<1x128xi32> to vector<1x128xf32>
    %c0_i32_22 = arith.constant 0 : i32
    %65 = vector.broadcast %c0_i32_22 : i32 to vector<1x128xi32>
    %66 = arith.addi %0, %65 : vector<1x128xi32>
    %c0_i32_23 = arith.constant 0 : i32
    %67 = vector.broadcast %c0_i32_23 : i32 to vector<1x128xi32>
    %68 = arith.cmpi sge, %66, %67 : vector<1x128xi32>
    %c0_i32_24 = arith.constant 0 : i32
    %69 = vector.broadcast %c0_i32_24 : i32 to vector<1x128xi32>
    %70 = arith.addi %0, %69 : vector<1x128xi32>
    %c7_i32_25 = arith.constant 7 : i32
    %71 = vector.broadcast %c7_i32_25 : i32 to vector<1x128xi32>
    %72 = arith.cmpi sle, %70, %71 : vector<1x128xi32>
    %73 = arith.andi %68, %72 : vector<1x128xi1>
    %c-1_i32_26 = arith.constant -1 : i32
    %74 = vector.broadcast %c-1_i32_26 : i32 to vector<1x128xi32>
    %75 = arith.addi %1, %74 : vector<1x128xi32>
    %c0_i32_27 = arith.constant 0 : i32
    %76 = vector.broadcast %c0_i32_27 : i32 to vector<1x128xi32>
    %77 = arith.cmpi sge, %75, %76 : vector<1x128xi32>
    %78 = arith.andi %73, %77 : vector<1x128xi1>
    %c-1_i32_28 = arith.constant -1 : i32
    %79 = vector.broadcast %c-1_i32_28 : i32 to vector<1x128xi32>
    %80 = arith.addi %1, %79 : vector<1x128xi32>
    %c15_i32_29 = arith.constant 15 : i32
    %81 = vector.broadcast %c15_i32_29 : i32 to vector<1x128xi32>
    %82 = arith.cmpi sle, %80, %81 : vector<1x128xi32>
    %83 = arith.andi %78, %82 : vector<1x128xi1>
    %84 = arith.extui %83 : vector<1x128xi1> to vector<1x128xi32>
    %85 = arith.sitofp %84 : vector<1x128xi32> to vector<1x128xf32>
    %c0_i32_30 = arith.constant 0 : i32
    %86 = vector.broadcast %c0_i32_30 : i32 to vector<1x128xi32>
    %87 = arith.addi %0, %86 : vector<1x128xi32>
    %c0_i32_31 = arith.constant 0 : i32
    %88 = vector.broadcast %c0_i32_31 : i32 to vector<1x128xi32>
    %89 = arith.cmpi sge, %87, %88 : vector<1x128xi32>
    %c0_i32_32 = arith.constant 0 : i32
    %90 = vector.broadcast %c0_i32_32 : i32 to vector<1x128xi32>
    %91 = arith.addi %0, %90 : vector<1x128xi32>
    %c7_i32_33 = arith.constant 7 : i32
    %92 = vector.broadcast %c7_i32_33 : i32 to vector<1x128xi32>
    %93 = arith.cmpi sle, %91, %92 : vector<1x128xi32>
    %94 = arith.andi %89, %93 : vector<1x128xi1>
    %c0_i32_34 = arith.constant 0 : i32
    %95 = vector.broadcast %c0_i32_34 : i32 to vector<1x128xi32>
    %96 = arith.addi %1, %95 : vector<1x128xi32>
    %c0_i32_35 = arith.constant 0 : i32
    %97 = vector.broadcast %c0_i32_35 : i32 to vector<1x128xi32>
    %98 = arith.cmpi sge, %96, %97 : vector<1x128xi32>
    %99 = arith.andi %94, %98 : vector<1x128xi1>
    %c0_i32_36 = arith.constant 0 : i32
    %100 = vector.broadcast %c0_i32_36 : i32 to vector<1x128xi32>
    %101 = arith.addi %1, %100 : vector<1x128xi32>
    %c15_i32_37 = arith.constant 15 : i32
    %102 = vector.broadcast %c15_i32_37 : i32 to vector<1x128xi32>
    %103 = arith.cmpi sle, %101, %102 : vector<1x128xi32>
    %104 = arith.andi %99, %103 : vector<1x128xi1>
    %105 = arith.extui %104 : vector<1x128xi1> to vector<1x128xi32>
    %106 = arith.sitofp %105 : vector<1x128xi32> to vector<1x128xf32>
    %c0_i32_38 = arith.constant 0 : i32
    %107 = vector.broadcast %c0_i32_38 : i32 to vector<1x128xi32>
    %108 = arith.addi %0, %107 : vector<1x128xi32>
    %c0_i32_39 = arith.constant 0 : i32
    %109 = vector.broadcast %c0_i32_39 : i32 to vector<1x128xi32>
    %110 = arith.cmpi sge, %108, %109 : vector<1x128xi32>
    %c0_i32_40 = arith.constant 0 : i32
    %111 = vector.broadcast %c0_i32_40 : i32 to vector<1x128xi32>
    %112 = arith.addi %0, %111 : vector<1x128xi32>
    %c7_i32_41 = arith.constant 7 : i32
    %113 = vector.broadcast %c7_i32_41 : i32 to vector<1x128xi32>
    %114 = arith.cmpi sle, %112, %113 : vector<1x128xi32>
    %115 = arith.andi %110, %114 : vector<1x128xi1>
    %c1_i32_42 = arith.constant 1 : i32
    %116 = vector.broadcast %c1_i32_42 : i32 to vector<1x128xi32>
    %117 = arith.addi %1, %116 : vector<1x128xi32>
    %c0_i32_43 = arith.constant 0 : i32
    %118 = vector.broadcast %c0_i32_43 : i32 to vector<1x128xi32>
    %119 = arith.cmpi sge, %117, %118 : vector<1x128xi32>
    %120 = arith.andi %115, %119 : vector<1x128xi1>
    %c1_i32_44 = arith.constant 1 : i32
    %121 = vector.broadcast %c1_i32_44 : i32 to vector<1x128xi32>
    %122 = arith.addi %1, %121 : vector<1x128xi32>
    %c15_i32_45 = arith.constant 15 : i32
    %123 = vector.broadcast %c15_i32_45 : i32 to vector<1x128xi32>
    %124 = arith.cmpi sle, %122, %123 : vector<1x128xi32>
    %125 = arith.andi %120, %124 : vector<1x128xi1>
    %126 = arith.extui %125 : vector<1x128xi1> to vector<1x128xi32>
    %127 = arith.sitofp %126 : vector<1x128xi32> to vector<1x128xf32>
    %c1_i32_46 = arith.constant 1 : i32
    %128 = vector.broadcast %c1_i32_46 : i32 to vector<1x128xi32>
    %129 = arith.addi %0, %128 : vector<1x128xi32>
    %c0_i32_47 = arith.constant 0 : i32
    %130 = vector.broadcast %c0_i32_47 : i32 to vector<1x128xi32>
    %131 = arith.cmpi sge, %129, %130 : vector<1x128xi32>
    %c1_i32_48 = arith.constant 1 : i32
    %132 = vector.broadcast %c1_i32_48 : i32 to vector<1x128xi32>
    %133 = arith.addi %0, %132 : vector<1x128xi32>
    %c7_i32_49 = arith.constant 7 : i32
    %134 = vector.broadcast %c7_i32_49 : i32 to vector<1x128xi32>
    %135 = arith.cmpi sle, %133, %134 : vector<1x128xi32>
    %136 = arith.andi %131, %135 : vector<1x128xi1>
    %c-1_i32_50 = arith.constant -1 : i32
    %137 = vector.broadcast %c-1_i32_50 : i32 to vector<1x128xi32>
    %138 = arith.addi %1, %137 : vector<1x128xi32>
    %c0_i32_51 = arith.constant 0 : i32
    %139 = vector.broadcast %c0_i32_51 : i32 to vector<1x128xi32>
    %140 = arith.cmpi sge, %138, %139 : vector<1x128xi32>
    %141 = arith.andi %136, %140 : vector<1x128xi1>
    %c-1_i32_52 = arith.constant -1 : i32
    %142 = vector.broadcast %c-1_i32_52 : i32 to vector<1x128xi32>
    %143 = arith.addi %1, %142 : vector<1x128xi32>
    %c15_i32_53 = arith.constant 15 : i32
    %144 = vector.broadcast %c15_i32_53 : i32 to vector<1x128xi32>
    %145 = arith.cmpi sle, %143, %144 : vector<1x128xi32>
    %146 = arith.andi %141, %145 : vector<1x128xi1>
    %147 = arith.extui %146 : vector<1x128xi1> to vector<1x128xi32>
    %148 = arith.sitofp %147 : vector<1x128xi32> to vector<1x128xf32>
    %c1_i32_54 = arith.constant 1 : i32
    %149 = vector.broadcast %c1_i32_54 : i32 to vector<1x128xi32>
    %150 = arith.addi %0, %149 : vector<1x128xi32>
    %c0_i32_55 = arith.constant 0 : i32
    %151 = vector.broadcast %c0_i32_55 : i32 to vector<1x128xi32>
    %152 = arith.cmpi sge, %150, %151 : vector<1x128xi32>
    %c1_i32_56 = arith.constant 1 : i32
    %153 = vector.broadcast %c1_i32_56 : i32 to vector<1x128xi32>
    %154 = arith.addi %0, %153 : vector<1x128xi32>
    %c7_i32_57 = arith.constant 7 : i32
    %155 = vector.broadcast %c7_i32_57 : i32 to vector<1x128xi32>
    %156 = arith.cmpi sle, %154, %155 : vector<1x128xi32>
    %157 = arith.andi %152, %156 : vector<1x128xi1>
    %c0_i32_58 = arith.constant 0 : i32
    %158 = vector.broadcast %c0_i32_58 : i32 to vector<1x128xi32>
    %159 = arith.addi %1, %158 : vector<1x128xi32>
    %c0_i32_59 = arith.constant 0 : i32
    %160 = vector.broadcast %c0_i32_59 : i32 to vector<1x128xi32>
    %161 = arith.cmpi sge, %159, %160 : vector<1x128xi32>
    %162 = arith.andi %157, %161 : vector<1x128xi1>
    %c0_i32_60 = arith.constant 0 : i32
    %163 = vector.broadcast %c0_i32_60 : i32 to vector<1x128xi32>
    %164 = arith.addi %1, %163 : vector<1x128xi32>
    %c15_i32_61 = arith.constant 15 : i32
    %165 = vector.broadcast %c15_i32_61 : i32 to vector<1x128xi32>
    %166 = arith.cmpi sle, %164, %165 : vector<1x128xi32>
    %167 = arith.andi %162, %166 : vector<1x128xi1>
    %168 = arith.extui %167 : vector<1x128xi1> to vector<1x128xi32>
    %169 = arith.sitofp %168 : vector<1x128xi32> to vector<1x128xf32>
    %c1_i32_62 = arith.constant 1 : i32
    %170 = vector.broadcast %c1_i32_62 : i32 to vector<1x128xi32>
    %171 = arith.addi %0, %170 : vector<1x128xi32>
    %c0_i32_63 = arith.constant 0 : i32
    %172 = vector.broadcast %c0_i32_63 : i32 to vector<1x128xi32>
    %173 = arith.cmpi sge, %171, %172 : vector<1x128xi32>
    %c1_i32_64 = arith.constant 1 : i32
    %174 = vector.broadcast %c1_i32_64 : i32 to vector<1x128xi32>
    %175 = arith.addi %0, %174 : vector<1x128xi32>
    %c7_i32_65 = arith.constant 7 : i32
    %176 = vector.broadcast %c7_i32_65 : i32 to vector<1x128xi32>
    %177 = arith.cmpi sle, %175, %176 : vector<1x128xi32>
    %178 = arith.andi %173, %177 : vector<1x128xi1>
    %c1_i32_66 = arith.constant 1 : i32
    %179 = vector.broadcast %c1_i32_66 : i32 to vector<1x128xi32>
    %180 = arith.addi %1, %179 : vector<1x128xi32>
    %c0_i32_67 = arith.constant 0 : i32
    %181 = vector.broadcast %c0_i32_67 : i32 to vector<1x128xi32>
    %182 = arith.cmpi sge, %180, %181 : vector<1x128xi32>
    %183 = arith.andi %178, %182 : vector<1x128xi1>
    %c1_i32_68 = arith.constant 1 : i32
    %184 = vector.broadcast %c1_i32_68 : i32 to vector<1x128xi32>
    %185 = arith.addi %1, %184 : vector<1x128xi32>
    %c15_i32_69 = arith.constant 15 : i32
    %186 = vector.broadcast %c15_i32_69 : i32 to vector<1x128xi32>
    %187 = arith.cmpi sle, %185, %186 : vector<1x128xi32>
    %188 = arith.andi %183, %187 : vector<1x128xi1>
    %189 = arith.extui %188 : vector<1x128xi1> to vector<1x128xi32>
    %190 = arith.sitofp %189 : vector<1x128xi32> to vector<1x128xf32>
    %c0_70 = arith.constant 0 : index
    %c0_71 = arith.constant 0 : index
    %c0_72 = arith.constant 0 : index
    %191 = vector.load %arg2[%c0_70, %c0_71, %c0_72] : memref<1x8x128xf32, #tpu.memory_space<vmem>>, vector<1x8x128xf32>
    %192 = vector.shape_cast %191 : vector<1x8x128xf32> to vector<8x128xf32>
    %c0_73 = arith.constant 0 : index
    %c0_74 = arith.constant 0 : index
    %c0_75 = arith.constant 0 : index
    %193 = vector.load %arg3[%c0_73, %c0_74, %c0_75] : memref<1x8x128xf32, #tpu.memory_space<vmem>>, vector<1x8x128xf32>
    %194 = vector.shape_cast %193 : vector<1x8x128xf32> to vector<8x128xf32>
    %cst = arith.constant 0.000000e+00 : f32
    %195 = vector.broadcast %cst : f32 to vector<8x128xf32>
    %c0_i32_76 = arith.constant 0 : i32
    %196 = arith.cmpi eq, %arg1, %c0_i32_76 : i32
    %197 = arith.extui %196 : i1 to i32
    %c0_i32_77 = arith.constant 0 : i32
    %198 = arith.cmpi ne, %197, %c0_i32_77 : i32
    scf.if %198 {
      %c2 = arith.constant 2 : index
      %c0_153 = arith.constant 0 : index
      %c0_154 = arith.constant 0 : index
      %339 = vector.load %arg11[%c2, %c0_153, %c0_154] : memref<3x8x128xf32, #tpu.memory_space<vmem>>, vector<1x8x128xf32>
      %340 = vector.shape_cast %339 : vector<1x8x128xf32> to vector<8x128xf32>
      %341 = vector.shape_cast %195 : vector<8x128xf32> to vector<1x8x128xf32>
      tpu.vector_store %arg11[%c2, %c0_153, %c0_154], %341 {strides = array<i32>} : memref<3x8x128xf32, #tpu.memory_space<vmem>>, vector<1x8x128xf32>,
      %c-1_i32_155 = arith.constant -1 : i32
      %342 = vector.broadcast %c-1_i32_155 : i32 to vector<1x128xi32>
      %343 = arith.cmpi sge, %1, %342 : vector<1x128xi32>
      %false = arith.constant false
      %344 = vector.broadcast %false : i1 to vector<1x128xi1>
      %345 = arith.andi %343, %344 : vector<1x128xi1>
      %346 = arith.extui %345 : vector<1x128xi1> to vector<1x128xi32>
      %347 = arith.sitofp %346 : vector<1x128xi32> to vector<1x128xf32>
      %348 = vector.broadcast %347 : vector<1x128xf32> to vector<8x128xf32>
      %349 = arith.mulf %192, %348 : vector<8x128xf32>
      %c127_i32_156 = arith.constant 127 : i32
      %350 = tpu.dynamic_rotate %194 by %c127_i32_156 dim 1 : vector<8x128xf32>, i32 -> vector<8x128xf32>
      %351 = vector.broadcast %347 : vector<1x128xf32> to vector<8x128xf32>
      %352 = arith.mulf %350, %351 : vector<8x128xf32>
      %c17_i32_157 = arith.constant 17 : i32
      %353 = tpu.dynamic_rotate %349 by %c17_i32_157 dim 1 : vector<8x128xf32>, i32 -> vector<8x128xf32>
      %354 = vector.broadcast %22 : vector<1x128xf32> to vector<8x128xf32>
      %355 = arith.mulf %353, %354 : vector<8x128xf32>
      %c0_158 = arith.constant 0 : index
      %c0_159 = arith.constant 0 : index
      %356 = vector.load %arg12[%c0_158, %c0_159] : memref<432x128xf32, #tpu.memory_space<vmem>>, vector<8x128xf32>
      tpu.vector_store %arg12[%c0_158, %c0_159], %355 {strides = array<i32>} : memref<432x128xf32, #tpu.memory_space<vmem>>, vector<8x128xf32>,
      %c17_i32_160 = arith.constant 17 : i32
      %357 = tpu.dynamic_rotate %352 by %c17_i32_160 dim 1 : vector<8x128xf32>, i32 -> vector<8x128xf32>
      %358 = vector.broadcast %22 : vector<1x128xf32> to vector<8x128xf32>
      %359 = arith.mulf %357, %358 : vector<8x128xf32>
      %c8_161 = arith.constant 8 : index
      %c0_162 = arith.constant 0 : index
      %360 = vector.load %arg12[%c8_161, %c0_162] : memref<432x128xf32, #tpu.memory_space<vmem>>, vector<8x128xf32>
      tpu.vector_store %arg12[%c8_161, %c0_162], %359 {strides = array<i32>} : memref<432x128xf32, #tpu.memory_space<vmem>>, vector<8x128xf32>,
      %c16_i32_163 = arith.constant 16 : i32
      %361 = tpu.dynamic_rotate %349 by %c16_i32_163 dim 1 : vector<8x128xf32>, i32 -> vector<8x128xf32>
      %362 = vector.broadcast %43 : vector<1x128xf32> to vector<8x128xf32>
      %363 = arith.mulf %361, %362 : vector<8x128xf32>
      %c16_164 = arith.constant 16 : index
      %c0_165 = arith.constant 0 : index
      %364 = vector.load %arg12[%c16_164, %c0_165] : memref<432x128xf32, #tpu.memory_space<vmem>>, vector<8x128xf32>
      tpu.vector_store %arg12[%c16_164, %c0_165], %363 {strides = array<i32>} : memref<432x128xf32, #tpu.memory_space<vmem>>, vector<8x128xf32>,
      %c16_i32_166 = arith.constant 16 : i32
      %365 = tpu.dynamic_rotate %352 by %c16_i32_166 dim 1 : vector<8x128xf32>, i32 -> vector<8x128xf32>
      %366 = vector.broadcast %43 : vector<1x128xf32> to vector<8x128xf32>
      %367 = arith.mulf %365, %366 : vector<8x128xf32>
      %c24_167 = arith.constant 24 : index
      %c0_168 = arith.constant 0 : index
      %368 = vector.load %arg12[%c24_167, %c0_168] : memref<432x128xf32, #tpu.memory_space<vmem>>, vector<8x128xf32>
      tpu.vector_store %arg12[%c24_167, %c0_168], %367 {strides = array<i32>} : memref<432x128xf32, #tpu.memory_space<vmem>>, vector<8x128xf32>,
      %c15_i32_169 = arith.constant 15 : i32
      %369 = tpu.dynamic_rotate %349 by %c15_i32_169 dim 1 : vector<8x128xf32>, i32 -> vector<8x128xf32>
      %370 = vector.broadcast %64 : vector<1x128xf32> to vector<8x128xf32>
      %371 = arith.mulf %369, %370 : vector<8x128xf32>
      %c32_170 = arith.constant 32 : index
      %c0_171 = arith.constant 0 : index
      %372 = vector.load %arg12[%c32_170, %c0_171] : memref<432x128xf32, #tpu.memory_space<vmem>>, vector<8x128xf32>
      tpu.vector_store %arg12[%c32_170, %c0_171], %371 {strides = array<i32>} : memref<432x128xf32, #tpu.memory_space<vmem>>, vector<8x128xf32>,
      %c15_i32_172 = arith.constant 15 : i32
      %373 = tpu.dynamic_rotate %352 by %c15_i32_172 dim 1 : vector<8x128xf32>, i32 -> vector<8x128xf32>
      %374 = vector.broadcast %64 : vector<1x128xf32> to vector<8x128xf32>
      %375 = arith.mulf %373, %374 : vector<8x128xf32>
      %c40_173 = arith.constant 40 : index
      %c0_174 = arith.constant 0 : index
      %376 = vector.load %arg12[%c40_173, %c0_174] : memref<432x128xf32, #tpu.memory_space<vmem>>, vector<8x128xf32>
      tpu.vector_store %arg12[%c40_173, %c0_174], %375 {strides = array<i32>} : memref<432x128xf32, #tpu.memory_space<vmem>>, vector<8x128xf32>,
      %c1_i32_175 = arith.constant 1 : i32
      %377 = tpu.dynamic_rotate %349 by %c1_i32_175 dim 1 : vector<8x128xf32>, i32 -> vector<8x128xf32>
      %378 = vector.broadcast %85 : vector<1x128xf32> to vector<8x128xf32>
      %379 = arith.mulf %377, %378 : vector<8x128xf32>
      %c48_176 = arith.constant 48 : index
      %c0_177 = arith.constant 0 : index
      %380 = vector.load %arg12[%c48_176, %c0_177] : memref<432x128xf32, #tpu.memory_space<vmem>>, vector<8x128xf32>
      tpu.vector_store %arg12[%c48_176, %c0_177], %379 {strides = array<i32>} : memref<432x128xf32, #tpu.memory_space<vmem>>, vector<8x128xf32>,
      %c1_i32_178 = arith.constant 1 : i32
      %381 = tpu.dynamic_rotate %352 by %c1_i32_178 dim 1 : vector<8x128xf32>, i32 -> vector<8x128xf32>
      %382 = vector.broadcast %85 : vector<1x128xf32> to vector<8x128xf32>
      %383 = arith.mulf %381, %382 : vector<8x128xf32>
      %c56_179 = arith.constant 56 : index
      %c0_180 = arith.constant 0 : index
      %384 = vector.load %arg12[%c56_179, %c0_180] : memref<432x128xf32, #tpu.memory_space<vmem>>, vector<8x128xf32>
      tpu.vector_store %arg12[%c56_179, %c0_180], %383 {strides = array<i32>} : memref<432x128xf32, #tpu.memory_space<vmem>>, vector<8x128xf32>,
      %385 = vector.broadcast %106 : vector<1x128xf32> to vector<8x128xf32>
      %386 = arith.mulf %349, %385 : vector<8x128xf32>
      %c64_181 = arith.constant 64 : index
      %c0_182 = arith.constant 0 : index
      %387 = vector.load %arg12[%c64_181, %c0_182] : memref<432x128xf32, #tpu.memory_space<vmem>>, vector<8x128xf32>
      tpu.vector_store %arg12[%c64_181, %c0_182], %386 {strides = array<i32>} : memref<432x128xf32, #tpu.memory_space<vmem>>, vector<8x128xf32>,
      %388 = vector.broadcast %106 : vector<1x128xf32> to vector<8x128xf32>
      %389 = arith.mulf %352, %388 : vector<8x128xf32>
      %c72_183 = arith.constant 72 : index
      %c0_184 = arith.constant 0 : index
      %390 = vector.load %arg12[%c72_183, %c0_184] : memref<432x128xf32, #tpu.memory_space<vmem>>, vector<8x128xf32>
      tpu.vector_store %arg12[%c72_183, %c0_184], %389 {strides = array<i32>} : memref<432x128xf32, #tpu.memory_space<vmem>>, vector<8x128xf32>,
      %c127_i32_185 = arith.constant 127 : i32
      %391 = tpu.dynamic_rotate %349 by %c127_i32_185 dim 1 : vector<8x128xf32>, i32 -> vector<8x128xf32>
      %392 = vector.broadcast %127 : vector<1x128xf32> to vector<8x128xf32>
      %393 = arith.mulf %391, %392 : vector<8x128xf32>
      %c80_186 = arith.constant 80 : index
      %c0_187 = arith.constant 0 : index
      %394 = vector.load %arg12[%c80_186, %c0_187] : memref<432x128xf32, #tpu.memory_space<vmem>>, vector<8x128xf32>
      tpu.vector_store %arg12[%c80_186, %c0_187], %393 {strides = array<i32>} : memref<432x128xf32, #tpu.memory_space<vmem>>, vector<8x128xf32>,
      %c127_i32_188 = arith.constant 127 : i32
      %395 = tpu.dynamic_rotate %352 by %c127_i32_188 dim 1 : vector<8x128xf32>, i32 -> vector<8x128xf32>
      %396 = vector.broadcast %127 : vector<1x128xf32> to vector<8x128xf32>
      %397 = arith.mulf %395, %396 : vector<8x128xf32>
      %c88_189 = arith.constant 88 : index
      %c0_190 = arith.constant 0 : index
      %398 = vector.load %arg12[%c88_189, %c0_190] : memref<432x128xf32, #tpu.memory_space<vmem>>, vector<8x128xf32>
      tpu.vector_store %arg12[%c88_189, %c0_190], %397 {strides = array<i32>} : memref<432x128xf32, #tpu.memory_space<vmem>>, vector<8x128xf32>,
      %c113_i32_191 = arith.constant 113 : i32
      %399 = tpu.dynamic_rotate %349 by %c113_i32_191 dim 1 : vector<8x128xf32>, i32 -> vector<8x128xf32>
      %400 = vector.broadcast %148 : vector<1x128xf32> to vector<8x128xf32>
      %401 = arith.mulf %399, %400 : vector<8x128xf32>
      %c96_192 = arith.constant 96 : index
      %c0_193 = arith.constant 0 : index
      %402 = vector.load %arg12[%c96_192, %c0_193] : memref<432x128xf32, #tpu.memory_space<vmem>>, vector<8x128xf32>
      tpu.vector_store %arg12[%c96_192, %c0_193], %401 {strides = array<i32>} : memref<432x128xf32, #tpu.memory_space<vmem>>, vector<8x128xf32>,
      %c113_i32_194 = arith.constant 113 : i32
      %403 = tpu.dynamic_rotate %352 by %c113_i32_194 dim 1 : vector<8x128xf32>, i32 -> vector<8x128xf32>
      %404 = vector.broadcast %148 : vector<1x128xf32> to vector<8x128xf32>
      %405 = arith.mulf %403, %404 : vector<8x128xf32>
      %c104_195 = arith.constant 104 : index
      %c0_196 = arith.constant 0 : index
      %406 = vector.load %arg12[%c104_195, %c0_196] : memref<432x128xf32, #tpu.memory_space<vmem>>, vector<8x128xf32>
      tpu.vector_store %arg12[%c104_195, %c0_196], %405 {strides = array<i32>} : memref<432x128xf32, #tpu.memory_space<vmem>>, vector<8x128xf32>,
      %c112_i32_197 = arith.constant 112 : i32
      %407 = tpu.dynamic_rotate %349 by %c112_i32_197 dim 1 : vector<8x128xf32>, i32 -> vector<8x128xf32>
      %408 = vector.broadcast %169 : vector<1x128xf32> to vector<8x128xf32>
      %409 = arith.mulf %407, %408 : vector<8x128xf32>
      %c112_198 = arith.constant 112 : index
      %c0_199 = arith.constant 0 : index
      %410 = vector.load %arg12[%c112_198, %c0_199] : memref<432x128xf32, #tpu.memory_space<vmem>>, vector<8x128xf32>
      tpu.vector_store %arg12[%c112_198, %c0_199], %409 {strides = array<i32>} : memref<432x128xf32, #tpu.memory_space<vmem>>, vector<8x128xf32>,
      %c112_i32_200 = arith.constant 112 : i32
      %411 = tpu.dynamic_rotate %352 by %c112_i32_200 dim 1 : vector<8x128xf32>, i32 -> vector<8x128xf32>
      %412 = vector.broadcast %169 : vector<1x128xf32> to vector<8x128xf32>
      %413 = arith.mulf %411, %412 : vector<8x128xf32>
      %c120_201 = arith.constant 120 : index
      %c0_202 = arith.constant 0 : index
      %414 = vector.load %arg12[%c120_201, %c0_202] : memref<432x128xf32, #tpu.memory_space<vmem>>, vector<8x128xf32>
      tpu.vector_store %arg12[%c120_201, %c0_202], %413 {strides = array<i32>} : memref<432x128xf32, #tpu.memory_space<vmem>>, vector<8x128xf32>,
      %c111_i32_203 = arith.constant 111 : i32
      %415 = tpu.dynamic_rotate %349 by %c111_i32_203 dim 1 : vector<8x128xf32>, i32 -> vector<8x128xf32>
      %416 = vector.broadcast %190 : vector<1x128xf32> to vector<8x128xf32>
      %417 = arith.mulf %415, %416 : vector<8x128xf32>
      %c128_204 = arith.constant 128 : index
      %c0_205 = arith.constant 0 : index
      %418 = vector.load %arg12[%c128_204, %c0_205] : memref<432x128xf32, #tpu.memory_space<vmem>>, vector<8x128xf32>
      tpu.vector_store %arg12[%c128_204, %c0_205], %417 {strides = array<i32>} : memref<432x128xf32, #tpu.memory_space<vmem>>, vector<8x128xf32>,
      %c111_i32_206 = arith.constant 111 : i32
      %419 = tpu.dynamic_rotate %352 by %c111_i32_206 dim 1 : vector<8x128xf32>, i32 -> vector<8x128xf32>
      %420 = vector.broadcast %190 : vector<1x128xf32> to vector<8x128xf32>
      %421 = arith.mulf %419, %420 : vector<8x128xf32>
      %c136_207 = arith.constant 136 : index
      %c0_208 = arith.constant 0 : index
      %422 = vector.load %arg12[%c136_207, %c0_208] : memref<432x128xf32, #tpu.memory_space<vmem>>, vector<8x128xf32>
      tpu.vector_store %arg12[%c136_207, %c0_208], %421 {strides = array<i32>} : memref<432x128xf32, #tpu.memory_space<vmem>>, vector<8x128xf32>,
      %c0_i32_209 = arith.constant 0 : i32
      %423 = vector.broadcast %c0_i32_209 : i32 to vector<1x128xi32>
      %424 = arith.cmpi sge, %1, %423 : vector<1x128xi32>
      %true = arith.constant true
      %425 = vector.broadcast %true : i1 to vector<1x128xi1>
      %426 = arith.andi %424, %425 : vector<1x128xi1>
      %427 = arith.extui %426 : vector<1x128xi1> to vector<1x128xi32>
      %428 = arith.sitofp %427 : vector<1x128xi32> to vector<1x128xf32>
      %429 = vector.broadcast %428 : vector<1x128xf32> to vector<8x128xf32>
      %430 = arith.mulf %192, %429 : vector<8x128xf32>
      %431 = vector.broadcast %428 : vector<1x128xf32> to vector<8x128xf32>
      %432 = arith.mulf %194, %431 : vector<8x128xf32>
      %c17_i32_210 = arith.constant 17 : i32
      %433 = tpu.dynamic_rotate %430 by %c17_i32_210 dim 1 : vector<8x128xf32>, i32 -> vector<8x128xf32>
      %434 = vector.broadcast %22 : vector<1x128xf32> to vector<8x128xf32>
      %435 = arith.mulf %433, %434 : vector<8x128xf32>
      %c144_211 = arith.constant 144 : index
      %c0_212 = arith.constant 0 : index
      %436 = vector.load %arg12[%c144_211, %c0_212] : memref<432x128xf32, #tpu.memory_space<vmem>>, vector<8x128xf32>
      tpu.vector_store %arg12[%c144_211, %c0_212], %435 {strides = array<i32>} : memref<432x128xf32, #tpu.memory_space<vmem>>, vector<8x128xf32>,
      %c17_i32_213 = arith.constant 17 : i32
      %437 = tpu.dynamic_rotate %432 by %c17_i32_213 dim 1 : vector<8x128xf32>, i32 -> vector<8x128xf32>
      %438 = vector.broadcast %22 : vector<1x128xf32> to vector<8x128xf32>
      %439 = arith.mulf %437, %438 : vector<8x128xf32>
      %c152_214 = arith.constant 152 : index
      %c0_215 = arith.constant 0 : index
      %440 = vector.load %arg12[%c152_214, %c0_215] : memref<432x128xf32, #tpu.memory_space<vmem>>, vector<8x128xf32>
      tpu.vector_store %arg12[%c152_214, %c0_215], %439 {strides = array<i32>} : memref<432x128xf32, #tpu.memory_space<vmem>>, vector<8x128xf32>,
      %c16_i32_216 = arith.constant 16 : i32
      %441 = tpu.dynamic_rotate %430 by %c16_i32_216 dim 1 : vector<8x128xf32>, i32 -> vector<8x128xf32>
      %442 = vector.broadcast %43 : vector<1x128xf32> to vector<8x128xf32>
      %443 = arith.mulf %441, %442 : vector<8x128xf32>
      %c160_217 = arith.constant 160 : index
      %c0_218 = arith.constant 0 : index
      %444 = vector.load %arg12[%c160_217, %c0_218] : memref<432x128xf32, #tpu.memory_space<vmem>>, vector<8x128xf32>
      tpu.vector_store %arg12[%c160_217, %c0_218], %443 {strides = array<i32>} : memref<432x128xf32, #tpu.memory_space<vmem>>, vector<8x128xf32>,
      %c16_i32_219 = arith.constant 16 : i32
      %445 = tpu.dynamic_rotate %432 by %c16_i32_219 dim 1 : vector<8x128xf32>, i32 -> vector<8x128xf32>
      %446 = vector.broadcast %43 : vector<1x128xf32> to vector<8x128xf32>
      %447 = arith.mulf %445, %446 : vector<8x128xf32>
      %c168_220 = arith.constant 168 : index
      %c0_221 = arith.constant 0 : index
      %448 = vector.load %arg12[%c168_220, %c0_221] : memref<432x128xf32, #tpu.memory_space<vmem>>, vector<8x128xf32>
      tpu.vector_store %arg12[%c168_220, %c0_221], %447 {strides = array<i32>} : memref<432x128xf32, #tpu.memory_space<vmem>>, vector<8x128xf32>,
      %c15_i32_222 = arith.constant 15 : i32
      %449 = tpu.dynamic_rotate %430 by %c15_i32_222 dim 1 : vector<8x128xf32>, i32 -> vector<8x128xf32>
      %450 = vector.broadcast %64 : vector<1x128xf32> to vector<8x128xf32>
      %451 = arith.mulf %449, %450 : vector<8x128xf32>
      %c176_223 = arith.constant 176 : index
      %c0_224 = arith.constant 0 : index
      %452 = vector.load %arg12[%c176_223, %c0_224] : memref<432x128xf32, #tpu.memory_space<vmem>>, vector<8x128xf32>
      tpu.vector_store %arg12[%c176_223, %c0_224], %451 {strides = array<i32>} : memref<432x128xf32, #tpu.memory_space<vmem>>, vector<8x128xf32>,
      %c15_i32_225 = arith.constant 15 : i32
      %453 = tpu.dynamic_rotate %432 by %c15_i32_225 dim 1 : vector<8x128xf32>, i32 -> vector<8x128xf32>
      %454 = vector.broadcast %64 : vector<1x128xf32> to vector<8x128xf32>
      %455 = arith.mulf %453, %454 : vector<8x128xf32>
      %c184_226 = arith.constant 184 : index
      %c0_227 = arith.constant 0 : index
      %456 = vector.load %arg12[%c184_226, %c0_227] : memref<432x128xf32, #tpu.memory_space<vmem>>, vector<8x128xf32>
      tpu.vector_store %arg12[%c184_226, %c0_227], %455 {strides = array<i32>} : memref<432x128xf32, #tpu.memory_space<vmem>>, vector<8x128xf32>,
      %c1_i32_228 = arith.constant 1 : i32
      %457 = tpu.dynamic_rotate %430 by %c1_i32_228 dim 1 : vector<8x128xf32>, i32 -> vector<8x128xf32>
      %458 = vector.broadcast %85 : vector<1x128xf32> to vector<8x128xf32>
      %459 = arith.mulf %457, %458 : vector<8x128xf32>
      %c192_229 = arith.constant 192 : index
      %c0_230 = arith.constant 0 : index
      %460 = vector.load %arg12[%c192_229, %c0_230] : memref<432x128xf32, #tpu.memory_space<vmem>>, vector<8x128xf32>
      tpu.vector_store %arg12[%c192_229, %c0_230], %459 {strides = array<i32>} : memref<432x128xf32, #tpu.memory_space<vmem>>, vector<8x128xf32>,
      %c1_i32_231 = arith.constant 1 : i32
      %461 = tpu.dynamic_rotate %432 by %c1_i32_231 dim 1 : vector<8x128xf32>, i32 -> vector<8x128xf32>
      %462 = vector.broadcast %85 : vector<1x128xf32> to vector<8x128xf32>
      %463 = arith.mulf %461, %462 : vector<8x128xf32>
      %c200_232 = arith.constant 200 : index
      %c0_233 = arith.constant 0 : index
      %464 = vector.load %arg12[%c200_232, %c0_233] : memref<432x128xf32, #tpu.memory_space<vmem>>, vector<8x128xf32>
      tpu.vector_store %arg12[%c200_232, %c0_233], %463 {strides = array<i32>} : memref<432x128xf32, #tpu.memory_space<vmem>>, vector<8x128xf32>,
      %465 = vector.broadcast %106 : vector<1x128xf32> to vector<8x128xf32>
      %466 = arith.mulf %430, %465 : vector<8x128xf32>
      %c208_234 = arith.constant 208 : index
      %c0_235 = arith.constant 0 : index
      %467 = vector.load %arg12[%c208_234, %c0_235] : memref<432x128xf32, #tpu.memory_space<vmem>>, vector<8x128xf32>
      tpu.vector_store %arg12[%c208_234, %c0_235], %466 {strides = array<i32>} : memref<432x128xf32, #tpu.memory_space<vmem>>, vector<8x128xf32>,
      %468 = vector.broadcast %106 : vector<1x128xf32> to vector<8x128xf32>
      %469 = arith.mulf %432, %468 : vector<8x128xf32>
      %c216 = arith.constant 216 : index
      %c0_236 = arith.constant 0 : index
      %470 = vector.load %arg12[%c216, %c0_236] : memref<432x128xf32, #tpu.memory_space<vmem>>, vector<8x128xf32>
      tpu.vector_store %arg12[%c216, %c0_236], %469 {strides = array<i32>} : memref<432x128xf32, #tpu.memory_space<vmem>>, vector<8x128xf32>,
      %c127_i32_237 = arith.constant 127 : i32
      %471 = tpu.dynamic_rotate %430 by %c127_i32_237 dim 1 : vector<8x128xf32>, i32 -> vector<8x128xf32>
      %472 = vector.broadcast %127 : vector<1x128xf32> to vector<8x128xf32>
      %473 = arith.mulf %471, %472 : vector<8x128xf32>
      %c224 = arith.constant 224 : index
      %c0_238 = arith.constant 0 : index
      %474 = vector.load %arg12[%c224, %c0_238] : memref<432x128xf32, #tpu.memory_space<vmem>>, vector<8x128xf32>
      tpu.vector_store %arg12[%c224, %c0_238], %473 {strides = array<i32>} : memref<432x128xf32, #tpu.memory_space<vmem>>, vector<8x128xf32>,
      %c127_i32_239 = arith.constant 127 : i32
      %475 = tpu.dynamic_rotate %432 by %c127_i32_239 dim 1 : vector<8x128xf32>, i32 -> vector<8x128xf32>
      %476 = vector.broadcast %127 : vector<1x128xf32> to vector<8x128xf32>
      %477 = arith.mulf %475, %476 : vector<8x128xf32>
      %c232 = arith.constant 232 : index
      %c0_240 = arith.constant 0 : index
      %478 = vector.load %arg12[%c232, %c0_240] : memref<432x128xf32, #tpu.memory_space<vmem>>, vector<8x128xf32>
      tpu.vector_store %arg12[%c232, %c0_240], %477 {strides = array<i32>} : memref<432x128xf32, #tpu.memory_space<vmem>>, vector<8x128xf32>,
      %c113_i32_241 = arith.constant 113 : i32
      %479 = tpu.dynamic_rotate %430 by %c113_i32_241 dim 1 : vector<8x128xf32>, i32 -> vector<8x128xf32>
      %480 = vector.broadcast %148 : vector<1x128xf32> to vector<8x128xf32>
      %481 = arith.mulf %479, %480 : vector<8x128xf32>
      %c240 = arith.constant 240 : index
      %c0_242 = arith.constant 0 : index
      %482 = vector.load %arg12[%c240, %c0_242] : memref<432x128xf32, #tpu.memory_space<vmem>>, vector<8x128xf32>
      tpu.vector_store %arg12[%c240, %c0_242], %481 {strides = array<i32>} : memref<432x128xf32, #tpu.memory_space<vmem>>, vector<8x128xf32>,
      %c113_i32_243 = arith.constant 113 : i32
      %483 = tpu.dynamic_rotate %432 by %c113_i32_243 dim 1 : vector<8x128xf32>, i32 -> vector<8x128xf32>
      %484 = vector.broadcast %148 : vector<1x128xf32> to vector<8x128xf32>
      %485 = arith.mulf %483, %484 : vector<8x128xf32>
      %c248 = arith.constant 248 : index
      %c0_244 = arith.constant 0 : index
      %486 = vector.load %arg12[%c248, %c0_244] : memref<432x128xf32, #tpu.memory_space<vmem>>, vector<8x128xf32>
      tpu.vector_store %arg12[%c248, %c0_244], %485 {strides = array<i32>} : memref<432x128xf32, #tpu.memory_space<vmem>>, vector<8x128xf32>,
      %c112_i32_245 = arith.constant 112 : i32
      %487 = tpu.dynamic_rotate %430 by %c112_i32_245 dim 1 : vector<8x128xf32>, i32 -> vector<8x128xf32>
      %488 = vector.broadcast %169 : vector<1x128xf32> to vector<8x128xf32>
      %489 = arith.mulf %487, %488 : vector<8x128xf32>
      %c256 = arith.constant 256 : index
      %c0_246 = arith.constant 0 : index
      %490 = vector.load %arg12[%c256, %c0_246] : memref<432x128xf32, #tpu.memory_space<vmem>>, vector<8x128xf32>
      tpu.vector_store %arg12[%c256, %c0_246], %489 {strides = array<i32>} : memref<432x128xf32, #tpu.memory_space<vmem>>, vector<8x128xf32>,
      %c112_i32_247 = arith.constant 112 : i32
      %491 = tpu.dynamic_rotate %432 by %c112_i32_247 dim 1 : vector<8x128xf32>, i32 -> vector<8x128xf32>
      %492 = vector.broadcast %169 : vector<1x128xf32> to vector<8x128xf32>
      %493 = arith.mulf %491, %492 : vector<8x128xf32>
      %c264 = arith.constant 264 : index
      %c0_248 = arith.constant 0 : index
      %494 = vector.load %arg12[%c264, %c0_248] : memref<432x128xf32, #tpu.memory_space<vmem>>, vector<8x128xf32>
      tpu.vector_store %arg12[%c264, %c0_248], %493 {strides = array<i32>} : memref<432x128xf32, #tpu.memory_space<vmem>>, vector<8x128xf32>,
      %c111_i32_249 = arith.constant 111 : i32
      %495 = tpu.dynamic_rotate %430 by %c111_i32_249 dim 1 : vector<8x128xf32>, i32 -> vector<8x128xf32>
      %496 = vector.broadcast %190 : vector<1x128xf32> to vector<8x128xf32>
      %497 = arith.mulf %495, %496 : vector<8x128xf32>
      %c272 = arith.constant 272 : index
      %c0_250 = arith.constant 0 : index
      %498 = vector.load %arg12[%c272, %c0_250] : memref<432x128xf32, #tpu.memory_space<vmem>>, vector<8x128xf32>
      tpu.vector_store %arg12[%c272, %c0_250], %497 {strides = array<i32>} : memref<432x128xf32, #tpu.memory_space<vmem>>, vector<8x128xf32>,
      %c111_i32_251 = arith.constant 111 : i32
      %499 = tpu.dynamic_rotate %432 by %c111_i32_251 dim 1 : vector<8x128xf32>, i32 -> vector<8x128xf32>
      %500 = vector.broadcast %190 : vector<1x128xf32> to vector<8x128xf32>
      %501 = arith.mulf %499, %500 : vector<8x128xf32>
      %c280 = arith.constant 280 : index
      %c0_252 = arith.constant 0 : index
      %502 = vector.load %arg12[%c280, %c0_252] : memref<432x128xf32, #tpu.memory_space<vmem>>, vector<8x128xf32>
      tpu.vector_store %arg12[%c280, %c0_252], %501 {strides = array<i32>} : memref<432x128xf32, #tpu.memory_space<vmem>>, vector<8x128xf32>,
      %c1_i32_253 = arith.constant 1 : i32
      %503 = vector.broadcast %c1_i32_253 : i32 to vector<1x128xi32>
      %504 = arith.cmpi sge, %1, %503 : vector<1x128xi32>
      %true_254 = arith.constant true
      %505 = vector.broadcast %true_254 : i1 to vector<1x128xi1>
      %506 = arith.andi %504, %505 : vector<1x128xi1>
      %507 = arith.extui %506 : vector<1x128xi1> to vector<1x128xi32>
      %508 = arith.sitofp %507 : vector<1x128xi32> to vector<1x128xf32>
      %509 = vector.broadcast %508 : vector<1x128xf32> to vector<8x128xf32>
      %510 = arith.mulf %192, %509 : vector<8x128xf32>
      %c1_i32_255 = arith.constant 1 : i32
      %511 = tpu.dynamic_rotate %194 by %c1_i32_255 dim 1 : vector<8x128xf32>, i32 -> vector<8x128xf32>
      %512 = vector.broadcast %508 : vector<1x128xf32> to vector<8x128xf32>
      %513 = arith.mulf %511, %512 : vector<8x128xf32>
      %c17_i32_256 = arith.constant 17 : i32
      %514 = tpu.dynamic_rotate %510 by %c17_i32_256 dim 1 : vector<8x128xf32>, i32 -> vector<8x128xf32>
      %515 = vector.broadcast %22 : vector<1x128xf32> to vector<8x128xf32>
      %516 = arith.mulf %514, %515 : vector<8x128xf32>
      %c288 = arith.constant 288 : index
      %c0_257 = arith.constant 0 : index
      %517 = vector.load %arg12[%c288, %c0_257] : memref<432x128xf32, #tpu.memory_space<vmem>>, vector<8x128xf32>
      tpu.vector_store %arg12[%c288, %c0_257], %516 {strides = array<i32>} : memref<432x128xf32, #tpu.memory_space<vmem>>, vector<8x128xf32>,
      %c17_i32_258 = arith.constant 17 : i32
      %518 = tpu.dynamic_rotate %513 by %c17_i32_258 dim 1 : vector<8x128xf32>, i32 -> vector<8x128xf32>
      %519 = vector.broadcast %22 : vector<1x128xf32> to vector<8x128xf32>
      %520 = arith.mulf %518, %519 : vector<8x128xf32>
      %c296 = arith.constant 296 : index
      %c0_259 = arith.constant 0 : index
      %521 = vector.load %arg12[%c296, %c0_259] : memref<432x128xf32, #tpu.memory_space<vmem>>, vector<8x128xf32>
      tpu.vector_store %arg12[%c296, %c0_259], %520 {strides = array<i32>} : memref<432x128xf32, #tpu.memory_space<vmem>>, vector<8x128xf32>,
      %c16_i32_260 = arith.constant 16 : i32
      %522 = tpu.dynamic_rotate %510 by %c16_i32_260 dim 1 : vector<8x128xf32>, i32 -> vector<8x128xf32>
      %523 = vector.broadcast %43 : vector<1x128xf32> to vector<8x128xf32>
      %524 = arith.mulf %522, %523 : vector<8x128xf32>
      %c304 = arith.constant 304 : index
      %c0_261 = arith.constant 0 : index
      %525 = vector.load %arg12[%c304, %c0_261] : memref<432x128xf32, #tpu.memory_space<vmem>>, vector<8x128xf32>
      tpu.vector_store %arg12[%c304, %c0_261], %524 {strides = array<i32>} : memref<432x128xf32, #tpu.memory_space<vmem>>, vector<8x128xf32>,
      %c16_i32_262 = arith.constant 16 : i32
      %526 = tpu.dynamic_rotate %513 by %c16_i32_262 dim 1 : vector<8x128xf32>, i32 -> vector<8x128xf32>
      %527 = vector.broadcast %43 : vector<1x128xf32> to vector<8x128xf32>
      %528 = arith.mulf %526, %527 : vector<8x128xf32>
      %c312 = arith.constant 312 : index
      %c0_263 = arith.constant 0 : index
      %529 = vector.load %arg12[%c312, %c0_263] : memref<432x128xf32, #tpu.memory_space<vmem>>, vector<8x128xf32>
      tpu.vector_store %arg12[%c312, %c0_263], %528 {strides = array<i32>} : memref<432x128xf32, #tpu.memory_space<vmem>>, vector<8x128xf32>,
      %c15_i32_264 = arith.constant 15 : i32
      %530 = tpu.dynamic_rotate %510 by %c15_i32_264 dim 1 : vector<8x128xf32>, i32 -> vector<8x128xf32>
      %531 = vector.broadcast %64 : vector<1x128xf32> to vector<8x128xf32>
      %532 = arith.mulf %530, %531 : vector<8x128xf32>
      %c320 = arith.constant 320 : index
      %c0_265 = arith.constant 0 : index
      %533 = vector.load %arg12[%c320, %c0_265] : memref<432x128xf32, #tpu.memory_space<vmem>>, vector<8x128xf32>
      tpu.vector_store %arg12[%c320, %c0_265], %532 {strides = array<i32>} : memref<432x128xf32, #tpu.memory_space<vmem>>, vector<8x128xf32>,
      %c15_i32_266 = arith.constant 15 : i32
      %534 = tpu.dynamic_rotate %513 by %c15_i32_266 dim 1 : vector<8x128xf32>, i32 -> vector<8x128xf32>
      %535 = vector.broadcast %64 : vector<1x128xf32> to vector<8x128xf32>
      %536 = arith.mulf %534, %535 : vector<8x128xf32>
      %c328 = arith.constant 328 : index
      %c0_267 = arith.constant 0 : index
      %537 = vector.load %arg12[%c328, %c0_267] : memref<432x128xf32, #tpu.memory_space<vmem>>, vector<8x128xf32>
      tpu.vector_store %arg12[%c328, %c0_267], %536 {strides = array<i32>} : memref<432x128xf32, #tpu.memory_space<vmem>>, vector<8x128xf32>,
      %c1_i32_268 = arith.constant 1 : i32
      %538 = tpu.dynamic_rotate %510 by %c1_i32_268 dim 1 : vector<8x128xf32>, i32 -> vector<8x128xf32>
      %539 = vector.broadcast %85 : vector<1x128xf32> to vector<8x128xf32>
      %540 = arith.mulf %538, %539 : vector<8x128xf32>
      %c336 = arith.constant 336 : index
      %c0_269 = arith.constant 0 : index
      %541 = vector.load %arg12[%c336, %c0_269] : memref<432x128xf32, #tpu.memory_space<vmem>>, vector<8x128xf32>
      tpu.vector_store %arg12[%c336, %c0_269], %540 {strides = array<i32>} : memref<432x128xf32, #tpu.memory_space<vmem>>, vector<8x128xf32>,
      %c1_i32_270 = arith.constant 1 : i32
      %542 = tpu.dynamic_rotate %513 by %c1_i32_270 dim 1 : vector<8x128xf32>, i32 -> vector<8x128xf32>
      %543 = vector.broadcast %85 : vector<1x128xf32> to vector<8x128xf32>
      %544 = arith.mulf %542, %543 : vector<8x128xf32>
      %c344 = arith.constant 344 : index
      %c0_271 = arith.constant 0 : index
      %545 = vector.load %arg12[%c344, %c0_271] : memref<432x128xf32, #tpu.memory_space<vmem>>, vector<8x128xf32>
      tpu.vector_store %arg12[%c344, %c0_271], %544 {strides = array<i32>} : memref<432x128xf32, #tpu.memory_space<vmem>>, vector<8x128xf32>,
      %546 = vector.broadcast %106 : vector<1x128xf32> to vector<8x128xf32>
      %547 = arith.mulf %510, %546 : vector<8x128xf32>
      %c352 = arith.constant 352 : index
      %c0_272 = arith.constant 0 : index
      %548 = vector.load %arg12[%c352, %c0_272] : memref<432x128xf32, #tpu.memory_space<vmem>>, vector<8x128xf32>
      tpu.vector_store %arg12[%c352, %c0_272], %547 {strides = array<i32>} : memref<432x128xf32, #tpu.memory_space<vmem>>, vector<8x128xf32>,
      %549 = vector.broadcast %106 : vector<1x128xf32> to vector<8x128xf32>
      %550 = arith.mulf %513, %549 : vector<8x128xf32>
      %c360 = arith.constant 360 : index
      %c0_273 = arith.constant 0 : index
      %551 = vector.load %arg12[%c360, %c0_273] : memref<432x128xf32, #tpu.memory_space<vmem>>, vector<8x128xf32>
      tpu.vector_store %arg12[%c360, %c0_273], %550 {strides = array<i32>} : memref<432x128xf32, #tpu.memory_space<vmem>>, vector<8x128xf32>,
      %c127_i32_274 = arith.constant 127 : i32
      %552 = tpu.dynamic_rotate %510 by %c127_i32_274 dim 1 : vector<8x128xf32>, i32 -> vector<8x128xf32>
      %553 = vector.broadcast %127 : vector<1x128xf32> to vector<8x128xf32>
      %554 = arith.mulf %552, %553 : vector<8x128xf32>
      %c368 = arith.constant 368 : index
      %c0_275 = arith.constant 0 : index
      %555 = vector.load %arg12[%c368, %c0_275] : memref<432x128xf32, #tpu.memory_space<vmem>>, vector<8x128xf32>
      tpu.vector_store %arg12[%c368, %c0_275], %554 {strides = array<i32>} : memref<432x128xf32, #tpu.memory_space<vmem>>, vector<8x128xf32>,
      %c127_i32_276 = arith.constant 127 : i32
      %556 = tpu.dynamic_rotate %513 by %c127_i32_276 dim 1 : vector<8x128xf32>, i32 -> vector<8x128xf32>
      %557 = vector.broadcast %127 : vector<1x128xf32> to vector<8x128xf32>
      %558 = arith.mulf %556, %557 : vector<8x128xf32>
      %c376 = arith.constant 376 : index
      %c0_277 = arith.constant 0 : index
      %559 = vector.load %arg12[%c376, %c0_277] : memref<432x128xf32, #tpu.memory_space<vmem>>, vector<8x128xf32>
      tpu.vector_store %arg12[%c376, %c0_277], %558 {strides = array<i32>} : memref<432x128xf32, #tpu.memory_space<vmem>>, vector<8x128xf32>,
      %c113_i32_278 = arith.constant 113 : i32
      %560 = tpu.dynamic_rotate %510 by %c113_i32_278 dim 1 : vector<8x128xf32>, i32 -> vector<8x128xf32>
      %561 = vector.broadcast %148 : vector<1x128xf32> to vector<8x128xf32>
      %562 = arith.mulf %560, %561 : vector<8x128xf32>
      %c384 = arith.constant 384 : index
      %c0_279 = arith.constant 0 : index
      %563 = vector.load %arg12[%c384, %c0_279] : memref<432x128xf32, #tpu.memory_space<vmem>>, vector<8x128xf32>
      tpu.vector_store %arg12[%c384, %c0_279], %562 {strides = array<i32>} : memref<432x128xf32, #tpu.memory_space<vmem>>, vector<8x128xf32>,
      %c113_i32_280 = arith.constant 113 : i32
      %564 = tpu.dynamic_rotate %513 by %c113_i32_280 dim 1 : vector<8x128xf32>, i32 -> vector<8x128xf32>
      %565 = vector.broadcast %148 : vector<1x128xf32> to vector<8x128xf32>
      %566 = arith.mulf %564, %565 : vector<8x128xf32>
      %c392 = arith.constant 392 : index
      %c0_281 = arith.constant 0 : index
      %567 = vector.load %arg12[%c392, %c0_281] : memref<432x128xf32, #tpu.memory_space<vmem>>, vector<8x128xf32>
      tpu.vector_store %arg12[%c392, %c0_281], %566 {strides = array<i32>} : memref<432x128xf32, #tpu.memory_space<vmem>>, vector<8x128xf32>,
      %c112_i32_282 = arith.constant 112 : i32
      %568 = tpu.dynamic_rotate %510 by %c112_i32_282 dim 1 : vector<8x128xf32>, i32 -> vector<8x128xf32>
      %569 = vector.broadcast %169 : vector<1x128xf32> to vector<8x128xf32>
      %570 = arith.mulf %568, %569 : vector<8x128xf32>
      %c400 = arith.constant 400 : index
      %c0_283 = arith.constant 0 : index
      %571 = vector.load %arg12[%c400, %c0_283] : memref<432x128xf32, #tpu.memory_space<vmem>>, vector<8x128xf32>
      tpu.vector_store %arg12[%c400, %c0_283], %570 {strides = array<i32>} : memref<432x128xf32, #tpu.memory_space<vmem>>, vector<8x128xf32>,
      %c112_i32_284 = arith.constant 112 : i32
      %572 = tpu.dynamic_rotate %513 by %c112_i32_284 dim 1 : vector<8x128xf32>, i32 -> vector<8x128xf32>
      %573 = vector.broadcast %169 : vector<1x128xf32> to vector<8x128xf32>
      %574 = arith.mulf %572, %573 : vector<8x128xf32>
      %c408 = arith.constant 408 : index
      %c0_285 = arith.constant 0 : index
      %575 = vector.load %arg12[%c408, %c0_285] : memref<432x128xf32, #tpu.memory_space<vmem>>, vector<8x128xf32>
      tpu.vector_store %arg12[%c408, %c0_285], %574 {strides = array<i32>} : memref<432x128xf32, #tpu.memory_space<vmem>>, vector<8x128xf32>,
      %c111_i32_286 = arith.constant 111 : i32
      %576 = tpu.dynamic_rotate %510 by %c111_i32_286 dim 1 : vector<8x128xf32>, i32 -> vector<8x128xf32>
      %577 = vector.broadcast %190 : vector<1x128xf32> to vector<8x128xf32>
      %578 = arith.mulf %576, %577 : vector<8x128xf32>
      %c416 = arith.constant 416 : index
      %c0_287 = arith.constant 0 : index
      %579 = vector.load %arg12[%c416, %c0_287] : memref<432x128xf32, #tpu.memory_space<vmem>>, vector<8x128xf32>
      tpu.vector_store %arg12[%c416, %c0_287], %578 {strides = array<i32>} : memref<432x128xf32, #tpu.memory_space<vmem>>, vector<8x128xf32>,
      %c111_i32_288 = arith.constant 111 : i32
      %580 = tpu.dynamic_rotate %513 by %c111_i32_288 dim 1 : vector<8x128xf32>, i32 -> vector<8x128xf32>
      %581 = vector.broadcast %190 : vector<1x128xf32> to vector<8x128xf32>
      %582 = arith.mulf %580, %581 : vector<8x128xf32>
      %c424 = arith.constant 424 : index
      %c0_289 = arith.constant 0 : index
      %583 = vector.load %arg12[%c424, %c0_289] : memref<432x128xf32, #tpu.memory_space<vmem>>, vector<8x128xf32>
      tpu.vector_store %arg12[%c424, %c0_289], %582 {strides = array<i32>} : memref<432x128xf32, #tpu.memory_space<vmem>>, vector<8x128xf32>,
      %c0_290 = arith.constant 0 : index
      %c0_291 = arith.constant 0 : index
      %584 = vector.load %arg6[%c0_290, %c0_291] : memref<8x432xf32, #tpu.memory_space<vmem>>, vector<8x432xf32>
      %c0_292 = arith.constant 0 : index
      %c0_293 = arith.constant 0 : index
      %585 = vector.load %arg12[%c0_292, %c0_293] : memref<432x128xf32, #tpu.memory_space<vmem>>, vector<432x128xf32>
      %cst_294 = arith.constant dense<0.000000e+00> : vector<8x128xf32>
      %586 = tpu.matmul %584, %585, %cst_294 {dimension_numbers = #tpu.dot_dimension_numbers<[1], [0], [0], [1], [0, 0, 1, 1], [], []>} : vector<8x432xf32>, vector<432x128xf32>, vector<8x128xf32> -> vector<8x128xf32>
      %c0_295 = arith.constant 0 : index
      %c0_296 = arith.constant 0 : index
      %587 = vector.load %arg7[%c0_295, %c0_296] : memref<8x1xf32, #tpu.memory_space<vmem>>, vector<8x1xf32>
      %588 = vector.broadcast %587 : vector<8x1xf32> to vector<8x128xf32>
      %589 = arith.addf %586, %588 : vector<8x128xf32>
      %cst_297 = arith.constant 0.000000e+00 : f32
      %590 = vector.broadcast %cst_297 : f32 to vector<8x128xf32>
      %591 = arith.maximumf %589, %590 : vector<8x128xf32>
      %c0_298 = arith.constant 0 : index
      %c0_299 = arith.constant 0 : index
      %c0_300 = arith.constant 0 : index
      %592 = vector.load %arg11[%c0_298, %c0_299, %c0_300] : memref<3x8x128xf32, #tpu.memory_space<vmem>>, vector<1x8x128xf32>
      %593 = vector.shape_cast %592 : vector<1x8x128xf32> to vector<8x128xf32>
      %594 = vector.shape_cast %591 : vector<8x128xf32> to vector<1x8x128xf32>
      tpu.vector_store %arg11[%c0_298, %c0_299, %c0_300], %594 {strides = array<i32>} : memref<3x8x128xf32, #tpu.memory_space<vmem>>, vector<1x8x128xf32>,
      %c1_i32_301 = arith.constant 1 : i32
      %595 = tpu.dynamic_rotate %194 by %c1_i32_301 dim 1 : vector<8x128xf32>, i32 -> vector<8x128xf32>
      %c0_i32_302 = arith.constant 0 : i32
      %596 = vector.broadcast %c0_i32_302 : i32 to vector<1x128xi32>
      %597 = arith.cmpi sge, %1, %596 : vector<1x128xi32>
      %true_303 = arith.constant true
      %598 = vector.broadcast %true_303 : i1 to vector<1x128xi1>
      %599 = arith.andi %597, %598 : vector<1x128xi1>
      %600 = arith.extui %599 : vector<1x128xi1> to vector<1x128xi32>
      %601 = arith.sitofp %600 : vector<1x128xi32> to vector<1x128xf32>
      %602 = vector.broadcast %601 : vector<1x128xf32> to vector<8x128xf32>
      %603 = arith.mulf %192, %602 : vector<8x128xf32>
      %c127_i32_304 = arith.constant 127 : i32
      %604 = tpu.dynamic_rotate %595 by %c127_i32_304 dim 1 : vector<8x128xf32>, i32 -> vector<8x128xf32>
      %605 = vector.broadcast %601 : vector<1x128xf32> to vector<8x128xf32>
      %606 = arith.mulf %604, %605 : vector<8x128xf32>
      %c17_i32_305 = arith.constant 17 : i32
      %607 = tpu.dynamic_rotate %603 by %c17_i32_305 dim 1 : vector<8x128xf32>, i32 -> vector<8x128xf32>
      %608 = vector.broadcast %22 : vector<1x128xf32> to vector<8x128xf32>
      %609 = arith.mulf %607, %608 : vector<8x128xf32>
      %c0_306 = arith.constant 0 : index
      %c0_307 = arith.constant 0 : index
      %610 = vector.load %arg12[%c0_306, %c0_307] : memref<432x128xf32, #tpu.memory_space<vmem>>, vector<8x128xf32>
      tpu.vector_store %arg12[%c0_306, %c0_307], %609 {strides = array<i32>} : memref<432x128xf32, #tpu.memory_space<vmem>>, vector<8x128xf32>,
      %c17_i32_308 = arith.constant 17 : i32
      %611 = tpu.dynamic_rotate %606 by %c17_i32_308 dim 1 : vector<8x128xf32>, i32 -> vector<8x128xf32>
      %612 = vector.broadcast %22 : vector<1x128xf32> to vector<8x128xf32>
      %613 = arith.mulf %611, %612 : vector<8x128xf32>
      %c8_309 = arith.constant 8 : index
      %c0_310 = arith.constant 0 : index
      %614 = vector.load %arg12[%c8_309, %c0_310] : memref<432x128xf32, #tpu.memory_space<vmem>>, vector<8x128xf32>
      tpu.vector_store %arg12[%c8_309, %c0_310], %613 {strides = array<i32>} : memref<432x128xf32, #tpu.memory_space<vmem>>, vector<8x128xf32>,
      %c16_i32_311 = arith.constant 16 : i32
      %615 = tpu.dynamic_rotate %603 by %c16_i32_311 dim 1 : vector<8x128xf32>, i32 -> vector<8x128xf32>
      %616 = vector.broadcast %43 : vector<1x128xf32> to vector<8x128xf32>
      %617 = arith.mulf %615, %616 : vector<8x128xf32>
      %c16_312 = arith.constant 16 : index
      %c0_313 = arith.constant 0 : index
      %618 = vector.load %arg12[%c16_312, %c0_313] : memref<432x128xf32, #tpu.memory_space<vmem>>, vector<8x128xf32>
      tpu.vector_store %arg12[%c16_312, %c0_313], %617 {strides = array<i32>} : memref<432x128xf32, #tpu.memory_space<vmem>>, vector<8x128xf32>,
      %c16_i32_314 = arith.constant 16 : i32
      %619 = tpu.dynamic_rotate %606 by %c16_i32_314 dim 1 : vector<8x128xf32>, i32 -> vector<8x128xf32>
      %620 = vector.broadcast %43 : vector<1x128xf32> to vector<8x128xf32>
      %621 = arith.mulf %619, %620 : vector<8x128xf32>
      %c24_315 = arith.constant 24 : index
      %c0_316 = arith.constant 0 : index
      %622 = vector.load %arg12[%c24_315, %c0_316] : memref<432x128xf32, #tpu.memory_space<vmem>>, vector<8x128xf32>
      tpu.vector_store %arg12[%c24_315, %c0_316], %621 {strides = array<i32>} : memref<432x128xf32, #tpu.memory_space<vmem>>, vector<8x128xf32>,
      %c15_i32_317 = arith.constant 15 : i32
      %623 = tpu.dynamic_rotate %603 by %c15_i32_317 dim 1 : vector<8x128xf32>, i32 -> vector<8x128xf32>
      %624 = vector.broadcast %64 : vector<1x128xf32> to vector<8x128xf32>
      %625 = arith.mulf %623, %624 : vector<8x128xf32>
      %c32_318 = arith.constant 32 : index
      %c0_319 = arith.constant 0 : index
      %626 = vector.load %arg12[%c32_318, %c0_319] : memref<432x128xf32, #tpu.memory_space<vmem>>, vector<8x128xf32>
      tpu.vector_store %arg12[%c32_318, %c0_319], %625 {strides = array<i32>} : memref<432x128xf32, #tpu.memory_space<vmem>>, vector<8x128xf32>,
      %c15_i32_320 = arith.constant 15 : i32
      %627 = tpu.dynamic_rotate %606 by %c15_i32_320 dim 1 : vector<8x128xf32>, i32 -> vector<8x128xf32>
      %628 = vector.broadcast %64 : vector<1x128xf32> to vector<8x128xf32>
      %629 = arith.mulf %627, %628 : vector<8x128xf32>
      %c40_321 = arith.constant 40 : index
      %c0_322 = arith.constant 0 : index
      %630 = vector.load %arg12[%c40_321, %c0_322] : memref<432x128xf32, #tpu.memory_space<vmem>>, vector<8x128xf32>
      tpu.vector_store %arg12[%c40_321, %c0_322], %629 {strides = array<i32>} : memref<432x128xf32, #tpu.memory_space<vmem>>, vector<8x128xf32>,
      %c1_i32_323 = arith.constant 1 : i32
      %631 = tpu.dynamic_rotate %603 by %c1_i32_323 dim 1 : vector<8x128xf32>, i32 -> vector<8x128xf32>
      %632 = vector.broadcast %85 : vector<1x128xf32> to vector<8x128xf32>
      %633 = arith.mulf %631, %632 : vector<8x128xf32>
      %c48_324 = arith.constant 48 : index
      %c0_325 = arith.constant 0 : index
      %634 = vector.load %arg12[%c48_324, %c0_325] : memref<432x128xf32, #tpu.memory_space<vmem>>, vector<8x128xf32>
      tpu.vector_store %arg12[%c48_324, %c0_325], %633 {strides = array<i32>} : memref<432x128xf32, #tpu.memory_space<vmem>>, vector<8x128xf32>,
      %c1_i32_326 = arith.constant 1 : i32
      %635 = tpu.dynamic_rotate %606 by %c1_i32_326 dim 1 : vector<8x128xf32>, i32 -> vector<8x128xf32>
      %636 = vector.broadcast %85 : vector<1x128xf32> to vector<8x128xf32>
      %637 = arith.mulf %635, %636 : vector<8x128xf32>
      %c56_327 = arith.constant 56 : index
      %c0_328 = arith.constant 0 : index
      %638 = vector.load %arg12[%c56_327, %c0_328] : memref<432x128xf32, #tpu.memory_space<vmem>>, vector<8x128xf32>
      tpu.vector_store %arg12[%c56_327, %c0_328], %637 {strides = array<i32>} : memref<432x128xf32, #tpu.memory_space<vmem>>, vector<8x128xf32>,
      %639 = vector.broadcast %106 : vector<1x128xf32> to vector<8x128xf32>
      %640 = arith.mulf %603, %639 : vector<8x128xf32>
      %c64_329 = arith.constant 64 : index
      %c0_330 = arith.constant 0 : index
      %641 = vector.load %arg12[%c64_329, %c0_330] : memref<432x128xf32, #tpu.memory_space<vmem>>, vector<8x128xf32>
      tpu.vector_store %arg12[%c64_329, %c0_330], %640 {strides = array<i32>} : memref<432x128xf32, #tpu.memory_space<vmem>>, vector<8x128xf32>,
      %642 = vector.broadcast %106 : vector<1x128xf32> to vector<8x128xf32>
      %643 = arith.mulf %606, %642 : vector<8x128xf32>
      %c72_331 = arith.constant 72 : index
      %c0_332 = arith.constant 0 : index
      %644 = vector.load %arg12[%c72_331, %c0_332] : memref<432x128xf32, #tpu.memory_space<vmem>>, vector<8x128xf32>
      tpu.vector_store %arg12[%c72_331, %c0_332], %643 {strides = array<i32>} : memref<432x128xf32, #tpu.memory_space<vmem>>, vector<8x128xf32>,
      %c127_i32_333 = arith.constant 127 : i32
      %645 = tpu.dynamic_rotate %603 by %c127_i32_333 dim 1 : vector<8x128xf32>, i32 -> vector<8x128xf32>
      %646 = vector.broadcast %127 : vector<1x128xf32> to vector<8x128xf32>
      %647 = arith.mulf %645, %646 : vector<8x128xf32>
      %c80_334 = arith.constant 80 : index
      %c0_335 = arith.constant 0 : index
      %648 = vector.load %arg12[%c80_334, %c0_335] : memref<432x128xf32, #tpu.memory_space<vmem>>, vector<8x128xf32>
      tpu.vector_store %arg12[%c80_334, %c0_335], %647 {strides = array<i32>} : memref<432x128xf32, #tpu.memory_space<vmem>>, vector<8x128xf32>,
      %c127_i32_336 = arith.constant 127 : i32
      %649 = tpu.dynamic_rotate %606 by %c127_i32_336 dim 1 : vector<8x128xf32>, i32 -> vector<8x128xf32>
      %650 = vector.broadcast %127 : vector<1x128xf32> to vector<8x128xf32>
      %651 = arith.mulf %649, %650 : vector<8x128xf32>
      %c88_337 = arith.constant 88 : index
      %c0_338 = arith.constant 0 : index
      %652 = vector.load %arg12[%c88_337, %c0_338] : memref<432x128xf32, #tpu.memory_space<vmem>>, vector<8x128xf32>
      tpu.vector_store %arg12[%c88_337, %c0_338], %651 {strides = array<i32>} : memref<432x128xf32, #tpu.memory_space<vmem>>, vector<8x128xf32>,
      %c113_i32_339 = arith.constant 113 : i32
      %653 = tpu.dynamic_rotate %603 by %c113_i32_339 dim 1 : vector<8x128xf32>, i32 -> vector<8x128xf32>
      %654 = vector.broadcast %148 : vector<1x128xf32> to vector<8x128xf32>
      %655 = arith.mulf %653, %654 : vector<8x128xf32>
      %c96_340 = arith.constant 96 : index
      %c0_341 = arith.constant 0 : index
      %656 = vector.load %arg12[%c96_340, %c0_341] : memref<432x128xf32, #tpu.memory_space<vmem>>, vector<8x128xf32>
      tpu.vector_store %arg12[%c96_340, %c0_341], %655 {strides = array<i32>} : memref<432x128xf32, #tpu.memory_space<vmem>>, vector<8x128xf32>,
      %c113_i32_342 = arith.constant 113 : i32
      %657 = tpu.dynamic_rotate %606 by %c113_i32_342 dim 1 : vector<8x128xf32>, i32 -> vector<8x128xf32>
      %658 = vector.broadcast %148 : vector<1x128xf32> to vector<8x128xf32>
      %659 = arith.mulf %657, %658 : vector<8x128xf32>
      %c104_343 = arith.constant 104 : index
      %c0_344 = arith.constant 0 : index
      %660 = vector.load %arg12[%c104_343, %c0_344] : memref<432x128xf32, #tpu.memory_space<vmem>>, vector<8x128xf32>
      tpu.vector_store %arg12[%c104_343, %c0_344], %659 {strides = array<i32>} : memref<432x128xf32, #tpu.memory_space<vmem>>, vector<8x128xf32>,
      %c112_i32_345 = arith.constant 112 : i32
      %661 = tpu.dynamic_rotate %603 by %c112_i32_345 dim 1 : vector<8x128xf32>, i32 -> vector<8x128xf32>
      %662 = vector.broadcast %169 : vector<1x128xf32> to vector<8x128xf32>
      %663 = arith.mulf %661, %662 : vector<8x128xf32>
      %c112_346 = arith.constant 112 : index
      %c0_347 = arith.constant 0 : index
      %664 = vector.load %arg12[%c112_346, %c0_347] : memref<432x128xf32, #tpu.memory_space<vmem>>, vector<8x128xf32>
      tpu.vector_store %arg12[%c112_346, %c0_347], %663 {strides = array<i32>} : memref<432x128xf32, #tpu.memory_space<vmem>>, vector<8x128xf32>,
      %c112_i32_348 = arith.constant 112 : i32
      %665 = tpu.dynamic_rotate %606 by %c112_i32_348 dim 1 : vector<8x128xf32>, i32 -> vector<8x128xf32>
      %666 = vector.broadcast %169 : vector<1x128xf32> to vector<8x128xf32>
      %667 = arith.mulf %665, %666 : vector<8x128xf32>
      %c120_349 = arith.constant 120 : index
      %c0_350 = arith.constant 0 : index
      %668 = vector.load %arg12[%c120_349, %c0_350] : memref<432x128xf32, #tpu.memory_space<vmem>>, vector<8x128xf32>
      tpu.vector_store %arg12[%c120_349, %c0_350], %667 {strides = array<i32>} : memref<432x128xf32, #tpu.memory_space<vmem>>, vector<8x128xf32>,
      %c111_i32_351 = arith.constant 111 : i32
      %669 = tpu.dynamic_rotate %603 by %c111_i32_351 dim 1 : vector<8x128xf32>, i32 -> vector<8x128xf32>
      %670 = vector.broadcast %190 : vector<1x128xf32> to vector<8x128xf32>
      %671 = arith.mulf %669, %670 : vector<8x128xf32>
      %c128_352 = arith.constant 128 : index
      %c0_353 = arith.constant 0 : index
      %672 = vector.load %arg12[%c128_352, %c0_353] : memref<432x128xf32, #tpu.memory_space<vmem>>, vector<8x128xf32>
      tpu.vector_store %arg12[%c128_352, %c0_353], %671 {strides = array<i32>} : memref<432x128xf32, #tpu.memory_space<vmem>>, vector<8x128xf32>,
      %c111_i32_354 = arith.constant 111 : i32
      %673 = tpu.dynamic_rotate %606 by %c111_i32_354 dim 1 : vector<8x128xf32>, i32 -> vector<8x128xf32>
      %674 = vector.broadcast %190 : vector<1x128xf32> to vector<8x128xf32>
      %675 = arith.mulf %673, %674 : vector<8x128xf32>
      %c136_355 = arith.constant 136 : index
      %c0_356 = arith.constant 0 : index
      %676 = vector.load %arg12[%c136_355, %c0_356] : memref<432x128xf32, #tpu.memory_space<vmem>>, vector<8x128xf32>
      tpu.vector_store %arg12[%c136_355, %c0_356], %675 {strides = array<i32>} : memref<432x128xf32, #tpu.memory_space<vmem>>, vector<8x128xf32>,
      %c1_i32_357 = arith.constant 1 : i32
      %677 = vector.broadcast %c1_i32_357 : i32 to vector<1x128xi32>
      %678 = arith.cmpi sge, %1, %677 : vector<1x128xi32>
      %true_358 = arith.constant true
      %679 = vector.broadcast %true_358 : i1 to vector<1x128xi1>
      %680 = arith.andi %678, %679 : vector<1x128xi1>
      %681 = arith.extui %680 : vector<1x128xi1> to vector<1x128xi32>
      %682 = arith.sitofp %681 : vector<1x128xi32> to vector<1x128xf32>
      %683 = vector.broadcast %682 : vector<1x128xf32> to vector<8x128xf32>
      %684 = arith.mulf %192, %683 : vector<8x128xf32>
      %685 = vector.broadcast %682 : vector<1x128xf32> to vector<8x128xf32>
      %686 = arith.mulf %595, %685 : vector<8x128xf32>
      %c17_i32_359 = arith.constant 17 : i32
      %687 = tpu.dynamic_rotate %684 by %c17_i32_359 dim 1 : vector<8x128xf32>, i32 -> vector<8x128xf32>
      %688 = vector.broadcast %22 : vector<1x128xf32> to vector<8x128xf32>
      %689 = arith.mulf %687, %688 : vector<8x128xf32>
      %c144_360 = arith.constant 144 : index
      %c0_361 = arith.constant 0 : index
      %690 = vector.load %arg12[%c144_360, %c0_361] : memref<432x128xf32, #tpu.memory_space<vmem>>, vector<8x128xf32>
      tpu.vector_store %arg12[%c144_360, %c0_361], %689 {strides = array<i32>} : memref<432x128xf32, #tpu.memory_space<vmem>>, vector<8x128xf32>,
      %c17_i32_362 = arith.constant 17 : i32
      %691 = tpu.dynamic_rotate %686 by %c17_i32_362 dim 1 : vector<8x128xf32>, i32 -> vector<8x128xf32>
      %692 = vector.broadcast %22 : vector<1x128xf32> to vector<8x128xf32>
      %693 = arith.mulf %691, %692 : vector<8x128xf32>
      %c152_363 = arith.constant 152 : index
      %c0_364 = arith.constant 0 : index
      %694 = vector.load %arg12[%c152_363, %c0_364] : memref<432x128xf32, #tpu.memory_space<vmem>>, vector<8x128xf32>
      tpu.vector_store %arg12[%c152_363, %c0_364], %693 {strides = array<i32>} : memref<432x128xf32, #tpu.memory_space<vmem>>, vector<8x128xf32>,
      %c16_i32_365 = arith.constant 16 : i32
      %695 = tpu.dynamic_rotate %684 by %c16_i32_365 dim 1 : vector<8x128xf32>, i32 -> vector<8x128xf32>
      %696 = vector.broadcast %43 : vector<1x128xf32> to vector<8x128xf32>
      %697 = arith.mulf %695, %696 : vector<8x128xf32>
      %c160_366 = arith.constant 160 : index
      %c0_367 = arith.constant 0 : index
      %698 = vector.load %arg12[%c160_366, %c0_367] : memref<432x128xf32, #tpu.memory_space<vmem>>, vector<8x128xf32>
      tpu.vector_store %arg12[%c160_366, %c0_367], %697 {strides = array<i32>} : memref<432x128xf32, #tpu.memory_space<vmem>>, vector<8x128xf32>,
      %c16_i32_368 = arith.constant 16 : i32
      %699 = tpu.dynamic_rotate %686 by %c16_i32_368 dim 1 : vector<8x128xf32>, i32 -> vector<8x128xf32>
      %700 = vector.broadcast %43 : vector<1x128xf32> to vector<8x128xf32>
      %701 = arith.mulf %699, %700 : vector<8x128xf32>
      %c168_369 = arith.constant 168 : index
      %c0_370 = arith.constant 0 : index
      %702 = vector.load %arg12[%c168_369, %c0_370] : memref<432x128xf32, #tpu.memory_space<vmem>>, vector<8x128xf32>
      tpu.vector_store %arg12[%c168_369, %c0_370], %701 {strides = array<i32>} : memref<432x128xf32, #tpu.memory_space<vmem>>, vector<8x128xf32>,
      %c15_i32_371 = arith.constant 15 : i32
      %703 = tpu.dynamic_rotate %684 by %c15_i32_371 dim 1 : vector<8x128xf32>, i32 -> vector<8x128xf32>
      %704 = vector.broadcast %64 : vector<1x128xf32> to vector<8x128xf32>
      %705 = arith.mulf %703, %704 : vector<8x128xf32>
      %c176_372 = arith.constant 176 : index
      %c0_373 = arith.constant 0 : index
      %706 = vector.load %arg12[%c176_372, %c0_373] : memref<432x128xf32, #tpu.memory_space<vmem>>, vector<8x128xf32>
      tpu.vector_store %arg12[%c176_372, %c0_373], %705 {strides = array<i32>} : memref<432x128xf32, #tpu.memory_space<vmem>>, vector<8x128xf32>,
      %c15_i32_374 = arith.constant 15 : i32
      %707 = tpu.dynamic_rotate %686 by %c15_i32_374 dim 1 : vector<8x128xf32>, i32 -> vector<8x128xf32>
      %708 = vector.broadcast %64 : vector<1x128xf32> to vector<8x128xf32>
      %709 = arith.mulf %707, %708 : vector<8x128xf32>
      %c184_375 = arith.constant 184 : index
      %c0_376 = arith.constant 0 : index
      %710 = vector.load %arg12[%c184_375, %c0_376] : memref<432x128xf32, #tpu.memory_space<vmem>>, vector<8x128xf32>
      tpu.vector_store %arg12[%c184_375, %c0_376], %709 {strides = array<i32>} : memref<432x128xf32, #tpu.memory_space<vmem>>, vector<8x128xf32>,
      %c1_i32_377 = arith.constant 1 : i32
      %711 = tpu.dynamic_rotate %684 by %c1_i32_377 dim 1 : vector<8x128xf32>, i32 -> vector<8x128xf32>
      %712 = vector.broadcast %85 : vector<1x128xf32> to vector<8x128xf32>
      %713 = arith.mulf %711, %712 : vector<8x128xf32>
      %c192_378 = arith.constant 192 : index
      %c0_379 = arith.constant 0 : index
      %714 = vector.load %arg12[%c192_378, %c0_379] : memref<432x128xf32, #tpu.memory_space<vmem>>, vector<8x128xf32>
      tpu.vector_store %arg12[%c192_378, %c0_379], %713 {strides = array<i32>} : memref<432x128xf32, #tpu.memory_space<vmem>>, vector<8x128xf32>,
      %c1_i32_380 = arith.constant 1 : i32
      %715 = tpu.dynamic_rotate %686 by %c1_i32_380 dim 1 : vector<8x128xf32>, i32 -> vector<8x128xf32>
      %716 = vector.broadcast %85 : vector<1x128xf32> to vector<8x128xf32>
      %717 = arith.mulf %715, %716 : vector<8x128xf32>
      %c200_381 = arith.constant 200 : index
      %c0_382 = arith.constant 0 : index
      %718 = vector.load %arg12[%c200_381, %c0_382] : memref<432x128xf32, #tpu.memory_space<vmem>>, vector<8x128xf32>
      tpu.vector_store %arg12[%c200_381, %c0_382], %717 {strides = array<i32>} : memref<432x128xf32, #tpu.memory_space<vmem>>, vector<8x128xf32>,
      %719 = vector.broadcast %106 : vector<1x128xf32> to vector<8x128xf32>
      %720 = arith.mulf %684, %719 : vector<8x128xf32>
      %c208_383 = arith.constant 208 : index
      %c0_384 = arith.constant 0 : index
      %721 = vector.load %arg12[%c208_383, %c0_384] : memref<432x128xf32, #tpu.memory_space<vmem>>, vector<8x128xf32>
      tpu.vector_store %arg12[%c208_383, %c0_384], %720 {strides = array<i32>} : memref<432x128xf32, #tpu.memory_space<vmem>>, vector<8x128xf32>,
      %722 = vector.broadcast %106 : vector<1x128xf32> to vector<8x128xf32>
      %723 = arith.mulf %686, %722 : vector<8x128xf32>
      %c216_385 = arith.constant 216 : index
      %c0_386 = arith.constant 0 : index
      %724 = vector.load %arg12[%c216_385, %c0_386] : memref<432x128xf32, #tpu.memory_space<vmem>>, vector<8x128xf32>
      tpu.vector_store %arg12[%c216_385, %c0_386], %723 {strides = array<i32>} : memref<432x128xf32, #tpu.memory_space<vmem>>, vector<8x128xf32>,
      %c127_i32_387 = arith.constant 127 : i32
      %725 = tpu.dynamic_rotate %684 by %c127_i32_387 dim 1 : vector<8x128xf32>, i32 -> vector<8x128xf32>
      %726 = vector.broadcast %127 : vector<1x128xf32> to vector<8x128xf32>
      %727 = arith.mulf %725, %726 : vector<8x128xf32>
      %c224_388 = arith.constant 224 : index
      %c0_389 = arith.constant 0 : index
      %728 = vector.load %arg12[%c224_388, %c0_389] : memref<432x128xf32, #tpu.memory_space<vmem>>, vector<8x128xf32>
      tpu.vector_store %arg12[%c224_388, %c0_389], %727 {strides = array<i32>} : memref<432x128xf32, #tpu.memory_space<vmem>>, vector<8x128xf32>,
      %c127_i32_390 = arith.constant 127 : i32
      %729 = tpu.dynamic_rotate %686 by %c127_i32_390 dim 1 : vector<8x128xf32>, i32 -> vector<8x128xf32>
      %730 = vector.broadcast %127 : vector<1x128xf32> to vector<8x128xf32>
      %731 = arith.mulf %729, %730 : vector<8x128xf32>
      %c232_391 = arith.constant 232 : index
      %c0_392 = arith.constant 0 : index
      %732 = vector.load %arg12[%c232_391, %c0_392] : memref<432x128xf32, #tpu.memory_space<vmem>>, vector<8x128xf32>
      tpu.vector_store %arg12[%c232_391, %c0_392], %731 {strides = array<i32>} : memref<432x128xf32, #tpu.memory_space<vmem>>, vector<8x128xf32>,
      %c113_i32_393 = arith.constant 113 : i32
      %733 = tpu.dynamic_rotate %684 by %c113_i32_393 dim 1 : vector<8x128xf32>, i32 -> vector<8x128xf32>
      %734 = vector.broadcast %148 : vector<1x128xf32> to vector<8x128xf32>
      %735 = arith.mulf %733, %734 : vector<8x128xf32>
      %c240_394 = arith.constant 240 : index
      %c0_395 = arith.constant 0 : index
      %736 = vector.load %arg12[%c240_394, %c0_395] : memref<432x128xf32, #tpu.memory_space<vmem>>, vector<8x128xf32>
      tpu.vector_store %arg12[%c240_394, %c0_395], %735 {strides = array<i32>} : memref<432x128xf32, #tpu.memory_space<vmem>>, vector<8x128xf32>,
      %c113_i32_396 = arith.constant 113 : i32
      %737 = tpu.dynamic_rotate %686 by %c113_i32_396 dim 1 : vector<8x128xf32>, i32 -> vector<8x128xf32>
      %738 = vector.broadcast %148 : vector<1x128xf32> to vector<8x128xf32>
      %739 = arith.mulf %737, %738 : vector<8x128xf32>
      %c248_397 = arith.constant 248 : index
      %c0_398 = arith.constant 0 : index
      %740 = vector.load %arg12[%c248_397, %c0_398] : memref<432x128xf32, #tpu.memory_space<vmem>>, vector<8x128xf32>
      tpu.vector_store %arg12[%c248_397, %c0_398], %739 {strides = array<i32>} : memref<432x128xf32, #tpu.memory_space<vmem>>, vector<8x128xf32>,
      %c112_i32_399 = arith.constant 112 : i32
      %741 = tpu.dynamic_rotate %684 by %c112_i32_399 dim 1 : vector<8x128xf32>, i32 -> vector<8x128xf32>
      %742 = vector.broadcast %169 : vector<1x128xf32> to vector<8x128xf32>
      %743 = arith.mulf %741, %742 : vector<8x128xf32>
      %c256_400 = arith.constant 256 : index
      %c0_401 = arith.constant 0 : index
      %744 = vector.load %arg12[%c256_400, %c0_401] : memref<432x128xf32, #tpu.memory_space<vmem>>, vector<8x128xf32>
      tpu.vector_store %arg12[%c256_400, %c0_401], %743 {strides = array<i32>} : memref<432x128xf32, #tpu.memory_space<vmem>>, vector<8x128xf32>,
      %c112_i32_402 = arith.constant 112 : i32
      %745 = tpu.dynamic_rotate %686 by %c112_i32_402 dim 1 : vector<8x128xf32>, i32 -> vector<8x128xf32>
      %746 = vector.broadcast %169 : vector<1x128xf32> to vector<8x128xf32>
      %747 = arith.mulf %745, %746 : vector<8x128xf32>
      %c264_403 = arith.constant 264 : index
      %c0_404 = arith.constant 0 : index
      %748 = vector.load %arg12[%c264_403, %c0_404] : memref<432x128xf32, #tpu.memory_space<vmem>>, vector<8x128xf32>
      tpu.vector_store %arg12[%c264_403, %c0_404], %747 {strides = array<i32>} : memref<432x128xf32, #tpu.memory_space<vmem>>, vector<8x128xf32>,
      %c111_i32_405 = arith.constant 111 : i32
      %749 = tpu.dynamic_rotate %684 by %c111_i32_405 dim 1 : vector<8x128xf32>, i32 -> vector<8x128xf32>
      %750 = vector.broadcast %190 : vector<1x128xf32> to vector<8x128xf32>
      %751 = arith.mulf %749, %750 : vector<8x128xf32>
      %c272_406 = arith.constant 272 : index
      %c0_407 = arith.constant 0 : index
      %752 = vector.load %arg12[%c272_406, %c0_407] : memref<432x128xf32, #tpu.memory_space<vmem>>, vector<8x128xf32>
      tpu.vector_store %arg12[%c272_406, %c0_407], %751 {strides = array<i32>} : memref<432x128xf32, #tpu.memory_space<vmem>>, vector<8x128xf32>,
      %c111_i32_408 = arith.constant 111 : i32
      %753 = tpu.dynamic_rotate %686 by %c111_i32_408 dim 1 : vector<8x128xf32>, i32 -> vector<8x128xf32>
      %754 = vector.broadcast %190 : vector<1x128xf32> to vector<8x128xf32>
      %755 = arith.mulf %753, %754 : vector<8x128xf32>
      %c280_409 = arith.constant 280 : index
      %c0_410 = arith.constant 0 : index
      %756 = vector.load %arg12[%c280_409, %c0_410] : memref<432x128xf32, #tpu.memory_space<vmem>>, vector<8x128xf32>
      tpu.vector_store %arg12[%c280_409, %c0_410], %755 {strides = array<i32>} : memref<432x128xf32, #tpu.memory_space<vmem>>, vector<8x128xf32>,
      %c2_i32_411 = arith.constant 2 : i32
      %757 = vector.broadcast %c2_i32_411 : i32 to vector<1x128xi32>
      %758 = arith.cmpi sge, %1, %757 : vector<1x128xi32>
      %true_412 = arith.constant true
      %759 = vector.broadcast %true_412 : i1 to vector<1x128xi1>
      %760 = arith.andi %758, %759 : vector<1x128xi1>
      %761 = arith.extui %760 : vector<1x128xi1> to vector<1x128xi32>
      %762 = arith.sitofp %761 : vector<1x128xi32> to vector<1x128xf32>
      %763 = vector.broadcast %762 : vector<1x128xf32> to vector<8x128xf32>
      %764 = arith.mulf %192, %763 : vector<8x128xf32>
      %c1_i32_413 = arith.constant 1 : i32
      %765 = tpu.dynamic_rotate %595 by %c1_i32_413 dim 1 : vector<8x128xf32>, i32 -> vector<8x128xf32>
      %766 = vector.broadcast %762 : vector<1x128xf32> to vector<8x128xf32>
      %767 = arith.mulf %765, %766 : vector<8x128xf32>
      %c17_i32_414 = arith.constant 17 : i32
      %768 = tpu.dynamic_rotate %764 by %c17_i32_414 dim 1 : vector<8x128xf32>, i32 -> vector<8x128xf32>
      %769 = vector.broadcast %22 : vector<1x128xf32> to vector<8x128xf32>
      %770 = arith.mulf %768, %769 : vector<8x128xf32>
      %c288_415 = arith.constant 288 : index
      %c0_416 = arith.constant 0 : index
      %771 = vector.load %arg12[%c288_415, %c0_416] : memref<432x128xf32, #tpu.memory_space<vmem>>, vector<8x128xf32>
      tpu.vector_store %arg12[%c288_415, %c0_416], %770 {strides = array<i32>} : memref<432x128xf32, #tpu.memory_space<vmem>>, vector<8x128xf32>,
      %c17_i32_417 = arith.constant 17 : i32
      %772 = tpu.dynamic_rotate %767 by %c17_i32_417 dim 1 : vector<8x128xf32>, i32 -> vector<8x128xf32>
      %773 = vector.broadcast %22 : vector<1x128xf32> to vector<8x128xf32>
      %774 = arith.mulf %772, %773 : vector<8x128xf32>
      %c296_418 = arith.constant 296 : index
      %c0_419 = arith.constant 0 : index
      %775 = vector.load %arg12[%c296_418, %c0_419] : memref<432x128xf32, #tpu.memory_space<vmem>>, vector<8x128xf32>
      tpu.vector_store %arg12[%c296_418, %c0_419], %774 {strides = array<i32>} : memref<432x128xf32, #tpu.memory_space<vmem>>, vector<8x128xf32>,
      %c16_i32_420 = arith.constant 16 : i32
      %776 = tpu.dynamic_rotate %764 by %c16_i32_420 dim 1 : vector<8x128xf32>, i32 -> vector<8x128xf32>
      %777 = vector.broadcast %43 : vector<1x128xf32> to vector<8x128xf32>
      %778 = arith.mulf %776, %777 : vector<8x128xf32>
      %c304_421 = arith.constant 304 : index
      %c0_422 = arith.constant 0 : index
      %779 = vector.load %arg12[%c304_421, %c0_422] : memref<432x128xf32, #tpu.memory_space<vmem>>, vector<8x128xf32>
      tpu.vector_store %arg12[%c304_421, %c0_422], %778 {strides = array<i32>} : memref<432x128xf32, #tpu.memory_space<vmem>>, vector<8x128xf32>,
      %c16_i32_423 = arith.constant 16 : i32
      %780 = tpu.dynamic_rotate %767 by %c16_i32_423 dim 1 : vector<8x128xf32>, i32 -> vector<8x128xf32>
      %781 = vector.broadcast %43 : vector<1x128xf32> to vector<8x128xf32>
      %782 = arith.mulf %780, %781 : vector<8x128xf32>
      %c312_424 = arith.constant 312 : index
      %c0_425 = arith.constant 0 : index
      %783 = vector.load %arg12[%c312_424, %c0_425] : memref<432x128xf32, #tpu.memory_space<vmem>>, vector<8x128xf32>
      tpu.vector_store %arg12[%c312_424, %c0_425], %782 {strides = array<i32>} : memref<432x128xf32, #tpu.memory_space<vmem>>, vector<8x128xf32>,
      %c15_i32_426 = arith.constant 15 : i32
      %784 = tpu.dynamic_rotate %764 by %c15_i32_426 dim 1 : vector<8x128xf32>, i32 -> vector<8x128xf32>
      %785 = vector.broadcast %64 : vector<1x128xf32> to vector<8x128xf32>
      %786 = arith.mulf %784, %785 : vector<8x128xf32>
      %c320_427 = arith.constant 320 : index
      %c0_428 = arith.constant 0 : index
      %787 = vector.load %arg12[%c320_427, %c0_428] : memref<432x128xf32, #tpu.memory_space<vmem>>, vector<8x128xf32>
      tpu.vector_store %arg12[%c320_427, %c0_428], %786 {strides = array<i32>} : memref<432x128xf32, #tpu.memory_space<vmem>>, vector<8x128xf32>,
      %c15_i32_429 = arith.constant 15 : i32
      %788 = tpu.dynamic_rotate %767 by %c15_i32_429 dim 1 : vector<8x128xf32>, i32 -> vector<8x128xf32>
      %789 = vector.broadcast %64 : vector<1x128xf32> to vector<8x128xf32>
      %790 = arith.mulf %788, %789 : vector<8x128xf32>
      %c328_430 = arith.constant 328 : index
      %c0_431 = arith.constant 0 : index
      %791 = vector.load %arg12[%c328_430, %c0_431] : memref<432x128xf32, #tpu.memory_space<vmem>>, vector<8x128xf32>
      tpu.vector_store %arg12[%c328_430, %c0_431], %790 {strides = array<i32>} : memref<432x128xf32, #tpu.memory_space<vmem>>, vector<8x128xf32>,
      %c1_i32_432 = arith.constant 1 : i32
      %792 = tpu.dynamic_rotate %764 by %c1_i32_432 dim 1 : vector<8x128xf32>, i32 -> vector<8x128xf32>
      %793 = vector.broadcast %85 : vector<1x128xf32> to vector<8x128xf32>
      %794 = arith.mulf %792, %793 : vector<8x128xf32>
      %c336_433 = arith.constant 336 : index
      %c0_434 = arith.constant 0 : index
      %795 = vector.load %arg12[%c336_433, %c0_434] : memref<432x128xf32, #tpu.memory_space<vmem>>, vector<8x128xf32>
      tpu.vector_store %arg12[%c336_433, %c0_434], %794 {strides = array<i32>} : memref<432x128xf32, #tpu.memory_space<vmem>>, vector<8x128xf32>,
      %c1_i32_435 = arith.constant 1 : i32
      %796 = tpu.dynamic_rotate %767 by %c1_i32_435 dim 1 : vector<8x128xf32>, i32 -> vector<8x128xf32>
      %797 = vector.broadcast %85 : vector<1x128xf32> to vector<8x128xf32>
      %798 = arith.mulf %796, %797 : vector<8x128xf32>
      %c344_436 = arith.constant 344 : index
      %c0_437 = arith.constant 0 : index
      %799 = vector.load %arg12[%c344_436, %c0_437] : memref<432x128xf32, #tpu.memory_space<vmem>>, vector<8x128xf32>
      tpu.vector_store %arg12[%c344_436, %c0_437], %798 {strides = array<i32>} : memref<432x128xf32, #tpu.memory_space<vmem>>, vector<8x128xf32>,
      %800 = vector.broadcast %106 : vector<1x128xf32> to vector<8x128xf32>
      %801 = arith.mulf %764, %800 : vector<8x128xf32>
      %c352_438 = arith.constant 352 : index
      %c0_439 = arith.constant 0 : index
      %802 = vector.load %arg12[%c352_438, %c0_439] : memref<432x128xf32, #tpu.memory_space<vmem>>, vector<8x128xf32>
      tpu.vector_store %arg12[%c352_438, %c0_439], %801 {strides = array<i32>} : memref<432x128xf32, #tpu.memory_space<vmem>>, vector<8x128xf32>,
      %803 = vector.broadcast %106 : vector<1x128xf32> to vector<8x128xf32>
      %804 = arith.mulf %767, %803 : vector<8x128xf32>
      %c360_440 = arith.constant 360 : index
      %c0_441 = arith.constant 0 : index
      %805 = vector.load %arg12[%c360_440, %c0_441] : memref<432x128xf32, #tpu.memory_space<vmem>>, vector<8x128xf32>
      tpu.vector_store %arg12[%c360_440, %c0_441], %804 {strides = array<i32>} : memref<432x128xf32, #tpu.memory_space<vmem>>, vector<8x128xf32>,
      %c127_i32_442 = arith.constant 127 : i32
      %806 = tpu.dynamic_rotate %764 by %c127_i32_442 dim 1 : vector<8x128xf32>, i32 -> vector<8x128xf32>
      %807 = vector.broadcast %127 : vector<1x128xf32> to vector<8x128xf32>
      %808 = arith.mulf %806, %807 : vector<8x128xf32>
      %c368_443 = arith.constant 368 : index
      %c0_444 = arith.constant 0 : index
      %809 = vector.load %arg12[%c368_443, %c0_444] : memref<432x128xf32, #tpu.memory_space<vmem>>, vector<8x128xf32>
      tpu.vector_store %arg12[%c368_443, %c0_444], %808 {strides = array<i32>} : memref<432x128xf32, #tpu.memory_space<vmem>>, vector<8x128xf32>,
      %c127_i32_445 = arith.constant 127 : i32
      %810 = tpu.dynamic_rotate %767 by %c127_i32_445 dim 1 : vector<8x128xf32>, i32 -> vector<8x128xf32>
      %811 = vector.broadcast %127 : vector<1x128xf32> to vector<8x128xf32>
      %812 = arith.mulf %810, %811 : vector<8x128xf32>
      %c376_446 = arith.constant 376 : index
      %c0_447 = arith.constant 0 : index
      %813 = vector.load %arg12[%c376_446, %c0_447] : memref<432x128xf32, #tpu.memory_space<vmem>>, vector<8x128xf32>
      tpu.vector_store %arg12[%c376_446, %c0_447], %812 {strides = array<i32>} : memref<432x128xf32, #tpu.memory_space<vmem>>, vector<8x128xf32>,
      %c113_i32_448 = arith.constant 113 : i32
      %814 = tpu.dynamic_rotate %764 by %c113_i32_448 dim 1 : vector<8x128xf32>, i32 -> vector<8x128xf32>
      %815 = vector.broadcast %148 : vector<1x128xf32> to vector<8x128xf32>
      %816 = arith.mulf %814, %815 : vector<8x128xf32>
      %c384_449 = arith.constant 384 : index
      %c0_450 = arith.constant 0 : index
      %817 = vector.load %arg12[%c384_449, %c0_450] : memref<432x128xf32, #tpu.memory_space<vmem>>, vector<8x128xf32>
      tpu.vector_store %arg12[%c384_449, %c0_450], %816 {strides = array<i32>} : memref<432x128xf32, #tpu.memory_space<vmem>>, vector<8x128xf32>,
      %c113_i32_451 = arith.constant 113 : i32
      %818 = tpu.dynamic_rotate %767 by %c113_i32_451 dim 1 : vector<8x128xf32>, i32 -> vector<8x128xf32>
      %819 = vector.broadcast %148 : vector<1x128xf32> to vector<8x128xf32>
      %820 = arith.mulf %818, %819 : vector<8x128xf32>
      %c392_452 = arith.constant 392 : index
      %c0_453 = arith.constant 0 : index
      %821 = vector.load %arg12[%c392_452, %c0_453] : memref<432x128xf32, #tpu.memory_space<vmem>>, vector<8x128xf32>
      tpu.vector_store %arg12[%c392_452, %c0_453], %820 {strides = array<i32>} : memref<432x128xf32, #tpu.memory_space<vmem>>, vector<8x128xf32>,
      %c112_i32_454 = arith.constant 112 : i32
      %822 = tpu.dynamic_rotate %764 by %c112_i32_454 dim 1 : vector<8x128xf32>, i32 -> vector<8x128xf32>
      %823 = vector.broadcast %169 : vector<1x128xf32> to vector<8x128xf32>
      %824 = arith.mulf %822, %823 : vector<8x128xf32>
      %c400_455 = arith.constant 400 : index
      %c0_456 = arith.constant 0 : index
      %825 = vector.load %arg12[%c400_455, %c0_456] : memref<432x128xf32, #tpu.memory_space<vmem>>, vector<8x128xf32>
      tpu.vector_store %arg12[%c400_455, %c0_456], %824 {strides = array<i32>} : memref<432x128xf32, #tpu.memory_space<vmem>>, vector<8x128xf32>,
      %c112_i32_457 = arith.constant 112 : i32
      %826 = tpu.dynamic_rotate %767 by %c112_i32_457 dim 1 : vector<8x128xf32>, i32 -> vector<8x128xf32>
      %827 = vector.broadcast %169 : vector<1x128xf32> to vector<8x128xf32>
      %828 = arith.mulf %826, %827 : vector<8x128xf32>
      %c408_458 = arith.constant 408 : index
      %c0_459 = arith.constant 0 : index
      %829 = vector.load %arg12[%c408_458, %c0_459] : memref<432x128xf32, #tpu.memory_space<vmem>>, vector<8x128xf32>
      tpu.vector_store %arg12[%c408_458, %c0_459], %828 {strides = array<i32>} : memref<432x128xf32, #tpu.memory_space<vmem>>, vector<8x128xf32>,
      %c111_i32_460 = arith.constant 111 : i32
      %830 = tpu.dynamic_rotate %764 by %c111_i32_460 dim 1 : vector<8x128xf32>, i32 -> vector<8x128xf32>
      %831 = vector.broadcast %190 : vector<1x128xf32> to vector<8x128xf32>
      %832 = arith.mulf %830, %831 : vector<8x128xf32>
      %c416_461 = arith.constant 416 : index
      %c0_462 = arith.constant 0 : index
      %833 = vector.load %arg12[%c416_461, %c0_462] : memref<432x128xf32, #tpu.memory_space<vmem>>, vector<8x128xf32>
      tpu.vector_store %arg12[%c416_461, %c0_462], %832 {strides = array<i32>} : memref<432x128xf32, #tpu.memory_space<vmem>>, vector<8x128xf32>,
      %c111_i32_463 = arith.constant 111 : i32
      %834 = tpu.dynamic_rotate %767 by %c111_i32_463 dim 1 : vector<8x128xf32>, i32 -> vector<8x128xf32>
      %835 = vector.broadcast %190 : vector<1x128xf32> to vector<8x128xf32>
      %836 = arith.mulf %834, %835 : vector<8x128xf32>
      %c424_464 = arith.constant 424 : index
      %c0_465 = arith.constant 0 : index
      %837 = vector.load %arg12[%c424_464, %c0_465] : memref<432x128xf32, #tpu.memory_space<vmem>>, vector<8x128xf32>
      tpu.vector_store %arg12[%c424_464, %c0_465], %836 {strides = array<i32>} : memref<432x128xf32, #tpu.memory_space<vmem>>, vector<8x128xf32>,
      %c0_466 = arith.constant 0 : index
      %c0_467 = arith.constant 0 : index
      %838 = vector.load %arg6[%c0_466, %c0_467] : memref<8x432xf32, #tpu.memory_space<vmem>>, vector<8x432xf32>
      %c0_468 = arith.constant 0 : index
      %c0_469 = arith.constant 0 : index
      %839 = vector.load %arg12[%c0_468, %c0_469] : memref<432x128xf32, #tpu.memory_space<vmem>>, vector<432x128xf32>
      %cst_470 = arith.constant dense<0.000000e+00> : vector<8x128xf32>
      %840 = tpu.matmul %838, %839, %cst_470 {dimension_numbers = #tpu.dot_dimension_numbers<[1], [0], [0], [1], [0, 0, 1, 1], [], []>} : vector<8x432xf32>, vector<432x128xf32>, vector<8x128xf32> -> vector<8x128xf32>
      %c0_471 = arith.constant 0 : index
      %c0_472 = arith.constant 0 : index
      %841 = vector.load %arg7[%c0_471, %c0_472] : memref<8x1xf32, #tpu.memory_space<vmem>>, vector<8x1xf32>
      %842 = vector.broadcast %841 : vector<8x1xf32> to vector<8x128xf32>
      %843 = arith.addf %840, %842 : vector<8x128xf32>
      %cst_473 = arith.constant 0.000000e+00 : f32
      %844 = vector.broadcast %cst_473 : f32 to vector<8x128xf32>
      %845 = arith.maximumf %843, %844 : vector<8x128xf32>
      %c1 = arith.constant 1 : index
      %c0_474 = arith.constant 0 : index
      %c0_475 = arith.constant 0 : index
      %846 = vector.load %arg11[%c1, %c0_474, %c0_475] : memref<3x8x128xf32, #tpu.memory_space<vmem>>, vector<1x8x128xf32>
      %847 = vector.shape_cast %846 : vector<1x8x128xf32> to vector<8x128xf32>
      %848 = vector.shape_cast %845 : vector<8x128xf32> to vector<1x8x128xf32>
      tpu.vector_store %arg11[%c1, %c0_474, %c0_475], %848 {strides = array<i32>} : memref<3x8x128xf32, #tpu.memory_space<vmem>>, vector<1x8x128xf32>,
    } else {
    }
    %c0_i32_78 = arith.constant 0 : i32
    %199 = arith.cmpi sgt, %arg1, %c0_i32_78 : i32
    %200 = arith.extui %199 : i1 to i32
    %c0_i32_79 = arith.constant 0 : i32
    %201 = arith.cmpi ne, %200, %c0_i32_79 : i32
    scf.if %201 {
      %c1_i32_153 = arith.constant 1 : i32
      %339 = arith.addi %arg1, %c1_i32_153 : i32
      %c3_i32_154 = arith.constant 3 : i32
      %340 = arith.minsi %339, %c3_i32_154 : i32
      %c3_i32_155 = arith.constant 3 : i32
      %341 = arith.cmpi sle, %339, %c3_i32_155 : i32
      %342 = arith.extui %341 : i1 to i32
      %343 = arith.sitofp %342 : i32 to f32
      %344 = tpu.dynamic_rotate %194 by %340 dim 1 : vector<8x128xf32>, i32 -> vector<8x128xf32>
      %c0_i32_156 = arith.constant 0 : i32
      %345 = arith.addi %340, %c0_i32_156 : i32
      %c1_i32_157 = arith.constant 1 : i32
      %346 = arith.subi %345, %c1_i32_157 : i32
      %c0_i32_158 = arith.constant 0 : i32
      %347 = arith.cmpi sge, %346, %c0_i32_158 : i32
      %c3_i32_159 = arith.constant 3 : i32
      %348 = arith.cmpi sle, %346, %c3_i32_159 : i32
      %349 = arith.andi %347, %348 : i1
      %350 = vector.broadcast %346 : i32 to vector<1x128xi32>
      %351 = arith.cmpi sge, %1, %350 : vector<1x128xi32>
      %352 = vector.broadcast %349 : i1 to vector<1x128xi1>
      %353 = arith.andi %351, %352 : vector<1x128xi1>
      %354 = arith.extui %353 : vector<1x128xi1> to vector<1x128xi32>
      %355 = arith.sitofp %354 : vector<1x128xi32> to vector<1x128xf32>
      %356 = vector.broadcast %355 : vector<1x128xf32> to vector<8x128xf32>
      %357 = arith.mulf %192, %356 : vector<8x128xf32>
      %c127_i32_160 = arith.constant 127 : i32
      %358 = tpu.dynamic_rotate %344 by %c127_i32_160 dim 1 : vector<8x128xf32>, i32 -> vector<8x128xf32>
      %359 = vector.broadcast %355 : vector<1x128xf32> to vector<8x128xf32>
      %360 = arith.mulf %358, %359 : vector<8x128xf32>
      %c17_i32_161 = arith.constant 17 : i32
      %361 = tpu.dynamic_rotate %357 by %c17_i32_161 dim 1 : vector<8x128xf32>, i32 -> vector<8x128xf32>
      %362 = vector.broadcast %22 : vector<1x128xf32> to vector<8x128xf32>
      %363 = arith.mulf %361, %362 : vector<8x128xf32>
      %c0_162 = arith.constant 0 : index
      %c0_163 = arith.constant 0 : index
      %364 = vector.load %arg12[%c0_162, %c0_163] : memref<432x128xf32, #tpu.memory_space<vmem>>, vector<8x128xf32>
      tpu.vector_store %arg12[%c0_162, %c0_163], %363 {strides = array<i32>} : memref<432x128xf32, #tpu.memory_space<vmem>>, vector<8x128xf32>,
      %c17_i32_164 = arith.constant 17 : i32
      %365 = tpu.dynamic_rotate %360 by %c17_i32_164 dim 1 : vector<8x128xf32>, i32 -> vector<8x128xf32>
      %366 = vector.broadcast %22 : vector<1x128xf32> to vector<8x128xf32>
      %367 = arith.mulf %365, %366 : vector<8x128xf32>
      %c8_165 = arith.constant 8 : index
      %c0_166 = arith.constant 0 : index
      %368 = vector.load %arg12[%c8_165, %c0_166] : memref<432x128xf32, #tpu.memory_space<vmem>>, vector<8x128xf32>
      tpu.vector_store %arg12[%c8_165, %c0_166], %367 {strides = array<i32>} : memref<432x128xf32, #tpu.memory_space<vmem>>, vector<8x128xf32>,
      %c16_i32_167 = arith.constant 16 : i32
      %369 = tpu.dynamic_rotate %357 by %c16_i32_167 dim 1 : vector<8x128xf32>, i32 -> vector<8x128xf32>
      %370 = vector.broadcast %43 : vector<1x128xf32> to vector<8x128xf32>
      %371 = arith.mulf %369, %370 : vector<8x128xf32>
      %c16_168 = arith.constant 16 : index
      %c0_169 = arith.constant 0 : index
      %372 = vector.load %arg12[%c16_168, %c0_169] : memref<432x128xf32, #tpu.memory_space<vmem>>, vector<8x128xf32>
      tpu.vector_store %arg12[%c16_168, %c0_169], %371 {strides = array<i32>} : memref<432x128xf32, #tpu.memory_space<vmem>>, vector<8x128xf32>,
      %c16_i32_170 = arith.constant 16 : i32
      %373 = tpu.dynamic_rotate %360 by %c16_i32_170 dim 1 : vector<8x128xf32>, i32 -> vector<8x128xf32>
      %374 = vector.broadcast %43 : vector<1x128xf32> to vector<8x128xf32>
      %375 = arith.mulf %373, %374 : vector<8x128xf32>
      %c24_171 = arith.constant 24 : index
      %c0_172 = arith.constant 0 : index
      %376 = vector.load %arg12[%c24_171, %c0_172] : memref<432x128xf32, #tpu.memory_space<vmem>>, vector<8x128xf32>
      tpu.vector_store %arg12[%c24_171, %c0_172], %375 {strides = array<i32>} : memref<432x128xf32, #tpu.memory_space<vmem>>, vector<8x128xf32>,
      %c15_i32_173 = arith.constant 15 : i32
      %377 = tpu.dynamic_rotate %357 by %c15_i32_173 dim 1 : vector<8x128xf32>, i32 -> vector<8x128xf32>
      %378 = vector.broadcast %64 : vector<1x128xf32> to vector<8x128xf32>
      %379 = arith.mulf %377, %378 : vector<8x128xf32>
      %c32_174 = arith.constant 32 : index
      %c0_175 = arith.constant 0 : index
      %380 = vector.load %arg12[%c32_174, %c0_175] : memref<432x128xf32, #tpu.memory_space<vmem>>, vector<8x128xf32>
      tpu.vector_store %arg12[%c32_174, %c0_175], %379 {strides = array<i32>} : memref<432x128xf32, #tpu.memory_space<vmem>>, vector<8x128xf32>,
      %c15_i32_176 = arith.constant 15 : i32
      %381 = tpu.dynamic_rotate %360 by %c15_i32_176 dim 1 : vector<8x128xf32>, i32 -> vector<8x128xf32>
      %382 = vector.broadcast %64 : vector<1x128xf32> to vector<8x128xf32>
      %383 = arith.mulf %381, %382 : vector<8x128xf32>
      %c40_177 = arith.constant 40 : index
      %c0_178 = arith.constant 0 : index
      %384 = vector.load %arg12[%c40_177, %c0_178] : memref<432x128xf32, #tpu.memory_space<vmem>>, vector<8x128xf32>
      tpu.vector_store %arg12[%c40_177, %c0_178], %383 {strides = array<i32>} : memref<432x128xf32, #tpu.memory_space<vmem>>, vector<8x128xf32>,
      %c1_i32_179 = arith.constant 1 : i32
      %385 = tpu.dynamic_rotate %357 by %c1_i32_179 dim 1 : vector<8x128xf32>, i32 -> vector<8x128xf32>
      %386 = vector.broadcast %85 : vector<1x128xf32> to vector<8x128xf32>
      %387 = arith.mulf %385, %386 : vector<8x128xf32>
      %c48_180 = arith.constant 48 : index
      %c0_181 = arith.constant 0 : index
      %388 = vector.load %arg12[%c48_180, %c0_181] : memref<432x128xf32, #tpu.memory_space<vmem>>, vector<8x128xf32>
      tpu.vector_store %arg12[%c48_180, %c0_181], %387 {strides = array<i32>} : memref<432x128xf32, #tpu.memory_space<vmem>>, vector<8x128xf32>,
      %c1_i32_182 = arith.constant 1 : i32
      %389 = tpu.dynamic_rotate %360 by %c1_i32_182 dim 1 : vector<8x128xf32>, i32 -> vector<8x128xf32>
      %390 = vector.broadcast %85 : vector<1x128xf32> to vector<8x128xf32>
      %391 = arith.mulf %389, %390 : vector<8x128xf32>
      %c56_183 = arith.constant 56 : index
      %c0_184 = arith.constant 0 : index
      %392 = vector.load %arg12[%c56_183, %c0_184] : memref<432x128xf32, #tpu.memory_space<vmem>>, vector<8x128xf32>
      tpu.vector_store %arg12[%c56_183, %c0_184], %391 {strides = array<i32>} : memref<432x128xf32, #tpu.memory_space<vmem>>, vector<8x128xf32>,
      %393 = vector.broadcast %106 : vector<1x128xf32> to vector<8x128xf32>
      %394 = arith.mulf %357, %393 : vector<8x128xf32>
      %c64_185 = arith.constant 64 : index
      %c0_186 = arith.constant 0 : index
      %395 = vector.load %arg12[%c64_185, %c0_186] : memref<432x128xf32, #tpu.memory_space<vmem>>, vector<8x128xf32>
      tpu.vector_store %arg12[%c64_185, %c0_186], %394 {strides = array<i32>} : memref<432x128xf32, #tpu.memory_space<vmem>>, vector<8x128xf32>,
      %396 = vector.broadcast %106 : vector<1x128xf32> to vector<8x128xf32>
      %397 = arith.mulf %360, %396 : vector<8x128xf32>
      %c72_187 = arith.constant 72 : index
      %c0_188 = arith.constant 0 : index
      %398 = vector.load %arg12[%c72_187, %c0_188] : memref<432x128xf32, #tpu.memory_space<vmem>>, vector<8x128xf32>
      tpu.vector_store %arg12[%c72_187, %c0_188], %397 {strides = array<i32>} : memref<432x128xf32, #tpu.memory_space<vmem>>, vector<8x128xf32>,
      %c127_i32_189 = arith.constant 127 : i32
      %399 = tpu.dynamic_rotate %357 by %c127_i32_189 dim 1 : vector<8x128xf32>, i32 -> vector<8x128xf32>
      %400 = vector.broadcast %127 : vector<1x128xf32> to vector<8x128xf32>
      %401 = arith.mulf %399, %400 : vector<8x128xf32>
      %c80_190 = arith.constant 80 : index
      %c0_191 = arith.constant 0 : index
      %402 = vector.load %arg12[%c80_190, %c0_191] : memref<432x128xf32, #tpu.memory_space<vmem>>, vector<8x128xf32>
      tpu.vector_store %arg12[%c80_190, %c0_191], %401 {strides = array<i32>} : memref<432x128xf32, #tpu.memory_space<vmem>>, vector<8x128xf32>,
      %c127_i32_192 = arith.constant 127 : i32
      %403 = tpu.dynamic_rotate %360 by %c127_i32_192 dim 1 : vector<8x128xf32>, i32 -> vector<8x128xf32>
      %404 = vector.broadcast %127 : vector<1x128xf32> to vector<8x128xf32>
      %405 = arith.mulf %403, %404 : vector<8x128xf32>
      %c88_193 = arith.constant 88 : index
      %c0_194 = arith.constant 0 : index
      %406 = vector.load %arg12[%c88_193, %c0_194] : memref<432x128xf32, #tpu.memory_space<vmem>>, vector<8x128xf32>
      tpu.vector_store %arg12[%c88_193, %c0_194], %405 {strides = array<i32>} : memref<432x128xf32, #tpu.memory_space<vmem>>, vector<8x128xf32>,
      %c113_i32_195 = arith.constant 113 : i32
      %407 = tpu.dynamic_rotate %357 by %c113_i32_195 dim 1 : vector<8x128xf32>, i32 -> vector<8x128xf32>
      %408 = vector.broadcast %148 : vector<1x128xf32> to vector<8x128xf32>
      %409 = arith.mulf %407, %408 : vector<8x128xf32>
      %c96_196 = arith.constant 96 : index
      %c0_197 = arith.constant 0 : index
      %410 = vector.load %arg12[%c96_196, %c0_197] : memref<432x128xf32, #tpu.memory_space<vmem>>, vector<8x128xf32>
      tpu.vector_store %arg12[%c96_196, %c0_197], %409 {strides = array<i32>} : memref<432x128xf32, #tpu.memory_space<vmem>>, vector<8x128xf32>,
      %c113_i32_198 = arith.constant 113 : i32
      %411 = tpu.dynamic_rotate %360 by %c113_i32_198 dim 1 : vector<8x128xf32>, i32 -> vector<8x128xf32>
      %412 = vector.broadcast %148 : vector<1x128xf32> to vector<8x128xf32>
      %413 = arith.mulf %411, %412 : vector<8x128xf32>
      %c104_199 = arith.constant 104 : index
      %c0_200 = arith.constant 0 : index
      %414 = vector.load %arg12[%c104_199, %c0_200] : memref<432x128xf32, #tpu.memory_space<vmem>>, vector<8x128xf32>
      tpu.vector_store %arg12[%c104_199, %c0_200], %413 {strides = array<i32>} : memref<432x128xf32, #tpu.memory_space<vmem>>, vector<8x128xf32>,
      %c112_i32_201 = arith.constant 112 : i32
      %415 = tpu.dynamic_rotate %357 by %c112_i32_201 dim 1 : vector<8x128xf32>, i32 -> vector<8x128xf32>
      %416 = vector.broadcast %169 : vector<1x128xf32> to vector<8x128xf32>
      %417 = arith.mulf %415, %416 : vector<8x128xf32>
      %c112_202 = arith.constant 112 : index
      %c0_203 = arith.constant 0 : index
      %418 = vector.load %arg12[%c112_202, %c0_203] : memref<432x128xf32, #tpu.memory_space<vmem>>, vector<8x128xf32>
      tpu.vector_store %arg12[%c112_202, %c0_203], %417 {strides = array<i32>} : memref<432x128xf32, #tpu.memory_space<vmem>>, vector<8x128xf32>,
      %c112_i32_204 = arith.constant 112 : i32
      %419 = tpu.dynamic_rotate %360 by %c112_i32_204 dim 1 : vector<8x128xf32>, i32 -> vector<8x128xf32>
      %420 = vector.broadcast %169 : vector<1x128xf32> to vector<8x128xf32>
      %421 = arith.mulf %419, %420 : vector<8x128xf32>
      %c120_205 = arith.constant 120 : index
      %c0_206 = arith.constant 0 : index
      %422 = vector.load %arg12[%c120_205, %c0_206] : memref<432x128xf32, #tpu.memory_space<vmem>>, vector<8x128xf32>
      tpu.vector_store %arg12[%c120_205, %c0_206], %421 {strides = array<i32>} : memref<432x128xf32, #tpu.memory_space<vmem>>, vector<8x128xf32>,
      %c111_i32_207 = arith.constant 111 : i32
      %423 = tpu.dynamic_rotate %357 by %c111_i32_207 dim 1 : vector<8x128xf32>, i32 -> vector<8x128xf32>
      %424 = vector.broadcast %190 : vector<1x128xf32> to vector<8x128xf32>
      %425 = arith.mulf %423, %424 : vector<8x128xf32>
      %c128_208 = arith.constant 128 : index
      %c0_209 = arith.constant 0 : index
      %426 = vector.load %arg12[%c128_208, %c0_209] : memref<432x128xf32, #tpu.memory_space<vmem>>, vector<8x128xf32>
      tpu.vector_store %arg12[%c128_208, %c0_209], %425 {strides = array<i32>} : memref<432x128xf32, #tpu.memory_space<vmem>>, vector<8x128xf32>,
      %c111_i32_210 = arith.constant 111 : i32
      %427 = tpu.dynamic_rotate %360 by %c111_i32_210 dim 1 : vector<8x128xf32>, i32 -> vector<8x128xf32>
      %428 = vector.broadcast %190 : vector<1x128xf32> to vector<8x128xf32>
      %429 = arith.mulf %427, %428 : vector<8x128xf32>
      %c136_211 = arith.constant 136 : index
      %c0_212 = arith.constant 0 : index
      %430 = vector.load %arg12[%c136_211, %c0_212] : memref<432x128xf32, #tpu.memory_space<vmem>>, vector<8x128xf32>
      tpu.vector_store %arg12[%c136_211, %c0_212], %429 {strides = array<i32>} : memref<432x128xf32, #tpu.memory_space<vmem>>, vector<8x128xf32>,
      %c1_i32_213 = arith.constant 1 : i32
      %431 = arith.addi %340, %c1_i32_213 : i32
      %c1_i32_214 = arith.constant 1 : i32
      %432 = arith.subi %431, %c1_i32_214 : i32
      %c0_i32_215 = arith.constant 0 : i32
      %433 = arith.cmpi sge, %432, %c0_i32_215 : i32
      %c3_i32_216 = arith.constant 3 : i32
      %434 = arith.cmpi sle, %432, %c3_i32_216 : i32
      %435 = arith.andi %433, %434 : i1
      %436 = vector.broadcast %432 : i32 to vector<1x128xi32>
      %437 = arith.cmpi sge, %1, %436 : vector<1x128xi32>
      %438 = vector.broadcast %435 : i1 to vector<1x128xi1>
      %439 = arith.andi %437, %438 : vector<1x128xi1>
      %440 = arith.extui %439 : vector<1x128xi1> to vector<1x128xi32>
      %441 = arith.sitofp %440 : vector<1x128xi32> to vector<1x128xf32>
      %442 = vector.broadcast %441 : vector<1x128xf32> to vector<8x128xf32>
      %443 = arith.mulf %192, %442 : vector<8x128xf32>
      %444 = vector.broadcast %441 : vector<1x128xf32> to vector<8x128xf32>
      %445 = arith.mulf %344, %444 : vector<8x128xf32>
      %c17_i32_217 = arith.constant 17 : i32
      %446 = tpu.dynamic_rotate %443 by %c17_i32_217 dim 1 : vector<8x128xf32>, i32 -> vector<8x128xf32>
      %447 = vector.broadcast %22 : vector<1x128xf32> to vector<8x128xf32>
      %448 = arith.mulf %446, %447 : vector<8x128xf32>
      %c144_218 = arith.constant 144 : index
      %c0_219 = arith.constant 0 : index
      %449 = vector.load %arg12[%c144_218, %c0_219] : memref<432x128xf32, #tpu.memory_space<vmem>>, vector<8x128xf32>
      tpu.vector_store %arg12[%c144_218, %c0_219], %448 {strides = array<i32>} : memref<432x128xf32, #tpu.memory_space<vmem>>, vector<8x128xf32>,
      %c17_i32_220 = arith.constant 17 : i32
      %450 = tpu.dynamic_rotate %445 by %c17_i32_220 dim 1 : vector<8x128xf32>, i32 -> vector<8x128xf32>
      %451 = vector.broadcast %22 : vector<1x128xf32> to vector<8x128xf32>
      %452 = arith.mulf %450, %451 : vector<8x128xf32>
      %c152_221 = arith.constant 152 : index
      %c0_222 = arith.constant 0 : index
      %453 = vector.load %arg12[%c152_221, %c0_222] : memref<432x128xf32, #tpu.memory_space<vmem>>, vector<8x128xf32>
      tpu.vector_store %arg12[%c152_221, %c0_222], %452 {strides = array<i32>} : memref<432x128xf32, #tpu.memory_space<vmem>>, vector<8x128xf32>,
      %c16_i32_223 = arith.constant 16 : i32
      %454 = tpu.dynamic_rotate %443 by %c16_i32_223 dim 1 : vector<8x128xf32>, i32 -> vector<8x128xf32>
      %455 = vector.broadcast %43 : vector<1x128xf32> to vector<8x128xf32>
      %456 = arith.mulf %454, %455 : vector<8x128xf32>
      %c160_224 = arith.constant 160 : index
      %c0_225 = arith.constant 0 : index
      %457 = vector.load %arg12[%c160_224, %c0_225] : memref<432x128xf32, #tpu.memory_space<vmem>>, vector<8x128xf32>
      tpu.vector_store %arg12[%c160_224, %c0_225], %456 {strides = array<i32>} : memref<432x128xf32, #tpu.memory_space<vmem>>, vector<8x128xf32>,
      %c16_i32_226 = arith.constant 16 : i32
      %458 = tpu.dynamic_rotate %445 by %c16_i32_226 dim 1 : vector<8x128xf32>, i32 -> vector<8x128xf32>
      %459 = vector.broadcast %43 : vector<1x128xf32> to vector<8x128xf32>
      %460 = arith.mulf %458, %459 : vector<8x128xf32>
      %c168_227 = arith.constant 168 : index
      %c0_228 = arith.constant 0 : index
      %461 = vector.load %arg12[%c168_227, %c0_228] : memref<432x128xf32, #tpu.memory_space<vmem>>, vector<8x128xf32>
      tpu.vector_store %arg12[%c168_227, %c0_228], %460 {strides = array<i32>} : memref<432x128xf32, #tpu.memory_space<vmem>>, vector<8x128xf32>,
      %c15_i32_229 = arith.constant 15 : i32
      %462 = tpu.dynamic_rotate %443 by %c15_i32_229 dim 1 : vector<8x128xf32>, i32 -> vector<8x128xf32>
      %463 = vector.broadcast %64 : vector<1x128xf32> to vector<8x128xf32>
      %464 = arith.mulf %462, %463 : vector<8x128xf32>
      %c176_230 = arith.constant 176 : index
      %c0_231 = arith.constant 0 : index
      %465 = vector.load %arg12[%c176_230, %c0_231] : memref<432x128xf32, #tpu.memory_space<vmem>>, vector<8x128xf32>
      tpu.vector_store %arg12[%c176_230, %c0_231], %464 {strides = array<i32>} : memref<432x128xf32, #tpu.memory_space<vmem>>, vector<8x128xf32>,
      %c15_i32_232 = arith.constant 15 : i32
      %466 = tpu.dynamic_rotate %445 by %c15_i32_232 dim 1 : vector<8x128xf32>, i32 -> vector<8x128xf32>
      %467 = vector.broadcast %64 : vector<1x128xf32> to vector<8x128xf32>
      %468 = arith.mulf %466, %467 : vector<8x128xf32>
      %c184_233 = arith.constant 184 : index
      %c0_234 = arith.constant 0 : index
      %469 = vector.load %arg12[%c184_233, %c0_234] : memref<432x128xf32, #tpu.memory_space<vmem>>, vector<8x128xf32>
      tpu.vector_store %arg12[%c184_233, %c0_234], %468 {strides = array<i32>} : memref<432x128xf32, #tpu.memory_space<vmem>>, vector<8x128xf32>,
      %c1_i32_235 = arith.constant 1 : i32
      %470 = tpu.dynamic_rotate %443 by %c1_i32_235 dim 1 : vector<8x128xf32>, i32 -> vector<8x128xf32>
      %471 = vector.broadcast %85 : vector<1x128xf32> to vector<8x128xf32>
      %472 = arith.mulf %470, %471 : vector<8x128xf32>
      %c192_236 = arith.constant 192 : index
      %c0_237 = arith.constant 0 : index
      %473 = vector.load %arg12[%c192_236, %c0_237] : memref<432x128xf32, #tpu.memory_space<vmem>>, vector<8x128xf32>
      tpu.vector_store %arg12[%c192_236, %c0_237], %472 {strides = array<i32>} : memref<432x128xf32, #tpu.memory_space<vmem>>, vector<8x128xf32>,
      %c1_i32_238 = arith.constant 1 : i32
      %474 = tpu.dynamic_rotate %445 by %c1_i32_238 dim 1 : vector<8x128xf32>, i32 -> vector<8x128xf32>
      %475 = vector.broadcast %85 : vector<1x128xf32> to vector<8x128xf32>
      %476 = arith.mulf %474, %475 : vector<8x128xf32>
      %c200_239 = arith.constant 200 : index
      %c0_240 = arith.constant 0 : index
      %477 = vector.load %arg12[%c200_239, %c0_240] : memref<432x128xf32, #tpu.memory_space<vmem>>, vector<8x128xf32>
      tpu.vector_store %arg12[%c200_239, %c0_240], %476 {strides = array<i32>} : memref<432x128xf32, #tpu.memory_space<vmem>>, vector<8x128xf32>,
      %478 = vector.broadcast %106 : vector<1x128xf32> to vector<8x128xf32>
      %479 = arith.mulf %443, %478 : vector<8x128xf32>
      %c208_241 = arith.constant 208 : index
      %c0_242 = arith.constant 0 : index
      %480 = vector.load %arg12[%c208_241, %c0_242] : memref<432x128xf32, #tpu.memory_space<vmem>>, vector<8x128xf32>
      tpu.vector_store %arg12[%c208_241, %c0_242], %479 {strides = array<i32>} : memref<432x128xf32, #tpu.memory_space<vmem>>, vector<8x128xf32>,
      %481 = vector.broadcast %106 : vector<1x128xf32> to vector<8x128xf32>
      %482 = arith.mulf %445, %481 : vector<8x128xf32>
      %c216 = arith.constant 216 : index
      %c0_243 = arith.constant 0 : index
      %483 = vector.load %arg12[%c216, %c0_243] : memref<432x128xf32, #tpu.memory_space<vmem>>, vector<8x128xf32>
      tpu.vector_store %arg12[%c216, %c0_243], %482 {strides = array<i32>} : memref<432x128xf32, #tpu.memory_space<vmem>>, vector<8x128xf32>,
      %c127_i32_244 = arith.constant 127 : i32
      %484 = tpu.dynamic_rotate %443 by %c127_i32_244 dim 1 : vector<8x128xf32>, i32 -> vector<8x128xf32>
      %485 = vector.broadcast %127 : vector<1x128xf32> to vector<8x128xf32>
      %486 = arith.mulf %484, %485 : vector<8x128xf32>
      %c224 = arith.constant 224 : index
      %c0_245 = arith.constant 0 : index
      %487 = vector.load %arg12[%c224, %c0_245] : memref<432x128xf32, #tpu.memory_space<vmem>>, vector<8x128xf32>
      tpu.vector_store %arg12[%c224, %c0_245], %486 {strides = array<i32>} : memref<432x128xf32, #tpu.memory_space<vmem>>, vector<8x128xf32>,
      %c127_i32_246 = arith.constant 127 : i32
      %488 = tpu.dynamic_rotate %445 by %c127_i32_246 dim 1 : vector<8x128xf32>, i32 -> vector<8x128xf32>
      %489 = vector.broadcast %127 : vector<1x128xf32> to vector<8x128xf32>
      %490 = arith.mulf %488, %489 : vector<8x128xf32>
      %c232 = arith.constant 232 : index
      %c0_247 = arith.constant 0 : index
      %491 = vector.load %arg12[%c232, %c0_247] : memref<432x128xf32, #tpu.memory_space<vmem>>, vector<8x128xf32>
      tpu.vector_store %arg12[%c232, %c0_247], %490 {strides = array<i32>} : memref<432x128xf32, #tpu.memory_space<vmem>>, vector<8x128xf32>,
      %c113_i32_248 = arith.constant 113 : i32
      %492 = tpu.dynamic_rotate %443 by %c113_i32_248 dim 1 : vector<8x128xf32>, i32 -> vector<8x128xf32>
      %493 = vector.broadcast %148 : vector<1x128xf32> to vector<8x128xf32>
      %494 = arith.mulf %492, %493 : vector<8x128xf32>
      %c240 = arith.constant 240 : index
      %c0_249 = arith.constant 0 : index
      %495 = vector.load %arg12[%c240, %c0_249] : memref<432x128xf32, #tpu.memory_space<vmem>>, vector<8x128xf32>
      tpu.vector_store %arg12[%c240, %c0_249], %494 {strides = array<i32>} : memref<432x128xf32, #tpu.memory_space<vmem>>, vector<8x128xf32>,
      %c113_i32_250 = arith.constant 113 : i32
      %496 = tpu.dynamic_rotate %445 by %c113_i32_250 dim 1 : vector<8x128xf32>, i32 -> vector<8x128xf32>
      %497 = vector.broadcast %148 : vector<1x128xf32> to vector<8x128xf32>
      %498 = arith.mulf %496, %497 : vector<8x128xf32>
      %c248 = arith.constant 248 : index
      %c0_251 = arith.constant 0 : index
      %499 = vector.load %arg12[%c248, %c0_251] : memref<432x128xf32, #tpu.memory_space<vmem>>, vector<8x128xf32>
      tpu.vector_store %arg12[%c248, %c0_251], %498 {strides = array<i32>} : memref<432x128xf32, #tpu.memory_space<vmem>>, vector<8x128xf32>,
      %c112_i32_252 = arith.constant 112 : i32
      %500 = tpu.dynamic_rotate %443 by %c112_i32_252 dim 1 : vector<8x128xf32>, i32 -> vector<8x128xf32>
      %501 = vector.broadcast %169 : vector<1x128xf32> to vector<8x128xf32>
      %502 = arith.mulf %500, %501 : vector<8x128xf32>
      %c256 = arith.constant 256 : index
      %c0_253 = arith.constant 0 : index
      %503 = vector.load %arg12[%c256, %c0_253] : memref<432x128xf32, #tpu.memory_space<vmem>>, vector<8x128xf32>
      tpu.vector_store %arg12[%c256, %c0_253], %502 {strides = array<i32>} : memref<432x128xf32, #tpu.memory_space<vmem>>, vector<8x128xf32>,
      %c112_i32_254 = arith.constant 112 : i32
      %504 = tpu.dynamic_rotate %445 by %c112_i32_254 dim 1 : vector<8x128xf32>, i32 -> vector<8x128xf32>
      %505 = vector.broadcast %169 : vector<1x128xf32> to vector<8x128xf32>
      %506 = arith.mulf %504, %505 : vector<8x128xf32>
      %c264 = arith.constant 264 : index
      %c0_255 = arith.constant 0 : index
      %507 = vector.load %arg12[%c264, %c0_255] : memref<432x128xf32, #tpu.memory_space<vmem>>, vector<8x128xf32>
      tpu.vector_store %arg12[%c264, %c0_255], %506 {strides = array<i32>} : memref<432x128xf32, #tpu.memory_space<vmem>>, vector<8x128xf32>,
      %c111_i32_256 = arith.constant 111 : i32
      %508 = tpu.dynamic_rotate %443 by %c111_i32_256 dim 1 : vector<8x128xf32>, i32 -> vector<8x128xf32>
      %509 = vector.broadcast %190 : vector<1x128xf32> to vector<8x128xf32>
      %510 = arith.mulf %508, %509 : vector<8x128xf32>
      %c272 = arith.constant 272 : index
      %c0_257 = arith.constant 0 : index
      %511 = vector.load %arg12[%c272, %c0_257] : memref<432x128xf32, #tpu.memory_space<vmem>>, vector<8x128xf32>
      tpu.vector_store %arg12[%c272, %c0_257], %510 {strides = array<i32>} : memref<432x128xf32, #tpu.memory_space<vmem>>, vector<8x128xf32>,
      %c111_i32_258 = arith.constant 111 : i32
      %512 = tpu.dynamic_rotate %445 by %c111_i32_258 dim 1 : vector<8x128xf32>, i32 -> vector<8x128xf32>
      %513 = vector.broadcast %190 : vector<1x128xf32> to vector<8x128xf32>
      %514 = arith.mulf %512, %513 : vector<8x128xf32>
      %c280 = arith.constant 280 : index
      %c0_259 = arith.constant 0 : index
      %515 = vector.load %arg12[%c280, %c0_259] : memref<432x128xf32, #tpu.memory_space<vmem>>, vector<8x128xf32>
      tpu.vector_store %arg12[%c280, %c0_259], %514 {strides = array<i32>} : memref<432x128xf32, #tpu.memory_space<vmem>>, vector<8x128xf32>,
      %c2_i32_260 = arith.constant 2 : i32
      %516 = arith.addi %340, %c2_i32_260 : i32
      %c1_i32_261 = arith.constant 1 : i32
      %517 = arith.subi %516, %c1_i32_261 : i32
      %c0_i32_262 = arith.constant 0 : i32
      %518 = arith.cmpi sge, %517, %c0_i32_262 : i32
      %c3_i32_263 = arith.constant 3 : i32
      %519 = arith.cmpi sle, %517, %c3_i32_263 : i32
      %520 = arith.andi %518, %519 : i1
      %521 = vector.broadcast %517 : i32 to vector<1x128xi32>
      %522 = arith.cmpi sge, %1, %521 : vector<1x128xi32>
      %523 = vector.broadcast %520 : i1 to vector<1x128xi1>
      %524 = arith.andi %522, %523 : vector<1x128xi1>
      %525 = arith.extui %524 : vector<1x128xi1> to vector<1x128xi32>
      %526 = arith.sitofp %525 : vector<1x128xi32> to vector<1x128xf32>
      %527 = vector.broadcast %526 : vector<1x128xf32> to vector<8x128xf32>
      %528 = arith.mulf %192, %527 : vector<8x128xf32>
      %c1_i32_264 = arith.constant 1 : i32
      %529 = tpu.dynamic_rotate %344 by %c1_i32_264 dim 1 : vector<8x128xf32>, i32 -> vector<8x128xf32>
      %530 = vector.broadcast %526 : vector<1x128xf32> to vector<8x128xf32>
      %531 = arith.mulf %529, %530 : vector<8x128xf32>
      %c17_i32_265 = arith.constant 17 : i32
      %532 = tpu.dynamic_rotate %528 by %c17_i32_265 dim 1 : vector<8x128xf32>, i32 -> vector<8x128xf32>
      %533 = vector.broadcast %22 : vector<1x128xf32> to vector<8x128xf32>
      %534 = arith.mulf %532, %533 : vector<8x128xf32>
      %c288 = arith.constant 288 : index
      %c0_266 = arith.constant 0 : index
      %535 = vector.load %arg12[%c288, %c0_266] : memref<432x128xf32, #tpu.memory_space<vmem>>, vector<8x128xf32>
      tpu.vector_store %arg12[%c288, %c0_266], %534 {strides = array<i32>} : memref<432x128xf32, #tpu.memory_space<vmem>>, vector<8x128xf32>,
      %c17_i32_267 = arith.constant 17 : i32
      %536 = tpu.dynamic_rotate %531 by %c17_i32_267 dim 1 : vector<8x128xf32>, i32 -> vector<8x128xf32>
      %537 = vector.broadcast %22 : vector<1x128xf32> to vector<8x128xf32>
      %538 = arith.mulf %536, %537 : vector<8x128xf32>
      %c296 = arith.constant 296 : index
      %c0_268 = arith.constant 0 : index
      %539 = vector.load %arg12[%c296, %c0_268] : memref<432x128xf32, #tpu.memory_space<vmem>>, vector<8x128xf32>
      tpu.vector_store %arg12[%c296, %c0_268], %538 {strides = array<i32>} : memref<432x128xf32, #tpu.memory_space<vmem>>, vector<8x128xf32>,
      %c16_i32_269 = arith.constant 16 : i32
      %540 = tpu.dynamic_rotate %528 by %c16_i32_269 dim 1 : vector<8x128xf32>, i32 -> vector<8x128xf32>
      %541 = vector.broadcast %43 : vector<1x128xf32> to vector<8x128xf32>
      %542 = arith.mulf %540, %541 : vector<8x128xf32>
      %c304 = arith.constant 304 : index
      %c0_270 = arith.constant 0 : index
      %543 = vector.load %arg12[%c304, %c0_270] : memref<432x128xf32, #tpu.memory_space<vmem>>, vector<8x128xf32>
      tpu.vector_store %arg12[%c304, %c0_270], %542 {strides = array<i32>} : memref<432x128xf32, #tpu.memory_space<vmem>>, vector<8x128xf32>,
      %c16_i32_271 = arith.constant 16 : i32
      %544 = tpu.dynamic_rotate %531 by %c16_i32_271 dim 1 : vector<8x128xf32>, i32 -> vector<8x128xf32>
      %545 = vector.broadcast %43 : vector<1x128xf32> to vector<8x128xf32>
      %546 = arith.mulf %544, %545 : vector<8x128xf32>
      %c312 = arith.constant 312 : index
      %c0_272 = arith.constant 0 : index
      %547 = vector.load %arg12[%c312, %c0_272] : memref<432x128xf32, #tpu.memory_space<vmem>>, vector<8x128xf32>
      tpu.vector_store %arg12[%c312, %c0_272], %546 {strides = array<i32>} : memref<432x128xf32, #tpu.memory_space<vmem>>, vector<8x128xf32>,
      %c15_i32_273 = arith.constant 15 : i32
      %548 = tpu.dynamic_rotate %528 by %c15_i32_273 dim 1 : vector<8x128xf32>, i32 -> vector<8x128xf32>
      %549 = vector.broadcast %64 : vector<1x128xf32> to vector<8x128xf32>
      %550 = arith.mulf %548, %549 : vector<8x128xf32>
      %c320 = arith.constant 320 : index
      %c0_274 = arith.constant 0 : index
      %551 = vector.load %arg12[%c320, %c0_274] : memref<432x128xf32, #tpu.memory_space<vmem>>, vector<8x128xf32>
      tpu.vector_store %arg12[%c320, %c0_274], %550 {strides = array<i32>} : memref<432x128xf32, #tpu.memory_space<vmem>>, vector<8x128xf32>,
      %c15_i32_275 = arith.constant 15 : i32
      %552 = tpu.dynamic_rotate %531 by %c15_i32_275 dim 1 : vector<8x128xf32>, i32 -> vector<8x128xf32>
      %553 = vector.broadcast %64 : vector<1x128xf32> to vector<8x128xf32>
      %554 = arith.mulf %552, %553 : vector<8x128xf32>
      %c328 = arith.constant 328 : index
      %c0_276 = arith.constant 0 : index
      %555 = vector.load %arg12[%c328, %c0_276] : memref<432x128xf32, #tpu.memory_space<vmem>>, vector<8x128xf32>
      tpu.vector_store %arg12[%c328, %c0_276], %554 {strides = array<i32>} : memref<432x128xf32, #tpu.memory_space<vmem>>, vector<8x128xf32>,
      %c1_i32_277 = arith.constant 1 : i32
      %556 = tpu.dynamic_rotate %528 by %c1_i32_277 dim 1 : vector<8x128xf32>, i32 -> vector<8x128xf32>
      %557 = vector.broadcast %85 : vector<1x128xf32> to vector<8x128xf32>
      %558 = arith.mulf %556, %557 : vector<8x128xf32>
      %c336 = arith.constant 336 : index
      %c0_278 = arith.constant 0 : index
      %559 = vector.load %arg12[%c336, %c0_278] : memref<432x128xf32, #tpu.memory_space<vmem>>, vector<8x128xf32>
      tpu.vector_store %arg12[%c336, %c0_278], %558 {strides = array<i32>} : memref<432x128xf32, #tpu.memory_space<vmem>>, vector<8x128xf32>,
      %c1_i32_279 = arith.constant 1 : i32
      %560 = tpu.dynamic_rotate %531 by %c1_i32_279 dim 1 : vector<8x128xf32>, i32 -> vector<8x128xf32>
      %561 = vector.broadcast %85 : vector<1x128xf32> to vector<8x128xf32>
      %562 = arith.mulf %560, %561 : vector<8x128xf32>
      %c344 = arith.constant 344 : index
      %c0_280 = arith.constant 0 : index
      %563 = vector.load %arg12[%c344, %c0_280] : memref<432x128xf32, #tpu.memory_space<vmem>>, vector<8x128xf32>
      tpu.vector_store %arg12[%c344, %c0_280], %562 {strides = array<i32>} : memref<432x128xf32, #tpu.memory_space<vmem>>, vector<8x128xf32>,
      %564 = vector.broadcast %106 : vector<1x128xf32> to vector<8x128xf32>
      %565 = arith.mulf %528, %564 : vector<8x128xf32>
      %c352 = arith.constant 352 : index
      %c0_281 = arith.constant 0 : index
      %566 = vector.load %arg12[%c352, %c0_281] : memref<432x128xf32, #tpu.memory_space<vmem>>, vector<8x128xf32>
      tpu.vector_store %arg12[%c352, %c0_281], %565 {strides = array<i32>} : memref<432x128xf32, #tpu.memory_space<vmem>>, vector<8x128xf32>,
      %567 = vector.broadcast %106 : vector<1x128xf32> to vector<8x128xf32>
      %568 = arith.mulf %531, %567 : vector<8x128xf32>
      %c360 = arith.constant 360 : index
      %c0_282 = arith.constant 0 : index
      %569 = vector.load %arg12[%c360, %c0_282] : memref<432x128xf32, #tpu.memory_space<vmem>>, vector<8x128xf32>
      tpu.vector_store %arg12[%c360, %c0_282], %568 {strides = array<i32>} : memref<432x128xf32, #tpu.memory_space<vmem>>, vector<8x128xf32>,
      %c127_i32_283 = arith.constant 127 : i32
      %570 = tpu.dynamic_rotate %528 by %c127_i32_283 dim 1 : vector<8x128xf32>, i32 -> vector<8x128xf32>
      %571 = vector.broadcast %127 : vector<1x128xf32> to vector<8x128xf32>
      %572 = arith.mulf %570, %571 : vector<8x128xf32>
      %c368 = arith.constant 368 : index
      %c0_284 = arith.constant 0 : index
      %573 = vector.load %arg12[%c368, %c0_284] : memref<432x128xf32, #tpu.memory_space<vmem>>, vector<8x128xf32>
      tpu.vector_store %arg12[%c368, %c0_284], %572 {strides = array<i32>} : memref<432x128xf32, #tpu.memory_space<vmem>>, vector<8x128xf32>,
      %c127_i32_285 = arith.constant 127 : i32
      %574 = tpu.dynamic_rotate %531 by %c127_i32_285 dim 1 : vector<8x128xf32>, i32 -> vector<8x128xf32>
      %575 = vector.broadcast %127 : vector<1x128xf32> to vector<8x128xf32>
      %576 = arith.mulf %574, %575 : vector<8x128xf32>
      %c376 = arith.constant 376 : index
      %c0_286 = arith.constant 0 : index
      %577 = vector.load %arg12[%c376, %c0_286] : memref<432x128xf32, #tpu.memory_space<vmem>>, vector<8x128xf32>
      tpu.vector_store %arg12[%c376, %c0_286], %576 {strides = array<i32>} : memref<432x128xf32, #tpu.memory_space<vmem>>, vector<8x128xf32>,
      %c113_i32_287 = arith.constant 113 : i32
      %578 = tpu.dynamic_rotate %528 by %c113_i32_287 dim 1 : vector<8x128xf32>, i32 -> vector<8x128xf32>
      %579 = vector.broadcast %148 : vector<1x128xf32> to vector<8x128xf32>
      %580 = arith.mulf %578, %579 : vector<8x128xf32>
      %c384 = arith.constant 384 : index
      %c0_288 = arith.constant 0 : index
      %581 = vector.load %arg12[%c384, %c0_288] : memref<432x128xf32, #tpu.memory_space<vmem>>, vector<8x128xf32>
      tpu.vector_store %arg12[%c384, %c0_288], %580 {strides = array<i32>} : memref<432x128xf32, #tpu.memory_space<vmem>>, vector<8x128xf32>,
      %c113_i32_289 = arith.constant 113 : i32
      %582 = tpu.dynamic_rotate %531 by %c113_i32_289 dim 1 : vector<8x128xf32>, i32 -> vector<8x128xf32>
      %583 = vector.broadcast %148 : vector<1x128xf32> to vector<8x128xf32>
      %584 = arith.mulf %582, %583 : vector<8x128xf32>
      %c392 = arith.constant 392 : index
      %c0_290 = arith.constant 0 : index
      %585 = vector.load %arg12[%c392, %c0_290] : memref<432x128xf32, #tpu.memory_space<vmem>>, vector<8x128xf32>
      tpu.vector_store %arg12[%c392, %c0_290], %584 {strides = array<i32>} : memref<432x128xf32, #tpu.memory_space<vmem>>, vector<8x128xf32>,
      %c112_i32_291 = arith.constant 112 : i32
      %586 = tpu.dynamic_rotate %528 by %c112_i32_291 dim 1 : vector<8x128xf32>, i32 -> vector<8x128xf32>
      %587 = vector.broadcast %169 : vector<1x128xf32> to vector<8x128xf32>
      %588 = arith.mulf %586, %587 : vector<8x128xf32>
      %c400 = arith.constant 400 : index
      %c0_292 = arith.constant 0 : index
      %589 = vector.load %arg12[%c400, %c0_292] : memref<432x128xf32, #tpu.memory_space<vmem>>, vector<8x128xf32>
      tpu.vector_store %arg12[%c400, %c0_292], %588 {strides = array<i32>} : memref<432x128xf32, #tpu.memory_space<vmem>>, vector<8x128xf32>,
      %c112_i32_293 = arith.constant 112 : i32
      %590 = tpu.dynamic_rotate %531 by %c112_i32_293 dim 1 : vector<8x128xf32>, i32 -> vector<8x128xf32>
      %591 = vector.broadcast %169 : vector<1x128xf32> to vector<8x128xf32>
      %592 = arith.mulf %590, %591 : vector<8x128xf32>
      %c408 = arith.constant 408 : index
      %c0_294 = arith.constant 0 : index
      %593 = vector.load %arg12[%c408, %c0_294] : memref<432x128xf32, #tpu.memory_space<vmem>>, vector<8x128xf32>
      tpu.vector_store %arg12[%c408, %c0_294], %592 {strides = array<i32>} : memref<432x128xf32, #tpu.memory_space<vmem>>, vector<8x128xf32>,
      %c111_i32_295 = arith.constant 111 : i32
      %594 = tpu.dynamic_rotate %528 by %c111_i32_295 dim 1 : vector<8x128xf32>, i32 -> vector<8x128xf32>
      %595 = vector.broadcast %190 : vector<1x128xf32> to vector<8x128xf32>
      %596 = arith.mulf %594, %595 : vector<8x128xf32>
      %c416 = arith.constant 416 : index
      %c0_296 = arith.constant 0 : index
      %597 = vector.load %arg12[%c416, %c0_296] : memref<432x128xf32, #tpu.memory_space<vmem>>, vector<8x128xf32>
      tpu.vector_store %arg12[%c416, %c0_296], %596 {strides = array<i32>} : memref<432x128xf32, #tpu.memory_space<vmem>>, vector<8x128xf32>,
      %c111_i32_297 = arith.constant 111 : i32
      %598 = tpu.dynamic_rotate %531 by %c111_i32_297 dim 1 : vector<8x128xf32>, i32 -> vector<8x128xf32>
      %599 = vector.broadcast %190 : vector<1x128xf32> to vector<8x128xf32>
      %600 = arith.mulf %598, %599 : vector<8x128xf32>
      %c424 = arith.constant 424 : index
      %c0_298 = arith.constant 0 : index
      %601 = vector.load %arg12[%c424, %c0_298] : memref<432x128xf32, #tpu.memory_space<vmem>>, vector<8x128xf32>
      tpu.vector_store %arg12[%c424, %c0_298], %600 {strides = array<i32>} : memref<432x128xf32, #tpu.memory_space<vmem>>, vector<8x128xf32>,
      %c0_299 = arith.constant 0 : index
      %c0_300 = arith.constant 0 : index
      %602 = vector.load %arg6[%c0_299, %c0_300] : memref<8x432xf32, #tpu.memory_space<vmem>>, vector<8x432xf32>
      %c0_301 = arith.constant 0 : index
      %c0_302 = arith.constant 0 : index
      %603 = vector.load %arg12[%c0_301, %c0_302] : memref<432x128xf32, #tpu.memory_space<vmem>>, vector<432x128xf32>
      %cst_303 = arith.constant dense<0.000000e+00> : vector<8x128xf32>
      %604 = tpu.matmul %602, %603, %cst_303 {dimension_numbers = #tpu.dot_dimension_numbers<[1], [0], [0], [1], [0, 0, 1, 1], [], []>} : vector<8x432xf32>, vector<432x128xf32>, vector<8x128xf32> -> vector<8x128xf32>
      %c0_304 = arith.constant 0 : index
      %c0_305 = arith.constant 0 : index
      %605 = vector.load %arg7[%c0_304, %c0_305] : memref<8x1xf32, #tpu.memory_space<vmem>>, vector<8x1xf32>
      %606 = vector.broadcast %605 : vector<8x1xf32> to vector<8x128xf32>
      %607 = arith.addf %604, %606 : vector<8x128xf32>
      %cst_306 = arith.constant 0.000000e+00 : f32
      %608 = vector.broadcast %cst_306 : f32 to vector<8x128xf32>
      %609 = arith.maximumf %607, %608 : vector<8x128xf32>
      %610 = vector.broadcast %343 : f32 to vector<8x128xf32>
      %611 = arith.mulf %609, %610 : vector<8x128xf32>
      %c3_i32_307 = arith.constant 3 : i32
      %612 = arith.remsi %339, %c3_i32_307 : i32
      %c0_i32_308 = arith.constant 0 : i32
      %613 = arith.cmpi eq, %612, %c0_i32_308 : i32
      %614 = arith.extui %613 : i1 to i32
      %c0_i32_309 = arith.constant 0 : i32
      %615 = arith.cmpi ne, %614, %c0_i32_309 : i32
      scf.if %615 {
        %c0_314 = arith.constant 0 : index
        %c0_315 = arith.constant 0 : index
        %c0_316 = arith.constant 0 : index
        %622 = vector.load %arg11[%c0_314, %c0_315, %c0_316] : memref<3x8x128xf32, #tpu.memory_space<vmem>>, vector<1x8x128xf32>
        %623 = vector.shape_cast %622 : vector<1x8x128xf32> to vector<8x128xf32>
        %624 = vector.shape_cast %611 : vector<8x128xf32> to vector<1x8x128xf32>
        tpu.vector_store %arg11[%c0_314, %c0_315, %c0_316], %624 {strides = array<i32>} : memref<3x8x128xf32, #tpu.memory_space<vmem>>, vector<1x8x128xf32>,
      } else {
      }
      %c1_i32_310 = arith.constant 1 : i32
      %616 = arith.cmpi eq, %612, %c1_i32_310 : i32
      %617 = arith.extui %616 : i1 to i32
      %c0_i32_311 = arith.constant 0 : i32
      %618 = arith.cmpi ne, %617, %c0_i32_311 : i32
      scf.if %618 {
        %c1 = arith.constant 1 : index
        %c0_314 = arith.constant 0 : index
        %c0_315 = arith.constant 0 : index
        %622 = vector.load %arg11[%c1, %c0_314, %c0_315] : memref<3x8x128xf32, #tpu.memory_space<vmem>>, vector<1x8x128xf32>
        %623 = vector.shape_cast %622 : vector<1x8x128xf32> to vector<8x128xf32>
        %624 = vector.shape_cast %611 : vector<8x128xf32> to vector<1x8x128xf32>
        tpu.vector_store %arg11[%c1, %c0_314, %c0_315], %624 {strides = array<i32>} : memref<3x8x128xf32, #tpu.memory_space<vmem>>, vector<1x8x128xf32>,
      } else {
      }
      %c2_i32_312 = arith.constant 2 : i32
      %619 = arith.cmpi eq, %612, %c2_i32_312 : i32
      %620 = arith.extui %619 : i1 to i32
      %c0_i32_313 = arith.constant 0 : i32
      %621 = arith.cmpi ne, %620, %c0_i32_313 : i32
      scf.if %621 {
        %c2 = arith.constant 2 : index
        %c0_314 = arith.constant 0 : index
        %c0_315 = arith.constant 0 : index
        %622 = vector.load %arg11[%c2, %c0_314, %c0_315] : memref<3x8x128xf32, #tpu.memory_space<vmem>>, vector<1x8x128xf32>
        %623 = vector.shape_cast %622 : vector<1x8x128xf32> to vector<8x128xf32>
        %624 = vector.shape_cast %611 : vector<8x128xf32> to vector<1x8x128xf32>
        tpu.vector_store %arg11[%c2, %c0_314, %c0_315], %624 {strides = array<i32>} : memref<3x8x128xf32, #tpu.memory_space<vmem>>, vector<1x8x128xf32>,
      } else {
      }
    } else {
    }
    %c0_i32_80 = arith.constant 0 : i32
    %202 = arith.addi %arg1, %c0_i32_80 : i32
    %c1_i32_81 = arith.constant 1 : i32
    %203 = arith.subi %202, %c1_i32_81 : i32
    %c3_i32 = arith.constant 3 : i32
    %204 = arith.addi %203, %c3_i32 : i32
    %c3_i32_82 = arith.constant 3 : i32
    %205 = arith.remsi %204, %c3_i32_82 : i32
    %206 = arith.index_cast %205 : i32 to index
    %c0_83 = arith.constant 0 : index
    %c0_84 = arith.constant 0 : index
    %207 = vector.load %arg11[%206, %c0_83, %c0_84] : memref<3x8x128xf32, #tpu.memory_space<vmem>>, vector<1x8x128xf32>
    %208 = vector.shape_cast %207 : vector<1x8x128xf32> to vector<8x128xf32>
    %c17_i32 = arith.constant 17 : i32
    %209 = tpu.dynamic_rotate %208 by %c17_i32 dim 1 : vector<8x128xf32>, i32 -> vector<8x128xf32>
    %210 = vector.broadcast %22 : vector<1x128xf32> to vector<8x128xf32>
    %211 = arith.mulf %209, %210 : vector<8x128xf32>
    %c0_85 = arith.constant 0 : index
    %c0_86 = arith.constant 0 : index
    %212 = vector.load %arg13[%c0_85, %c0_86] : memref<216x128xf32, #tpu.memory_space<vmem>>, vector<8x128xf32>
    tpu.vector_store %arg13[%c0_85, %c0_86], %211 {strides = array<i32>} : memref<216x128xf32, #tpu.memory_space<vmem>>, vector<8x128xf32>,
    %c16_i32 = arith.constant 16 : i32
    %213 = tpu.dynamic_rotate %208 by %c16_i32 dim 1 : vector<8x128xf32>, i32 -> vector<8x128xf32>
    %214 = vector.broadcast %43 : vector<1x128xf32> to vector<8x128xf32>
    %215 = arith.mulf %213, %214 : vector<8x128xf32>
    %c8 = arith.constant 8 : index
    %c0_87 = arith.constant 0 : index
    %216 = vector.load %arg13[%c8, %c0_87] : memref<216x128xf32, #tpu.memory_space<vmem>>, vector<8x128xf32>
    tpu.vector_store %arg13[%c8, %c0_87], %215 {strides = array<i32>} : memref<216x128xf32, #tpu.memory_space<vmem>>, vector<8x128xf32>,
    %c15_i32_88 = arith.constant 15 : i32
    %217 = tpu.dynamic_rotate %208 by %c15_i32_88 dim 1 : vector<8x128xf32>, i32 -> vector<8x128xf32>
    %218 = vector.broadcast %64 : vector<1x128xf32> to vector<8x128xf32>
    %219 = arith.mulf %217, %218 : vector<8x128xf32>
    %c16 = arith.constant 16 : index
    %c0_89 = arith.constant 0 : index
    %220 = vector.load %arg13[%c16, %c0_89] : memref<216x128xf32, #tpu.memory_space<vmem>>, vector<8x128xf32>
    tpu.vector_store %arg13[%c16, %c0_89], %219 {strides = array<i32>} : memref<216x128xf32, #tpu.memory_space<vmem>>, vector<8x128xf32>,
    %c1_i32_90 = arith.constant 1 : i32
    %221 = tpu.dynamic_rotate %208 by %c1_i32_90 dim 1 : vector<8x128xf32>, i32 -> vector<8x128xf32>
    %222 = vector.broadcast %85 : vector<1x128xf32> to vector<8x128xf32>
    %223 = arith.mulf %221, %222 : vector<8x128xf32>
    %c24 = arith.constant 24 : index
    %c0_91 = arith.constant 0 : index
    %224 = vector.load %arg13[%c24, %c0_91] : memref<216x128xf32, #tpu.memory_space<vmem>>, vector<8x128xf32>
    tpu.vector_store %arg13[%c24, %c0_91], %223 {strides = array<i32>} : memref<216x128xf32, #tpu.memory_space<vmem>>, vector<8x128xf32>,
    %225 = vector.broadcast %106 : vector<1x128xf32> to vector<8x128xf32>
    %226 = arith.mulf %208, %225 : vector<8x128xf32>
    %c32 = arith.constant 32 : index
    %c0_92 = arith.constant 0 : index
    %227 = vector.load %arg13[%c32, %c0_92] : memref<216x128xf32, #tpu.memory_space<vmem>>, vector<8x128xf32>
    tpu.vector_store %arg13[%c32, %c0_92], %226 {strides = array<i32>} : memref<216x128xf32, #tpu.memory_space<vmem>>, vector<8x128xf32>,
    %c127_i32 = arith.constant 127 : i32
    %228 = tpu.dynamic_rotate %208 by %c127_i32 dim 1 : vector<8x128xf32>, i32 -> vector<8x128xf32>
    %229 = vector.broadcast %127 : vector<1x128xf32> to vector<8x128xf32>
    %230 = arith.mulf %228, %229 : vector<8x128xf32>
    %c40 = arith.constant 40 : index
    %c0_93 = arith.constant 0 : index
    %231 = vector.load %arg13[%c40, %c0_93] : memref<216x128xf32, #tpu.memory_space<vmem>>, vector<8x128xf32>
    tpu.vector_store %arg13[%c40, %c0_93], %230 {strides = array<i32>} : memref<216x128xf32, #tpu.memory_space<vmem>>, vector<8x128xf32>,
    %c113_i32 = arith.constant 113 : i32
    %232 = tpu.dynamic_rotate %208 by %c113_i32 dim 1 : vector<8x128xf32>, i32 -> vector<8x128xf32>
    %233 = vector.broadcast %148 : vector<1x128xf32> to vector<8x128xf32>
    %234 = arith.mulf %232, %233 : vector<8x128xf32>
    %c48 = arith.constant 48 : index
    %c0_94 = arith.constant 0 : index
    %235 = vector.load %arg13[%c48, %c0_94] : memref<216x128xf32, #tpu.memory_space<vmem>>, vector<8x128xf32>
    tpu.vector_store %arg13[%c48, %c0_94], %234 {strides = array<i32>} : memref<216x128xf32, #tpu.memory_space<vmem>>, vector<8x128xf32>,
    %c112_i32 = arith.constant 112 : i32
    %236 = tpu.dynamic_rotate %208 by %c112_i32 dim 1 : vector<8x128xf32>, i32 -> vector<8x128xf32>
    %237 = vector.broadcast %169 : vector<1x128xf32> to vector<8x128xf32>
    %238 = arith.mulf %236, %237 : vector<8x128xf32>
    %c56 = arith.constant 56 : index
    %c0_95 = arith.constant 0 : index
    %239 = vector.load %arg13[%c56, %c0_95] : memref<216x128xf32, #tpu.memory_space<vmem>>, vector<8x128xf32>
    tpu.vector_store %arg13[%c56, %c0_95], %238 {strides = array<i32>} : memref<216x128xf32, #tpu.memory_space<vmem>>, vector<8x128xf32>,
    %c111_i32 = arith.constant 111 : i32
    %240 = tpu.dynamic_rotate %208 by %c111_i32 dim 1 : vector<8x128xf32>, i32 -> vector<8x128xf32>
    %241 = vector.broadcast %190 : vector<1x128xf32> to vector<8x128xf32>
    %242 = arith.mulf %240, %241 : vector<8x128xf32>
    %c64 = arith.constant 64 : index
    %c0_96 = arith.constant 0 : index
    %243 = vector.load %arg13[%c64, %c0_96] : memref<216x128xf32, #tpu.memory_space<vmem>>, vector<8x128xf32>
    tpu.vector_store %arg13[%c64, %c0_96], %242 {strides = array<i32>} : memref<216x128xf32, #tpu.memory_space<vmem>>, vector<8x128xf32>,
    %c1_i32_97 = arith.constant 1 : i32
    %244 = arith.addi %arg1, %c1_i32_97 : i32
    %c1_i32_98 = arith.constant 1 : i32
    %245 = arith.subi %244, %c1_i32_98 : i32
    %c3_i32_99 = arith.constant 3 : i32
    %246 = arith.addi %245, %c3_i32_99 : i32
    %c3_i32_100 = arith.constant 3 : i32
    %247 = arith.remsi %246, %c3_i32_100 : i32
    %248 = arith.index_cast %247 : i32 to index
    %c0_101 = arith.constant 0 : index
    %c0_102 = arith.constant 0 : index
    %249 = vector.load %arg11[%248, %c0_101, %c0_102] : memref<3x8x128xf32, #tpu.memory_space<vmem>>, vector<1x8x128xf32>
    %250 = vector.shape_cast %249 : vector<1x8x128xf32> to vector<8x128xf32>
    %c17_i32_103 = arith.constant 17 : i32
    %251 = tpu.dynamic_rotate %250 by %c17_i32_103 dim 1 : vector<8x128xf32>, i32 -> vector<8x128xf32>
    %252 = vector.broadcast %22 : vector<1x128xf32> to vector<8x128xf32>
    %253 = arith.mulf %251, %252 : vector<8x128xf32>
    %c72 = arith.constant 72 : index
    %c0_104 = arith.constant 0 : index
    %254 = vector.load %arg13[%c72, %c0_104] : memref<216x128xf32, #tpu.memory_space<vmem>>, vector<8x128xf32>
    tpu.vector_store %arg13[%c72, %c0_104], %253 {strides = array<i32>} : memref<216x128xf32, #tpu.memory_space<vmem>>, vector<8x128xf32>,
    %c16_i32_105 = arith.constant 16 : i32
    %255 = tpu.dynamic_rotate %250 by %c16_i32_105 dim 1 : vector<8x128xf32>, i32 -> vector<8x128xf32>
    %256 = vector.broadcast %43 : vector<1x128xf32> to vector<8x128xf32>
    %257 = arith.mulf %255, %256 : vector<8x128xf32>
    %c80 = arith.constant 80 : index
    %c0_106 = arith.constant 0 : index
    %258 = vector.load %arg13[%c80, %c0_106] : memref<216x128xf32, #tpu.memory_space<vmem>>, vector<8x128xf32>
    tpu.vector_store %arg13[%c80, %c0_106], %257 {strides = array<i32>} : memref<216x128xf32, #tpu.memory_space<vmem>>, vector<8x128xf32>,
    %c15_i32_107 = arith.constant 15 : i32
    %259 = tpu.dynamic_rotate %250 by %c15_i32_107 dim 1 : vector<8x128xf32>, i32 -> vector<8x128xf32>
    %260 = vector.broadcast %64 : vector<1x128xf32> to vector<8x128xf32>
    %261 = arith.mulf %259, %260 : vector<8x128xf32>
    %c88 = arith.constant 88 : index
    %c0_108 = arith.constant 0 : index
    %262 = vector.load %arg13[%c88, %c0_108] : memref<216x128xf32, #tpu.memory_space<vmem>>, vector<8x128xf32>
    tpu.vector_store %arg13[%c88, %c0_108], %261 {strides = array<i32>} : memref<216x128xf32, #tpu.memory_space<vmem>>, vector<8x128xf32>,
    %c1_i32_109 = arith.constant 1 : i32
    %263 = tpu.dynamic_rotate %250 by %c1_i32_109 dim 1 : vector<8x128xf32>, i32 -> vector<8x128xf32>
    %264 = vector.broadcast %85 : vector<1x128xf32> to vector<8x128xf32>
    %265 = arith.mulf %263, %264 : vector<8x128xf32>
    %c96 = arith.constant 96 : index
    %c0_110 = arith.constant 0 : index
    %266 = vector.load %arg13[%c96, %c0_110] : memref<216x128xf32, #tpu.memory_space<vmem>>, vector<8x128xf32>
    tpu.vector_store %arg13[%c96, %c0_110], %265 {strides = array<i32>} : memref<216x128xf32, #tpu.memory_space<vmem>>, vector<8x128xf32>,
    %267 = vector.broadcast %106 : vector<1x128xf32> to vector<8x128xf32>
    %268 = arith.mulf %250, %267 : vector<8x128xf32>
    %c104 = arith.constant 104 : index
    %c0_111 = arith.constant 0 : index
    %269 = vector.load %arg13[%c104, %c0_111] : memref<216x128xf32, #tpu.memory_space<vmem>>, vector<8x128xf32>
    tpu.vector_store %arg13[%c104, %c0_111], %268 {strides = array<i32>} : memref<216x128xf32, #tpu.memory_space<vmem>>, vector<8x128xf32>,
    %c127_i32_112 = arith.constant 127 : i32
    %270 = tpu.dynamic_rotate %250 by %c127_i32_112 dim 1 : vector<8x128xf32>, i32 -> vector<8x128xf32>
    %271 = vector.broadcast %127 : vector<1x128xf32> to vector<8x128xf32>
    %272 = arith.mulf %270, %271 : vector<8x128xf32>
    %c112 = arith.constant 112 : index
    %c0_113 = arith.constant 0 : index
    %273 = vector.load %arg13[%c112, %c0_113] : memref<216x128xf32, #tpu.memory_space<vmem>>, vector<8x128xf32>
    tpu.vector_store %arg13[%c112, %c0_113], %272 {strides = array<i32>} : memref<216x128xf32, #tpu.memory_space<vmem>>, vector<8x128xf32>,
    %c113_i32_114 = arith.constant 113 : i32
    %274 = tpu.dynamic_rotate %250 by %c113_i32_114 dim 1 : vector<8x128xf32>, i32 -> vector<8x128xf32>
    %275 = vector.broadcast %148 : vector<1x128xf32> to vector<8x128xf32>
    %276 = arith.mulf %274, %275 : vector<8x128xf32>
    %c120 = arith.constant 120 : index
    %c0_115 = arith.constant 0 : index
    %277 = vector.load %arg13[%c120, %c0_115] : memref<216x128xf32, #tpu.memory_space<vmem>>, vector<8x128xf32>
    tpu.vector_store %arg13[%c120, %c0_115], %276 {strides = array<i32>} : memref<216x128xf32, #tpu.memory_space<vmem>>, vector<8x128xf32>,
    %c112_i32_116 = arith.constant 112 : i32
    %278 = tpu.dynamic_rotate %250 by %c112_i32_116 dim 1 : vector<8x128xf32>, i32 -> vector<8x128xf32>
    %279 = vector.broadcast %169 : vector<1x128xf32> to vector<8x128xf32>
    %280 = arith.mulf %278, %279 : vector<8x128xf32>
    %c128 = arith.constant 128 : index
    %c0_117 = arith.constant 0 : index
    %281 = vector.load %arg13[%c128, %c0_117] : memref<216x128xf32, #tpu.memory_space<vmem>>, vector<8x128xf32>
    tpu.vector_store %arg13[%c128, %c0_117], %280 {strides = array<i32>} : memref<216x128xf32, #tpu.memory_space<vmem>>, vector<8x128xf32>,
    %c111_i32_118 = arith.constant 111 : i32
    %282 = tpu.dynamic_rotate %250 by %c111_i32_118 dim 1 : vector<8x128xf32>, i32 -> vector<8x128xf32>
    %283 = vector.broadcast %190 : vector<1x128xf32> to vector<8x128xf32>
    %284 = arith.mulf %282, %283 : vector<8x128xf32>
    %c136 = arith.constant 136 : index
    %c0_119 = arith.constant 0 : index
    %285 = vector.load %arg13[%c136, %c0_119] : memref<216x128xf32, #tpu.memory_space<vmem>>, vector<8x128xf32>
    tpu.vector_store %arg13[%c136, %c0_119], %284 {strides = array<i32>} : memref<216x128xf32, #tpu.memory_space<vmem>>, vector<8x128xf32>,
    %c2_i32 = arith.constant 2 : i32
    %286 = arith.addi %arg1, %c2_i32 : i32
    %c1_i32_120 = arith.constant 1 : i32
    %287 = arith.subi %286, %c1_i32_120 : i32
    %c3_i32_121 = arith.constant 3 : i32
    %288 = arith.addi %287, %c3_i32_121 : i32
    %c3_i32_122 = arith.constant 3 : i32
    %289 = arith.remsi %288, %c3_i32_122 : i32
    %290 = arith.index_cast %289 : i32 to index
    %c0_123 = arith.constant 0 : index
    %c0_124 = arith.constant 0 : index
    %291 = vector.load %arg11[%290, %c0_123, %c0_124] : memref<3x8x128xf32, #tpu.memory_space<vmem>>, vector<1x8x128xf32>
    %292 = vector.shape_cast %291 : vector<1x8x128xf32> to vector<8x128xf32>
    %c17_i32_125 = arith.constant 17 : i32
    %293 = tpu.dynamic_rotate %292 by %c17_i32_125 dim 1 : vector<8x128xf32>, i32 -> vector<8x128xf32>
    %294 = vector.broadcast %22 : vector<1x128xf32> to vector<8x128xf32>
    %295 = arith.mulf %293, %294 : vector<8x128xf32>
    %c144 = arith.constant 144 : index
    %c0_126 = arith.constant 0 : index
    %296 = vector.load %arg13[%c144, %c0_126] : memref<216x128xf32, #tpu.memory_space<vmem>>, vector<8x128xf32>
    tpu.vector_store %arg13[%c144, %c0_126], %295 {strides = array<i32>} : memref<216x128xf32, #tpu.memory_space<vmem>>, vector<8x128xf32>,
    %c16_i32_127 = arith.constant 16 : i32
    %297 = tpu.dynamic_rotate %292 by %c16_i32_127 dim 1 : vector<8x128xf32>, i32 -> vector<8x128xf32>
    %298 = vector.broadcast %43 : vector<1x128xf32> to vector<8x128xf32>
    %299 = arith.mulf %297, %298 : vector<8x128xf32>
    %c152 = arith.constant 152 : index
    %c0_128 = arith.constant 0 : index
    %300 = vector.load %arg13[%c152, %c0_128] : memref<216x128xf32, #tpu.memory_space<vmem>>, vector<8x128xf32>
    tpu.vector_store %arg13[%c152, %c0_128], %299 {strides = array<i32>} : memref<216x128xf32, #tpu.memory_space<vmem>>, vector<8x128xf32>,
    %c15_i32_129 = arith.constant 15 : i32
    %301 = tpu.dynamic_rotate %292 by %c15_i32_129 dim 1 : vector<8x128xf32>, i32 -> vector<8x128xf32>
    %302 = vector.broadcast %64 : vector<1x128xf32> to vector<8x128xf32>
    %303 = arith.mulf %301, %302 : vector<8x128xf32>
    %c160 = arith.constant 160 : index
    %c0_130 = arith.constant 0 : index
    %304 = vector.load %arg13[%c160, %c0_130] : memref<216x128xf32, #tpu.memory_space<vmem>>, vector<8x128xf32>
    tpu.vector_store %arg13[%c160, %c0_130], %303 {strides = array<i32>} : memref<216x128xf32, #tpu.memory_space<vmem>>, vector<8x128xf32>,
    %c1_i32_131 = arith.constant 1 : i32
    %305 = tpu.dynamic_rotate %292 by %c1_i32_131 dim 1 : vector<8x128xf32>, i32 -> vector<8x128xf32>
    %306 = vector.broadcast %85 : vector<1x128xf32> to vector<8x128xf32>
    %307 = arith.mulf %305, %306 : vector<8x128xf32>
    %c168 = arith.constant 168 : index
    %c0_132 = arith.constant 0 : index
    %308 = vector.load %arg13[%c168, %c0_132] : memref<216x128xf32, #tpu.memory_space<vmem>>, vector<8x128xf32>
    tpu.vector_store %arg13[%c168, %c0_132], %307 {strides = array<i32>} : memref<216x128xf32, #tpu.memory_space<vmem>>, vector<8x128xf32>,
    %309 = vector.broadcast %106 : vector<1x128xf32> to vector<8x128xf32>
    %310 = arith.mulf %292, %309 : vector<8x128xf32>
    %c176 = arith.constant 176 : index
    %c0_133 = arith.constant 0 : index
    %311 = vector.load %arg13[%c176, %c0_133] : memref<216x128xf32, #tpu.memory_space<vmem>>, vector<8x128xf32>
    tpu.vector_store %arg13[%c176, %c0_133], %310 {strides = array<i32>} : memref<216x128xf32, #tpu.memory_space<vmem>>, vector<8x128xf32>,
    %c127_i32_134 = arith.constant 127 : i32
    %312 = tpu.dynamic_rotate %292 by %c127_i32_134 dim 1 : vector<8x128xf32>, i32 -> vector<8x128xf32>
    %313 = vector.broadcast %127 : vector<1x128xf32> to vector<8x128xf32>
    %314 = arith.mulf %312, %313 : vector<8x128xf32>
    %c184 = arith.constant 184 : index
    %c0_135 = arith.constant 0 : index
    %315 = vector.load %arg13[%c184, %c0_135] : memref<216x128xf32, #tpu.memory_space<vmem>>, vector<8x128xf32>
    tpu.vector_store %arg13[%c184, %c0_135], %314 {strides = array<i32>} : memref<216x128xf32, #tpu.memory_space<vmem>>, vector<8x128xf32>,
    %c113_i32_136 = arith.constant 113 : i32
    %316 = tpu.dynamic_rotate %292 by %c113_i32_136 dim 1 : vector<8x128xf32>, i32 -> vector<8x128xf32>
    %317 = vector.broadcast %148 : vector<1x128xf32> to vector<8x128xf32>
    %318 = arith.mulf %316, %317 : vector<8x128xf32>
    %c192 = arith.constant 192 : index
    %c0_137 = arith.constant 0 : index
    %319 = vector.load %arg13[%c192, %c0_137] : memref<216x128xf32, #tpu.memory_space<vmem>>, vector<8x128xf32>
    tpu.vector_store %arg13[%c192, %c0_137], %318 {strides = array<i32>} : memref<216x128xf32, #tpu.memory_space<vmem>>, vector<8x128xf32>,
    %c112_i32_138 = arith.constant 112 : i32
    %320 = tpu.dynamic_rotate %292 by %c112_i32_138 dim 1 : vector<8x128xf32>, i32 -> vector<8x128xf32>
    %321 = vector.broadcast %169 : vector<1x128xf32> to vector<8x128xf32>
    %322 = arith.mulf %320, %321 : vector<8x128xf32>
    %c200 = arith.constant 200 : index
    %c0_139 = arith.constant 0 : index
    %323 = vector.load %arg13[%c200, %c0_139] : memref<216x128xf32, #tpu.memory_space<vmem>>, vector<8x128xf32>
    tpu.vector_store %arg13[%c200, %c0_139], %322 {strides = array<i32>} : memref<216x128xf32, #tpu.memory_space<vmem>>, vector<8x128xf32>,
    %c111_i32_140 = arith.constant 111 : i32
    %324 = tpu.dynamic_rotate %292 by %c111_i32_140 dim 1 : vector<8x128xf32>, i32 -> vector<8x128xf32>
    %325 = vector.broadcast %190 : vector<1x128xf32> to vector<8x128xf32>
    %326 = arith.mulf %324, %325 : vector<8x128xf32>
    %c208 = arith.constant 208 : index
    %c0_141 = arith.constant 0 : index
    %327 = vector.load %arg13[%c208, %c0_141] : memref<216x128xf32, #tpu.memory_space<vmem>>, vector<8x128xf32>
    tpu.vector_store %arg13[%c208, %c0_141], %326 {strides = array<i32>} : memref<216x128xf32, #tpu.memory_space<vmem>>, vector<8x128xf32>,
    %c0_142 = arith.constant 0 : index
    %c0_143 = arith.constant 0 : index
    %328 = vector.load %arg8[%c0_142, %c0_143] : memref<8x216xf32, #tpu.memory_space<vmem>>, vector<8x216xf32>
    %c0_144 = arith.constant 0 : index
    %c0_145 = arith.constant 0 : index
    %329 = vector.load %arg13[%c0_144, %c0_145] : memref<216x128xf32, #tpu.memory_space<vmem>>, vector<216x128xf32>
    %cst_146 = arith.constant dense<0.000000e+00> : vector<8x128xf32>
    %330 = tpu.matmul %328, %329, %cst_146 {dimension_numbers = #tpu.dot_dimension_numbers<[1], [0], [0], [1], [0, 0, 1, 1], [], []>} : vector<8x216xf32>, vector<216x128xf32>, vector<8x128xf32> -> vector<8x128xf32>
    %c0_147 = arith.constant 0 : index
    %c0_148 = arith.constant 0 : index
    %331 = vector.load %arg9[%c0_147, %c0_148] : memref<8x1xf32, #tpu.memory_space<vmem>>, vector<8x1xf32>
    %332 = vector.broadcast %331 : vector<8x1xf32> to vector<8x128xf32>
    %333 = arith.addf %330, %332 : vector<8x128xf32>
    %cst_149 = arith.constant 0.000000e+00 : f32
    %334 = vector.broadcast %cst_149 : f32 to vector<8x128xf32>
    %335 = arith.maximumf %333, %334 : vector<8x128xf32>
    %c0_150 = arith.constant 0 : index
    %c0_151 = arith.constant 0 : index
    %c0_152 = arith.constant 0 : index
    %336 = vector.load %arg10[%c0_150, %c0_151, %c0_152] : memref<1x8x128xf32, #tpu.memory_space<vmem>>, vector<1x8x128xf32>
    %337 = vector.shape_cast %336 : vector<1x8x128xf32> to vector<8x128xf32>
    %338 = vector.shape_cast %335 : vector<8x128xf32> to vector<1x8x128xf32>
    tpu.vector_store %arg10[%c0_150, %c0_151, %c0_152], %338 {strides = array<i32>} : memref<1x8x128xf32, #tpu.memory_space<vmem>>, vector<1x8x128xf32>,
    return
  }
  func.func @transform_0(%arg0: i32, %arg1: i32) -> (i32, i32, i32) {
    %c0_i32 = arith.constant 0 : i32
    %c0_i32_0 = arith.constant 0 : i32
    %c0_i32_1 = arith.constant 0 : i32
    return %arg0, %c0_i32, %c0_i32_0 : i32, i32, i32
  }
  func.func @transform_1(%arg0: i32, %arg1: i32) -> (i32, i32, i32) {
    %c0_i32 = arith.constant 0 : i32
    %c0_i32_0 = arith.constant 0 : i32
    %c0_i32_1 = arith.constant 0 : i32
    return %arg0, %c0_i32, %c0_i32_0 : i32, i32, i32
  }
  func.func @transform_2(%arg0: i32, %arg1: i32) -> (i32, i32) {
    %c0_i32 = arith.constant 0 : i32
    %c0_i32_0 = arith.constant 0 : i32
    %c0_i32_1 = arith.constant 0 : i32
    return %c0_i32, %c0_i32_0 : i32, i32
  }
  func.func @transform_3(%arg0: i32, %arg1: i32) -> (i32, i32) {
    %c0_i32 = arith.constant 0 : i32
    %c0_i32_0 = arith.constant 0 : i32
    %c0_i32_1 = arith.constant 0 : i32
    return %c0_i32, %c0_i32_0 : i32, i32
  }
  func.func @transform_4(%arg0: i32, %arg1: i32) -> (i32, i32) {
    %c0_i32 = arith.constant 0 : i32
    %c0_i32_0 = arith.constant 0 : i32
    %c0_i32_1 = arith.constant 0 : i32
    return %c0_i32, %c0_i32_0 : i32, i32
  }
  func.func @transform_5(%arg0: i32, %arg1: i32) -> (i32, i32) {
    %c0_i32 = arith.constant 0 : i32
    %c0_i32_0 = arith.constant 0 : i32
    %c0_i32_1 = arith.constant 0 : i32
    return %c0_i32, %c0_i32_0 : i32, i32
  }
  func.func @transform_6(%arg0: i32, %arg1: i32) -> (i32, i32) {
    %c0_i32 = arith.constant 0 : i32
    %c0_i32_0 = arith.constant 0 : i32
    %c0_i32_1 = arith.constant 0 : i32
    return %c0_i32, %c0_i32_0 : i32, i32
  }
  func.func @transform_7(%arg0: i32, %arg1: i32) -> (i32, i32) {
    %c0_i32 = arith.constant 0 : i32
    %c0_i32_0 = arith.constant 0 : i32
    %c0_i32_1 = arith.constant 0 : i32
    return %c0_i32, %c0_i32_0 : i32, i32
  }
  func.func @transform_8(%arg0: i32, %arg1: i32) -> (i32, i32, i32) {
    %c0_i32 = arith.constant 0 : i32
    %c0_i32_0 = arith.constant 0 : i32
    return %arg0, %c0_i32, %arg1 : i32, i32, i32
  }
}

</mosaic_0001>

<llo_original>
// kernel: cost_volume_forward.2
$region0: #{cost_volume_forward.2}
  #allocation0 [shape = 'u32[]', space=smem, size = 0x4, offset = 0x4, fixed_abs, tag = 'smem constant byte address 0x4 - core index']
  #allocation1 [shape = 'u32[144,128]{1,0:T(1,128)}', space=vmem, size = 0x12000, scoped, tag = 'internal scratch']
  %s0 = inlined_call_operand.vmem [shape: f32[2,16,128], index: 0, kind: input, shape index: {}]
  %s1 = inlined_call_operand.vmem [shape: f32[2,16,128], index: 1, kind: input, shape index: {}]
  %s2 = inlined_call_operand.vmem [shape: f32[8,16], index: 2, kind: input, shape index: {}]
  %s3 = inlined_call_operand.vmem [shape: f32[8,1], index: 3, kind: input, shape index: {}]
  %s4 = inlined_call_operand.vmem [shape: f32[2,8,128], index: 4, kind: output, shape index: {0}]
  %s5 = inlined_call_operand.vmem [shape: f32[2,8,128], index: 5, kind: output, shape index: {1}]
  %6 = xla_tuple %s4, %s5
  %s7 = sld [smem:[#allocation0]]
  $region57: #{cost_volume_forward.2} parent=0
    _
  %s9 = ssub.s32 1, %s7
  %s10 = scalar_select 0, %s9, %s7
  loop: start=0, step=1, limit=4
  $region2: #{cost_volume_forward.2} parent=0 // loop_pre_header
    _
  $region3: #{cost_volume_forward.2} parent=0 // loop_header
    %s12 = sphi 0, %s16
    %p13 = scmp.ge.s32.totalorder %s12, 4
    %s19 = sphi 0, %s31
    %s20 = sphi 0, %s27
    %s21 = sphi 0, %s19
    %s22 = sphi 0, %s20
    %s23 = sphi 0, %s21
    %s24 = sphi 0, %s22
    %s36 = sphi 0, %s38
    %s39 = sphi 0, %s36
    %s40 = sphi 0, %s39
    %s56 = sphi 0, %s40
    %s64 = sphi 0, %s66
    %s67 = sphi 0, %s64
    %s68 = sphi 0, %s67
    %s84 = sphi 0, %s68
    %s88 = sphi 0, %s88
    %s90 = sphi 0, %s88
    %s91 = sphi 0, %s90
    %s105 = sphi 0, %s91
    %s109 = sphi 0, %s109
    %s111 = sphi 0, %s109
    %s112 = sphi 0, %s111
    %s126 = sphi 0, %s112
    %s134 = sphi 0, %s136
    %s137 = sphi 0, %s134
    %s138 = sphi 0, %s137
    %s154 = sphi 0, %s138
    %s162 = sphi 0, %s164
    %s165 = sphi 0, %s162
    %s166 = sphi 0, %s165
    %s182 = sphi 0, %s166
  $region4: #{cost_volume_forward.2} parent=0 // loop_header_branch
    %15 = sbr.rel (%p13) target = $region8
  $region5: #{cost_volume_forward.2} parent=0 // loop_body
    %s17 = ssub.s32 %s12, 1
    %s18 = ssub.s32 %s12, 2
    %s25 = sadd.s32 1, %s20
    %p26 = scmp.ge.s32.totalorder %s25, 1
    %s27 = scalar_select %p26, 0, %s25
    %s28 = sadd.s32 1, %s19
    %s29 = scalar_select %p26, %s28, %s19
    %p30 = scmp.ge.s32.totalorder %s29, 2
    %s31 = scalar_select %p30, 0, %s29
    %s32 = ssub.s32 %s19, %s31
    %s33 = ssub.s32 %s20, %s27
    %s34 = sor.u32 %s32, %s33
    %p35 = scmp.eq.s32.totalorder %s34, 0
    %s37 = sadd.s32 %s36, 1
    %s38 = scalar_select %p35, %s36, %s37
    %p41 = pneg %p35
    %p42 = scmp.eq.s32.totalorder %s12, 1
    %p43 = por %p41, %p42
    %p44 = scmp.ne.s32.totalorder %s36, %s39
    %p45 = scmp.eq.s32.totalorder %s12, 0
    %p46 = por %p44, %p45
    %p47 = scmp.ne.s32.totalorder %s36, %s39
    %p48 = scmp.eq.s32.totalorder %s17, 1
    %p49 = por %p47, %p48
    %p50 = scmp.ne.s32.totalorder %s39, %s40
    %p51 = scmp.eq.s32.totalorder %s17, 0
    %p52 = por %p50, %p51
    %p53 = scmp.ne.s32.totalorder %s39, %s40
    %p54 = scmp.eq.s32.totalorder %s18, 1
    %p55 = por %p53, %p54
    %p57 = scmp.ne.s32.totalorder %s40, %s56
    %p58 = scmp.eq.s32.totalorder %s18, 0
    %p59 = por %p57, %p58
    %s60 = ssub.s32 %s19, %s31
    %s61 = ssub.s32 %s20, %s27
    %s62 = sor.u32 %s60, %s61
    %p63 = scmp.eq.s32.totalorder %s62, 0
    %s65 = sadd.s32 %s64, 1
    %s66 = scalar_select %p63, %s64, %s65
    %p69 = pneg %p63
    %p70 = scmp.eq.s32.totalorder %s12, 1
    %p71 = por %p69, %p70
    %p72 = scmp.ne.s32.totalorder %s64, %s67
    %p73 = scmp.eq.s32.totalorder %s12, 0
    %p74 = por %p72, %p73
    %p75 = scmp.ne.s32.totalorder %s64, %s67
    %p76 = scmp.eq.s32.totalorder %s17, 1
    %p77 = por %p75, %p76
    %p78 = scmp.ne.s32.totalorder %s67, %s68
    %p79 = scmp.eq.s32.totalorder %s17, 0
    %p80 = por %p78, %p79
    %p81 = scmp.ne.s32.totalorder %s67, %s68
    %p82 = scmp.eq.s32.totalorder %s18, 1
    %p83 = por %p81, %p82
    %p85 = scmp.ne.s32.totalorder %s68, %s84
    %p86 = scmp.eq.s32.totalorder %s18, 0
    %p87 = por %p85, %p86
    %s89 = sadd.s32 %s88, 1
    %p92 = scmp.eq.s32.totalorder %s12, 1
    %p93 = scmp.ne.s32.totalorder %s88, %s90
    %p94 = scmp.eq.s32.totalorder %s12, 0
    %p95 = por %p93, %p94
    %p96 = scmp.ne.s32.totalorder %s88, %s90
    %p97 = scmp.eq.s32.totalorder %s17, 1
    %p98 = por %p96, %p97
    %p99 = scmp.ne.s32.totalorder %s90, %s91
    %p100 = scmp.eq.s32.totalorder %s17, 0
    %p101 = por %p99, %p100
    %p102 = scmp.ne.s32.totalorder %s90, %s91
    %p103 = scmp.eq.s32.totalorder %s18, 1
    %p104 = por %p102, %p103
    %p106 = scmp.ne.s32.totalorder %s91, %s105
    %p107 = scmp.eq.s32.totalorder %s18, 0
    %p108 = por %p106, %p107
    %s110 = sadd.s32 %s109, 1
    %p113 = scmp.eq.s32.totalorder %s12, 1
    %p114 = scmp.ne.s32.totalorder %s109, %s111
    %p115 = scmp.eq.s32.totalorder %s12, 0
    %p116 = por %p114, %p115
    %p117 = scmp.ne.s32.totalorder %s109, %s111
    %p118 = scmp.eq.s32.totalorder %s17, 1
    %p119 = por %p117, %p118
    %p120 = scmp.ne.s32.totalorder %s111, %s112
    %p121 = scmp.eq.s32.totalorder %s17, 0
    %p122 = por %p120, %p121
    %p123 = scmp.ne.s32.totalorder %s111, %s112
    %p124 = scmp.eq.s32.totalorder %s18, 1
    %p125 = por %p123, %p124
    %p127 = scmp.ne.s32.totalorder %s112, %s126
    %p128 = scmp.eq.s32.totalorder %s18, 0
    %p129 = por %p127, %p128
    %s130 = ssub.s32 %s19, %s31
    %s131 = ssub.s32 %s20, %s27
    %s132 = sor.u32 %s130, %s131
    %p133 = scmp.eq.s32.totalorder %s132, 0
    %s135 = sadd.s32 %s134, 1
    %s136 = scalar_select %p133, %s134, %s135
    %p139 = pneg %p133
    %p140 = scmp.eq.s32.totalorder %s12, 1
    %p141 = por %p139, %p140
    %p142 = scmp.ne.s32.totalorder %s134, %s137
    %p143 = scmp.eq.s32.totalorder %s12, 0
    %p144 = por %p142, %p143
    %p145 = scmp.ne.s32.totalorder %s134, %s137
    %p146 = scmp.eq.s32.totalorder %s17, 1
    %p147 = por %p145, %p146
    %p148 = scmp.ne.s32.totalorder %s137, %s138
    %p149 = scmp.eq.s32.totalorder %s17, 0
    %p150 = por %p148, %p149
    %p151 = scmp.ne.s32.totalorder %s137, %s138
    %p152 = scmp.eq.s32.totalorder %s18, 1
    %p153 = por %p151, %p152
    %p155 = scmp.ne.s32.totalorder %s138, %s154
    %p156 = scmp.eq.s32.totalorder %s18, 0
    %p157 = por %p155, %p156
    %s158 = ssub.s32 %s19, %s31
    %s159 = ssub.s32 %s20, %s27
    %s160 = sor.u32 %s158, %s159
    %p161 = scmp.eq.s32.totalorder %s160, 0
    %s163 = sadd.s32 %s162, 1
    %s164 = scalar_select %p161, %s162, %s163
    %p167 = pneg %p161
    %p168 = scmp.eq.s32.totalorder %s12, 1
    %p169 = por %p167, %p168
    %p170 = scmp.ne.s32.totalorder %s162, %s165
    %p171 = scmp.eq.s32.totalorder %s12, 0
    %p172 = por %p170, %p171
    %p173 = scmp.ne.s32.totalorder %s162, %s165
    %p174 = scmp.eq.s32.totalorder %s17, 1
    %p175 = por %p173, %p174
    %p176 = scmp.ne.s32.totalorder %s165, %s166
    %p177 = scmp.eq.s32.totalorder %s17, 0
    %p178 = por %p176, %p177
    %p179 = scmp.ne.s32.totalorder %s165, %s166
    %p180 = scmp.eq.s32.totalorder %s18, 1
    %p181 = por %p179, %p180
    %p183 = scmp.ne.s32.totalorder %s166, %s182
    %p184 = scmp.eq.s32.totalorder %s18, 0
    %p185 = por %p183, %p184
    %p186 = scmp.le.s32.totalorder 1, %s12
    %p187 = scmp.lt.s32.totalorder %s12, 3
    %p188 = pnand %p186, %p187
    %p189 = pneg %p188
    // Predicated region
    $region9: #{cost_volume_forward.2} parent=5 // pred_check
      _
    $region10: #{cost_volume_forward.2} parent=5 // pred_check_branch
      %191 = sbr.rel (%p188) target = $region12
    $region11: #{cost_volume_forward.2} parent=5 // pred_region
      %s192 = ssub.s32 %s12, 1
      // Predicated region
      $region13: #{cost_volume_forward.2} parent=11 // pred_check
        %p193 = pneg %p101
      $region14: #{cost_volume_forward.2} parent=11 // pred_check_branch
        %195 = sbr.rel (%p193) target = $region16
      $region15: #{cost_volume_forward.2} parent=11 // pred_region
        _
      $region16: #{cost_volume_forward.2} parent=11 // pred_fallthru
        _
      // Predicated region
      $region17: #{cost_volume_forward.2} parent=11 // pred_check
        %p196 = pneg %p122
      $region18: #{cost_volume_forward.2} parent=11 // pred_check_branch
        %198 = sbr.rel (%p196) target = $region20
      $region19: #{cost_volume_forward.2} parent=11 // pred_region
        _
      $region20: #{cost_volume_forward.2} parent=11 // pred_fallthru
        _
    $region12: #{cost_volume_forward.2} parent=5 // pred_fallthru
      _
    %p199 = scmp.lt.s32.totalorder %s12, 2
    // Predicated region
    $region21: #{cost_volume_forward.2} parent=5 // pred_check
      %p200 = pneg %p199
    $region22: #{cost_volume_forward.2} parent=5 // pred_check_branch
      %202 = sbr.rel (%p200) target = $region24
    $region23: #{cost_volume_forward.2} parent=5 // pred_region
      // Predicated region
      $region25: #{cost_volume_forward.2} parent=23 // pred_check
        %p203 = pneg %p46
      $region26: #{cost_volume_forward.2} parent=23 // pred_check_branch
        %205 = sbr.rel (%p203) target = $region28
      $region27: #{cost_volume_forward.2} parent=23 // pred_region
        %p206 = scmp.lt.s32.totalorder %s19, 1
        %s207 = scalar_select %p206, %s19, 1
        %p208 = scmp.lt.s32.totalorder %s20, 0
        %s209 = scalar_select %p208, %s20, 0
        %s210 = smul.addr %s207, 2
        %s211 = sadd.s32 %s209, %s210
        %s212 = smul.addr %s211, 8
        %s213 = scalar_lea.vmem %s0, %s212
      $region28: #{cost_volume_forward.2} parent=23 // pred_fallthru
        _
      // Predicated region
      $region29: #{cost_volume_forward.2} parent=23 // pred_check
        %p214 = pneg %p74
      $region30: #{cost_volume_forward.2} parent=23 // pred_check_branch
        %216 = sbr.rel (%p214) target = $region32
      $region31: #{cost_volume_forward.2} parent=23 // pred_region
        %p217 = scmp.lt.s32.totalorder %s19, 1
        %s218 = scalar_select %p217, %s19, 1
        %p219 = scmp.lt.s32.totalorder %s20, 0
        %s220 = scalar_select %p219, %s20, 0
        %s221 = smul.addr %s218, 2
        %s222 = sadd.s32 %s220, %s221
        %s223 = smul.addr %s222, 8
        %s224 = scalar_lea.vmem %s1, %s223
      $region32: #{cost_volume_forward.2} parent=23 // pred_fallthru
        _
    $region24: #{cost_volume_forward.2} parent=5 // pred_fallthru
      _
    %p225 = scmp.le.s32.totalorder 1, %s12
    %p226 = scmp.lt.s32.totalorder %s12, 3
    %p227 = pnand %p225, %p226
    %p228 = pneg %p227
    // Predicated region
    $region33: #{cost_volume_forward.2} parent=5 // pred_check
      _
    $region34: #{cost_volume_forward.2} parent=5 // pred_check_branch
      %230 = sbr.rel (%p227) target = $region36
    $region35: #{cost_volume_forward.2} parent=5 // pred_region
      %s231 = ssub.s32 %s12, 1
      %p232 = scmp.lt.s32.totalorder %s21, 1
      %s233 = scalar_select %p232, %s21, 1
      %p234 = scmp.lt.s32.totalorder %s22, 0
      %s235 = scalar_select %p234, %s22, 0
      %s236 = smul.addr %s233, 2
      %s237 = sadd.s32 %s235, %s236
      %s238 = smul.addr %s237, 8
      %s239 = scalar_lea.vmem %s0, %s238
      %p240 = pneg %p52
      %p241 = pneg %p49
      %p242 = scmp.lt.s32.totalorder %s21, 1
      %s243 = scalar_select %p242, %s21, 1
      %p244 = scmp.lt.s32.totalorder %s22, 0
      %s245 = scalar_select %p244, %s22, 0
      %s246 = smul.addr %s243, 2
      %s247 = sadd.s32 %s245, %s246
      %s248 = smul.addr %s247, 8
      %s249 = scalar_lea.vmem %s1, %s248
      %p250 = pneg %p80
      %p251 = pneg %p77
      %p252 = pneg %p101
      %p253 = pneg %p98
      %p254 = pneg %p122
      %p255 = pneg %p119
      %p256 = pneg %p150
      %p257 = pneg %p147
      %p258 = scmp.lt.s32.totalorder %s21, 1
      %s259 = scalar_select %p258, %s21, 1
      %p260 = scmp.lt.s32.totalorder %s22, 0
      %s261 = scalar_select %p260, %s22, 0
      %s262 = sadd.s32 %s261, %s259
      %s263 = smul.addr %s262, 8
      %s264 = scalar_lea.vmem %s4, %s263
      %p265 = pneg %p178
      %p266 = pneg %p175
      %p267 = scmp.lt.s32.totalorder %s21, 1
      %s268 = scalar_select %p267, %s21, 1
      %p269 = scmp.lt.s32.totalorder %s22, 0
      %s270 = scalar_select %p269, %s22, 0
      %s271 = sadd.s32 %s270, %s268
      %s272 = smul.addr %s271, 8
      %s273 = scalar_lea.vmem %s5, %s272
      %p274 = scmp.lt.s32.totalorder %s21, 1
      %s275 = scalar_select %p274, %s21, 1
      %p276 = scmp.lt.s32.totalorder %s22, 0
      %s277 = scalar_select %p276, %s22, 0
      %s278 = smul.addr %s275, 2
      %s279 = sadd.s32 %s277, %s278
      %s280 = smul.addr %s279, 8
      %s281 = scalar_lea.vmem %s0, %s280
      %p282 = scmp.lt.s32.totalorder %s21, 1
      %s283 = scalar_select %p282, %s21, 1
      %p284 = scmp.lt.s32.totalorder %s22, 0
      %s285 = scalar_select %p284, %s22, 0
      %s286 = smul.addr %s283, 2
      %s287 = sadd.s32 %s285, %s286
      %s288 = smul.addr %s287, 8
      %s289 = scalar_lea.vmem %s1, %s288
      %p290 = scmp.lt.s32.totalorder %s21, 1
      %s291 = scalar_select %p290, %s21, 1
      %p292 = scmp.lt.s32.totalorder %s22, 0
      %s293 = scalar_select %p292, %s22, 0
      %s294 = sadd.s32 %s293, %s291
      %s295 = smul.addr %s294, 8
      %s296 = scalar_lea.vmem %s4, %s295
      %p297 = scmp.lt.s32.totalorder %s21, 1
      %s298 = scalar_select %p297, %s21, 1
      %p299 = scmp.lt.s32.totalorder %s22, 0
      %s300 = scalar_select %p299, %s22, 0
      %s301 = sadd.s32 %s300, %s298
      %s302 = smul.addr %s301, 8
      %s303 = scalar_lea.vmem %s5, %s302
      %v304 = vld [vmem:[%s2] sm:$0xff]
      %v305 = vld [vmem:[%s3] sm:$0xff]
      %v306 = vld [vmem:[%s281] sm:$0xff]
      %v307 = vld [vmem:[%s281 + $0x8] sm:$0xff]
      %309 = vset.pattern.permute.xlu0 0
      %310 = vperm.xlu0 %309, %v305
      %v311 = vpop.permute.xlu0 %310
      %vm313 = vcmask 130048
      %v315 = vsel %vm313, %v304, 0
      %317 = vmatprep.subr.mxu0 0.0
      %318 = vmatpush1.msra.mxu0 %v306
      %319 = vmatprep.subr.mxu0 0.0
      %320 = vmatpush1.msra.mxu0 %v307
      %321 = vmatprep.subr.mxu0 0.0
      %322 = vmatpush1.msra.mxu0 0.0
      %323 = vmatprep.subr.mxu0 0.0
      %324 = vmatpush1.msra.mxu0 0.0
      %325 = vmatprep.subr.mxu0 0.0
      %326 = vmatpush1.msra.mxu0 0.0
      %327 = vmatprep.subr.mxu0 0.0
      %328 = vmatpush1.msra.mxu0 0.0
      %329 = vmatprep.subr.mxu0 0.0
      %330 = vmatpush1.msra.mxu0 0.0
      %331 = vmatprep.subr.mxu0 0.0
      %332 = vmatpush1.msra.mxu0 0.0
      %333 = vmatprep.subr.mxu0 0.0
      %334 = vmatpush1.msra.mxu0 0.0
      %335 = vmatprep.subr.mxu0 0.0
      %336 = vmatpush1.msra.mxu0 0.0
      %337 = vmatprep.subr.mxu0 0.0
      %338 = vmatpush1.msra.mxu0 0.0
      %339 = vmatprep.subr.mxu0 0.0
      %340 = vmatpush1.msra.mxu0 0.0
      %341 = vmatprep.subr.mxu0 0.0
      %342 = vmatpush1.msra.mxu0 0.0
      %343 = vmatprep.subr.mxu0 0.0
      %344 = vmatpush1.msra.mxu0 0.0
      %345 = vmatprep.subr.mxu0 0.0
      %346 = vmatpush1.msra.mxu0 0.0
      %347 = vmatprep.subr.mxu0 0.0
      %348 = vmatpush1.msra.mxu0 0.0
      %349 = vmatprep.subr.mxu0 0.0
      %350 = vmatpush1.msra.mxu0 0.0
      %351 = vmatprep.subr.mxu0 0.0
      %352 = vmatpush1.msra.mxu0 0.0
      %353 = vmatprep.subr.mxu0 0.0
      %354 = vmatpush1.msra.mxu0 0.0
      %355 = vmatprep.subr.mxu0 0.0
      %356 = vmatpush1.msra.mxu0 0.0
      %357 = vmatprep.subr.mxu0 0.0
      %358 = vmatpush1.msra.mxu0 0.0
      %359 = vmatprep.subr.mxu0 0.0
      %360 = vmatpush1.msra.mxu0 0.0
      %361 = vmatprep.subr.mxu0 0.0
      %362 = vmatpush1.msra.mxu0 0.0
      %363 = vmatprep.subr.mxu0 0.0
      %364 = vmatpush1.msra.mxu0 0.0
      %365 = vmatprep.subr.mxu0 0.0
      %366 = vmatpush1.msra.mxu0 0.0
      %367 = vmatprep.subr.mxu0 0.0
      %368 = vmatpush1.msra.mxu0 0.0
      %369 = vmatprep.subr.mxu0 0.0
      %370 = vmatpush1.msra.mxu0 0.0
      %371 = vmatprep.subr.mxu0 0.0
      %372 = vmatpush1.msra.mxu0 0.0
      %373 = vmatprep.subr.mxu0 0.0
      %374 = vmatpush1.msra.mxu0 0.0
      %375 = vmatprep.subr.mxu0 0.0
      %376 = vmatpush1.msra.mxu0 0.0
      %377 = vmatprep.subr.mxu0 0.0
      %378 = vmatpush1.msra.mxu0 0.0
      %379 = vmatprep.subr.mxu0 0.0
      %380 = vmatpush1.msra.mxu0 0.0
      %381 = vmatprep.mubr.f32.mxu0 0.0
      %382 = vmatmul.mubr.f32.gmra.mrb[0].mxu0 %v315
      %v383 = vpop.f32.mrb[0].mxu0
      %v384 = vadd.f32 %v311, %v383
      %v385 = vpop.f32.mrb[0].mxu0
      %386 = vdwg.mxu0
      %v387 = vmax.f32 %v384, 0.0
      %388 = vst [vmem:[%s296] sm:$0xff] %v387
      %v389 = vld [vmem:[%s289] sm:$0xff]
      %v390 = vld [vmem:[%s289 + $0x8] sm:$0xff]
      %391 = vmatprep.subr.mxu0 0.0
      %392 = vmatpush1.msra.mxu0 %v389
      %393 = vmatprep.subr.mxu0 0.0
      %394 = vmatpush1.msra.mxu0 %v390
      %395 = vmatprep.subr.mxu0 0.0
      %396 = vmatpush1.msra.mxu0 0.0
      %397 = vmatprep.subr.mxu0 0.0
      %398 = vmatpush1.msra.mxu0 0.0
      %399 = vmatprep.subr.mxu0 0.0
      %400 = vmatpush1.msra.mxu0 0.0
      %401 = vmatprep.subr.mxu0 0.0
      %402 = vmatpush1.msra.mxu0 0.0
      %403 = vmatprep.subr.mxu0 0.0
      %404 = vmatpush1.msra.mxu0 0.0
      %405 = vmatprep.subr.mxu0 0.0
      %406 = vmatpush1.msra.mxu0 0.0
      %407 = vmatprep.subr.mxu0 0.0
      %408 = vmatpush1.msra.mxu0 0.0
      %409 = vmatprep.subr.mxu0 0.0
      %410 = vmatpush1.msra.mxu0 0.0
      %411 = vmatprep.subr.mxu0 0.0
      %412 = vmatpush1.msra.mxu0 0.0
      %413 = vmatprep.subr.mxu0 0.0
      %414 = vmatpush1.msra.mxu0 0.0
      %415 = vmatprep.subr.mxu0 0.0
      %416 = vmatpush1.msra.mxu0 0.0
      %417 = vmatprep.subr.mxu0 0.0
      %418 = vmatpush1.msra.mxu0 0.0
      %419 = vmatprep.subr.mxu0 0.0
      %420 = vmatpush1.msra.mxu0 0.0
      %421 = vmatprep.subr.mxu0 0.0
      %422 = vmatpush1.msra.mxu0 0.0
      %423 = vmatprep.subr.mxu0 0.0
      %424 = vmatpush1.msra.mxu0 0.0
      %425 = vmatprep.subr.mxu0 0.0
      %426 = vmatpush1.msra.mxu0 0.0
      %427 = vmatprep.subr.mxu0 0.0
      %428 = vmatpush1.msra.mxu0 0.0
      %429 = vmatprep.subr.mxu0 0.0
      %430 = vmatpush1.msra.mxu0 0.0
      %431 = vmatprep.subr.mxu0 0.0
      %432 = vmatpush1.msra.mxu0 0.0
      %433 = vmatprep.subr.mxu0 0.0
      %434 = vmatpush1.msra.mxu0 0.0
      %435 = vmatprep.subr.mxu0 0.0
      %436 = vmatpush1.msra.mxu0 0.0
      %437 = vmatprep.subr.mxu0 0.0
      %438 = vmatpush1.msra.mxu0 0.0
      %439 = vmatprep.subr.mxu0 0.0
      %440 = vmatpush1.msra.mxu0 0.0
      %441 = vmatprep.subr.mxu0 0.0
      %442 = vmatpush1.msra.mxu0 0.0
      %443 = vmatprep.subr.mxu0 0.0
      %444 = vmatpush1.msra.mxu0 0.0
      %445 = vmatprep.subr.mxu0 0.0
      %446 = vmatpush1.msra.mxu0 0.0
      %447 = vmatprep.subr.mxu0 0.0
      %448 = vmatpush1.msra.mxu0 0.0
      %449 = vmatprep.subr.mxu0 0.0
      %450 = vmatpush1.msra.mxu0 0.0
      %451 = vmatprep.subr.mxu0 0.0
      %452 = vmatpush1.msra.mxu0 0.0
      %453 = vmatprep.subr.mxu0 0.0
      %454 = vmatpush1.msra.mxu0 0.0
      %455 = vmatprep.mubr.f32.mxu0 0.0
      %456 = vmatmul.mubr.f32.gmra.mrb[0].mxu0 %v315
      %v457 = vpop.f32.mrb[0].mxu0
      %v458 = vadd.f32 %v311, %v457
      %v459 = vpop.f32.mrb[0].mxu0
      %460 = vdwg.mxu0
      %v461 = vmax.f32 %v458, 0.0
      %462 = vst [vmem:[%s303] sm:$0xff] %v461
      %p463 = scmp.lt.s32.totalorder %s21, 1
      %s464 = scalar_select %p463, %s21, 1
      %p465 = scmp.lt.s32.totalorder %s22, 0
      %s466 = scalar_select %p465, %s22, 0
      %s467 = sadd.s32 %s466, %s464
      %s468 = smul.addr %s467, 8
      %s469 = scalar_lea.vmem %s4, %s468
      %p470 = scmp.lt.s32.totalorder %s21, 1
      %s471 = scalar_select %p470, %s21, 1
      %p472 = scmp.lt.s32.totalorder %s22, 0
      %s473 = scalar_select %p472, %s22, 0
      %s474 = sadd.s32 %s473, %s471
      %s475 = smul.addr %s474, 8
      %s476 = scalar_lea.vmem %s5, %s475
      // Predicated region
      $region37: #{cost_volume_forward.2} parent=35 // pred_check
        %p477 = pneg %p147
      $region38: #{cost_volume_forward.2} parent=35 // pred_check_branch
        %479 = sbr.rel (%p477) target = $region40
      $region39: #{cost_volume_forward.2} parent=35 // pred_region
        _
      $region40: #{cost_volume_forward.2} parent=35 // pred_fallthru
        _
      // Predicated region
      $region41: #{cost_volume_forward.2} parent=35 // pred_check
        %p480 = pneg %p175
      $region42: #{cost_volume_forward.2} parent=35 // pred_check_branch
        %482 = sbr.rel (%p480) target = $region44
      $region43: #{cost_volume_forward.2} parent=35 // pred_region
        _
      $region44: #{cost_volume_forward.2} parent=35 // pred_fallthru
        _
    $region36: #{cost_volume_forward.2} parent=5 // pred_fallthru
      _
    %p483 = scmp.le.s32.totalorder 2, %s12
    // Predicated region
    $region45: #{cost_volume_forward.2} parent=5 // pred_check
      %p484 = pneg %p483
    $region46: #{cost_volume_forward.2} parent=5 // pred_check_branch
      %486 = sbr.rel (%p484) target = $region48
    $region47: #{cost_volume_forward.2} parent=5 // pred_region
      %s487 = ssub.s32 %s12, 2
      // Predicated region
      $region49: #{cost_volume_forward.2} parent=47 // pred_check
        %p488 = pneg %p153
      $region50: #{cost_volume_forward.2} parent=47 // pred_check_branch
        %490 = sbr.rel (%p488) target = $region52
      $region51: #{cost_volume_forward.2} parent=47 // pred_region
        %p491 = scmp.lt.s32.totalorder %s23, 1
        %s492 = scalar_select %p491, %s23, 1
        %p493 = scmp.lt.s32.totalorder %s24, 0
        %s494 = scalar_select %p493, %s24, 0
        %s495 = sadd.s32 %s494, %s492
        %s496 = smul.addr %s495, 8
        %s497 = scalar_lea.vmem %s4, %s496
      $region52: #{cost_volume_forward.2} parent=47 // pred_fallthru
        _
      // Predicated region
      $region53: #{cost_volume_forward.2} parent=47 // pred_check
        %p498 = pneg %p181
      $region54: #{cost_volume_forward.2} parent=47 // pred_check_branch
        %500 = sbr.rel (%p498) target = $region56
      $region55: #{cost_volume_forward.2} parent=47 // pred_region
        %p501 = scmp.lt.s32.totalorder %s23, 1
        %s502 = scalar_select %p501, %s23, 1
        %p503 = scmp.lt.s32.totalorder %s24, 0
        %s504 = scalar_select %p503, %s24, 0
        %s505 = sadd.s32 %s504, %s502
        %s506 = smul.addr %s505, 8
        %s507 = scalar_lea.vmem %s5, %s506
      $region56: #{cost_volume_forward.2} parent=47 // pred_fallthru
        _
    $region48: #{cost_volume_forward.2} parent=5 // pred_fallthru
      _
  $region6: #{cost_volume_forward.2} parent=0 // loop_footer
    %s16 = sadd.s32 1, %s12
  $region7: #{cost_volume_forward.2} parent=0 // loop_footer_branch
    %11 = sbr.rel target = $region3
  $region8: #{cost_volume_forward.2} parent=0 // loop_exit
    _

// kernel: cost_volume_forward.3
$region0: #{cost_volume_forward.3}
  #allocation0 [shape = 'u32[]', space=smem, size = 0x4, offset = 0x4, fixed_abs, tag = 'smem constant byte address 0x4 - core index']
  #allocation1 [shape = 'u32[144,128]{1,0:T(1,128)}', space=vmem, size = 0x12000, scoped, tag = 'internal scratch']
  #allocation2 [shape = 'f32[3,8,128]{2,1,0:T(8,128)}', space=vmem, size = 0x3000, scoped, tag = 'scratch operand']
  #allocation3 [shape = 'f32[432,128]{1,0:T(8,128)}', space=vmem, size = 0x36000, scoped, tag = 'scratch operand']
  #allocation4 [shape = 'f32[216,128]{1,0:T(8,128)}', space=vmem, size = 0x1b000, scoped, tag = 'scratch operand']
  %s0 = inlined_call_operand.vmem [shape: f32[2,8,128], index: 0, kind: input, shape index: {}]
  %s1 = inlined_call_operand.vmem [shape: f32[2,8,128], index: 1, kind: input, shape index: {}]
  %s2 = inlined_call_operand.vmem [shape: s32[1,128], index: 2, kind: input, shape index: {}]
  %s3 = inlined_call_operand.vmem [shape: s32[1,128], index: 3, kind: input, shape index: {}]
  %s4 = inlined_call_operand.vmem [shape: f32[8,432], index: 4, kind: input, shape index: {}]
  %s5 = inlined_call_operand.vmem [shape: f32[8,1], index: 5, kind: input, shape index: {}]
  %s6 = inlined_call_operand.vmem [shape: f32[8,216], index: 6, kind: input, shape index: {}]
  %s7 = inlined_call_operand.vmem [shape: f32[8,1], index: 7, kind: input, shape index: {}]
  %s8 = inlined_call_operand.vmem [shape: f32[2,8,512], index: 8, kind: output, shape index: {}]
  %s9 = sld [smem:[#allocation0]]
  $region85: #{cost_volume_forward.3} parent=0
    _
  %s11 = ssub.s32 1, %s9
  %s12 = scalar_select 0, %s11, %s9
  loop: start=0, step=1, limit=10
  $region2: #{cost_volume_forward.3} parent=0 // loop_pre_header
    _
  $region3: #{cost_volume_forward.3} parent=0 // loop_header
    %s14 = sphi 0, %s18
    %p15 = scmp.ge.s32.totalorder %s14, 10
    %s21 = sphi 0, %s33
    %s22 = sphi 0, %s29
    %s23 = sphi 0, %s21
    %s24 = sphi 0, %s22
    %s25 = sphi 0, %s23
    %s26 = sphi 0, %s24
    %s36 = sphi 0, %s38
    %s39 = sphi 0, %s36
    %s40 = sphi 0, %s39
    %s56 = sphi 0, %s40
    %s62 = sphi 0, %s64
    %s65 = sphi 0, %s62
    %s66 = sphi 0, %s65
    %s82 = sphi 0, %s66
    %s86 = sphi 0, %s86
    %s88 = sphi 0, %s86
    %s89 = sphi 0, %s88
    %s103 = sphi 0, %s89
    %s107 = sphi 0, %s107
    %s109 = sphi 0, %s107
    %s110 = sphi 0, %s109
    %s124 = sphi 0, %s110
    %s128 = sphi 0, %s128
    %s130 = sphi 0, %s128
    %s131 = sphi 0, %s130
    %s145 = sphi 0, %s131
    %s149 = sphi 0, %s149
    %s151 = sphi 0, %s149
    %s152 = sphi 0, %s151
    %s166 = sphi 0, %s152
    %s170 = sphi 0, %s170
    %s172 = sphi 0, %s170
    %s173 = sphi 0, %s172
    %s187 = sphi 0, %s173
    %s191 = sphi 0, %s191
    %s193 = sphi 0, %s191
    %s194 = sphi 0, %s193
    %s208 = sphi 0, %s194
    %s216 = sphi 0, %s218
    %s219 = sphi 0, %s216
    %s220 = sphi 0, %s219
    %s236 = sphi 0, %s220
  $region4: #{cost_volume_forward.3} parent=0 // loop_header_branch
    %17 = sbr.rel (%p15) target = $region8
  $region5: #{cost_volume_forward.3} parent=0 // loop_body
    %s19 = ssub.s32 %s14, 1
    %s20 = ssub.s32 %s14, 2
    %s27 = sadd.s32 1, %s22
    %p28 = scmp.ge.s32.totalorder %s27, 4
    %s29 = scalar_select %p28, 0, %s27
    %s30 = sadd.s32 1, %s21
    %s31 = scalar_select %p28, %s30, %s21
    %p32 = scmp.ge.s32.totalorder %s31, 2
    %s33 = scalar_select %p32, 0, %s31
    %s34 = ssub.s32 %s21, %s33
    %p35 = scmp.eq.s32.totalorder %s34, 0
    %s37 = sadd.s32 %s36, 1
    %s38 = scalar_select %p35, %s36, %s37
    %p41 = pneg %p35
    %p42 = scmp.eq.s32.totalorder %s14, 7
    %p43 = por %p41, %p42
    %p44 = scmp.ne.s32.totalorder %s36, %s39
    %p45 = scmp.eq.s32.totalorder %s14, 0
    %p46 = por %p44, %p45
    %p47 = scmp.ne.s32.totalorder %s36, %s39
    %p48 = scmp.eq.s32.totalorder %s19, 7
    %p49 = por %p47, %p48
    %p50 = scmp.ne.s32.totalorder %s39, %s40
    %p51 = scmp.eq.s32.totalorder %s19, 0
    %p52 = por %p50, %p51
    %p53 = scmp.ne.s32.totalorder %s39, %s40
    %p54 = scmp.eq.s32.totalorder %s20, 7
    %p55 = por %p53, %p54
    %p57 = scmp.ne.s32.totalorder %s40, %s56
    %p58 = scmp.eq.s32.totalorder %s20, 0
    %p59 = por %p57, %p58
    %s60 = ssub.s32 %s21, %s33
    %p61 = scmp.eq.s32.totalorder %s60, 0
    %s63 = sadd.s32 %s62, 1
    %s64 = scalar_select %p61, %s62, %s63
    %p67 = pneg %p61
    %p68 = scmp.eq.s32.totalorder %s14, 7
    %p69 = por %p67, %p68
    %p70 = scmp.ne.s32.totalorder %s62, %s65
    %p71 = scmp.eq.s32.totalorder %s14, 0
    %p72 = por %p70, %p71
    %p73 = scmp.ne.s32.totalorder %s62, %s65
    %p74 = scmp.eq.s32.totalorder %s19, 7
    %p75 = por %p73, %p74
    %p76 = scmp.ne.s32.totalorder %s65, %s66
    %p77 = scmp.eq.s32.totalorder %s19, 0
    %p78 = por %p76, %p77
    %p79 = scmp.ne.s32.totalorder %s65, %s66
    %p80 = scmp.eq.s32.totalorder %s20, 7
    %p81 = por %p79, %p80
    %p83 = scmp.ne.s32.totalorder %s66, %s82
    %p84 = scmp.eq.s32.totalorder %s20, 0
    %p85 = por %p83, %p84
    %s87 = sadd.s32 %s86, 1
    %p90 = scmp.eq.s32.totalorder %s14, 7
    %p91 = scmp.ne.s32.totalorder %s86, %s88
    %p92 = scmp.eq.s32.totalorder %s14, 0
    %p93 = por %p91, %p92
    %p94 = scmp.ne.s32.totalorder %s86, %s88
    %p95 = scmp.eq.s32.totalorder %s19, 7
    %p96 = por %p94, %p95
    %p97 = scmp.ne.s32.totalorder %s88, %s89
    %p98 = scmp.eq.s32.totalorder %s19, 0
    %p99 = por %p97, %p98
    %p100 = scmp.ne.s32.totalorder %s88, %s89
    %p101 = scmp.eq.s32.totalorder %s20, 7
    %p102 = por %p100, %p101
    %p104 = scmp.ne.s32.totalorder %s89, %s103
    %p105 = scmp.eq.s32.totalorder %s20, 0
    %p106 = por %p104, %p105
    %s108 = sadd.s32 %s107, 1
    %p111 = scmp.eq.s32.totalorder %s14, 7
    %p112 = scmp.ne.s32.totalorder %s107, %s109
    %p113 = scmp.eq.s32.totalorder %s14, 0
    %p114 = por %p112, %p113
    %p115 = scmp.ne.s32.totalorder %s107, %s109
    %p116 = scmp.eq.s32.totalorder %s19, 7
    %p117 = por %p115, %p116
    %p118 = scmp.ne.s32.totalorder %s109, %s110
    %p119 = scmp.eq.s32.totalorder %s19, 0
    %p120 = por %p118, %p119
    %p121 = scmp.ne.s32.totalorder %s109, %s110
    %p122 = scmp.eq.s32.totalorder %s20, 7
    %p123 = por %p121, %p122
    %p125 = scmp.ne.s32.totalorder %s110, %s124
    %p126 = scmp.eq.s32.totalorder %s20, 0
    %p127 = por %p125, %p126
    %s129 = sadd.s32 %s128, 1
    %p132 = scmp.eq.s32.totalorder %s14, 7
    %p133 = scmp.ne.s32.totalorder %s128, %s130
    %p134 = scmp.eq.s32.totalorder %s14, 0
    %p135 = por %p133, %p134
    %p136 = scmp.ne.s32.totalorder %s128, %s130
    %p137 = scmp.eq.s32.totalorder %s19, 7
    %p138 = por %p136, %p137
    %p139 = scmp.ne.s32.totalorder %s130, %s131
    %p140 = scmp.eq.s32.totalorder %s19, 0
    %p141 = por %p139, %p140
    %p142 = scmp.ne.s32.totalorder %s130, %s131
    %p143 = scmp.eq.s32.totalorder %s20, 7
    %p144 = por %p142, %p143
    %p146 = scmp.ne.s32.totalorder %s131, %s145
    %p147 = scmp.eq.s32.totalorder %s20, 0
    %p148 = por %p146, %p147
    %s150 = sadd.s32 %s149, 1
    %p153 = scmp.eq.s32.totalorder %s14, 7
    %p154 = scmp.ne.s32.totalorder %s149, %s151
    %p155 = scmp.eq.s32.totalorder %s14, 0
    %p156 = por %p154, %p155
    %p157 = scmp.ne.s32.totalorder %s149, %s151
    %p158 = scmp.eq.s32.totalorder %s19, 7
    %p159 = por %p157, %p158
    %p160 = scmp.ne.s32.totalorder %s151, %s152
    %p161 = scmp.eq.s32.totalorder %s19, 0
    %p162 = por %p160, %p161
    %p163 = scmp.ne.s32.totalorder %s151, %s152
    %p164 = scmp.eq.s32.totalorder %s20, 7
    %p165 = por %p163, %p164
    %p167 = scmp.ne.s32.totalorder %s152, %s166
    %p168 = scmp.eq.s32.totalorder %s20, 0
    %p169 = por %p167, %p168
    %s171 = sadd.s32 %s170, 1
    %p174 = scmp.eq.s32.totalorder %s14, 7
    %p175 = scmp.ne.s32.totalorder %s170, %s172
    %p176 = scmp.eq.s32.totalorder %s14, 0
    %p177 = por %p175, %p176
    %p178 = scmp.ne.s32.totalorder %s170, %s172
    %p179 = scmp.eq.s32.totalorder %s19, 7
    %p180 = por %p178, %p179
    %p181 = scmp.ne.s32.totalorder %s172, %s173
    %p182 = scmp.eq.s32.totalorder %s19, 0
    %p183 = por %p181, %p182
    %p184 = scmp.ne.s32.totalorder %s172, %s173
    %p185 = scmp.eq.s32.totalorder %s20, 7
    %p186 = por %p184, %p185
    %p188 = scmp.ne.s32.totalorder %s173, %s187
    %p189 = scmp.eq.s32.totalorder %s20, 0
    %p190 = por %p188, %p189
    %s192 = sadd.s32 %s191, 1
    %p195 = scmp.eq.s32.totalorder %s14, 7
    %p196 = scmp.ne.s32.totalorder %s191, %s193
    %p197 = scmp.eq.s32.totalorder %s14, 0
    %p198 = por %p196, %p197
    %p199 = scmp.ne.s32.totalorder %s191, %s193
    %p200 = scmp.eq.s32.totalorder %s19, 7
    %p201 = por %p199, %p200
    %p202 = scmp.ne.s32.totalorder %s193, %s194
    %p203 = scmp.eq.s32.totalorder %s19, 0
    %p204 = por %p202, %p203
    %p205 = scmp.ne.s32.totalorder %s193, %s194
    %p206 = scmp.eq.s32.totalorder %s20, 7
    %p207 = por %p205, %p206
    %p209 = scmp.ne.s32.totalorder %s194, %s208
    %p210 = scmp.eq.s32.totalorder %s20, 0
    %p211 = por %p209, %p210
    %s212 = ssub.s32 %s21, %s33
    %s213 = ssub.s32 %s22, %s29
    %s214 = sor.u32 %s212, %s213
    %p215 = scmp.eq.s32.totalorder %s214, 0
    %s217 = sadd.s32 %s216, 1
    %s218 = scalar_select %p215, %s216, %s217
    %p221 = pneg %p215
    %p222 = scmp.eq.s32.totalorder %s14, 7
    %p223 = por %p221, %p222
    %p224 = scmp.ne.s32.totalorder %s216, %s219
    %p225 = scmp.eq.s32.totalorder %s14, 0
    %p226 = por %p224, %p225
    %p227 = scmp.ne.s32.totalorder %s216, %s219
    %p228 = scmp.eq.s32.totalorder %s19, 7
    %p229 = por %p227, %p228
    %p230 = scmp.ne.s32.totalorder %s219, %s220
    %p231 = scmp.eq.s32.totalorder %s19, 0
    %p232 = por %p230, %p231
    %p233 = scmp.ne.s32.totalorder %s219, %s220
    %p234 = scmp.eq.s32.totalorder %s20, 7
    %p235 = por %p233, %p234
    %p237 = scmp.ne.s32.totalorder %s220, %s236
    %p238 = scmp.eq.s32.totalorder %s20, 0
    %p239 = por %p237, %p238
    %p240 = scmp.le.s32.totalorder 1, %s14
    %p241 = scmp.lt.s32.totalorder %s14, 9
    %p242 = pnand %p240, %p241
    %p243 = pneg %p242
    // Predicated region
    $region9: #{cost_volume_forward.3} parent=5 // pred_check
      _
    $region10: #{cost_volume_forward.3} parent=5 // pred_check_branch
      %245 = sbr.rel (%p242) target = $region12
    $region11: #{cost_volume_forward.3} parent=5 // pred_region
      %s246 = ssub.s32 %s14, 1
      // Predicated region
      $region13: #{cost_volume_forward.3} parent=11 // pred_check
        %p247 = pneg %p99
      $region14: #{cost_volume_forward.3} parent=11 // pred_check_branch
        %249 = sbr.rel (%p247) target = $region16
      $region15: #{cost_volume_forward.3} parent=11 // pred_region
        _
      $region16: #{cost_volume_forward.3} parent=11 // pred_fallthru
        _
      // Predicated region
      $region17: #{cost_volume_forward.3} parent=11 // pred_check
        %p250 = pneg %p120
      $region18: #{cost_volume_forward.3} parent=11 // pred_check_branch
        %252 = sbr.rel (%p250) target = $region20
      $region19: #{cost_volume_forward.3} parent=11 // pred_region
        _
      $region20: #{cost_volume_forward.3} parent=11 // pred_fallthru
        _
      // Predicated region
      $region21: #{cost_volume_forward.3} parent=11 // pred_check
        %p253 = pneg %p141
      $region22: #{cost_volume_forward.3} parent=11 // pred_check_branch
        %255 = sbr.rel (%p253) target = $region24
      $region23: #{cost_volume_forward.3} parent=11 // pred_region
        _
      $region24: #{cost_volume_forward.3} parent=11 // pred_fallthru
        _
      // Predicated region
      $region25: #{cost_volume_forward.3} parent=11 // pred_check
        %p256 = pneg %p162
      $region26: #{cost_volume_forward.3} parent=11 // pred_check_branch
        %258 = sbr.rel (%p256) target = $region28
      $region27: #{cost_volume_forward.3} parent=11 // pred_region
        _
      $region28: #{cost_volume_forward.3} parent=11 // pred_fallthru
        _
      // Predicated region
      $region29: #{cost_volume_forward.3} parent=11 // pred_check
        %p259 = pneg %p183
      $region30: #{cost_volume_forward.3} parent=11 // pred_check_branch
        %261 = sbr.rel (%p259) target = $region32
      $region31: #{cost_volume_forward.3} parent=11 // pred_region
        _
      $region32: #{cost_volume_forward.3} parent=11 // pred_fallthru
        _
      // Predicated region
      $region33: #{cost_volume_forward.3} parent=11 // pred_check
        %p262 = pneg %p204
      $region34: #{cost_volume_forward.3} parent=11 // pred_check_branch
        %264 = sbr.rel (%p262) target = $region36
      $region35: #{cost_volume_forward.3} parent=11 // pred_region
        _
      $region36: #{cost_volume_forward.3} parent=11 // pred_fallthru
        _
    $region12: #{cost_volume_forward.3} parent=5 // pred_fallthru
      _
    %p265 = scmp.lt.s32.totalorder %s14, 8
    // Predicated region
    $region37: #{cost_volume_forward.3} parent=5 // pred_check
      %p266 = pneg %p265
    $region38: #{cost_volume_forward.3} parent=5 // pred_check_branch
      %268 = sbr.rel (%p266) target = $region40
    $region39: #{cost_volume_forward.3} parent=5 // pred_region
      // Predicated region
      $region41: #{cost_volume_forward.3} parent=39 // pred_check
        %p269 = pneg %p46
      $region42: #{cost_volume_forward.3} parent=39 // pred_check_branch
        %271 = sbr.rel (%p269) target = $region44
      $region43: #{cost_volume_forward.3} parent=39 // pred_region
        %p272 = scmp.lt.s32.totalorder %s21, 1
        %s273 = scalar_select %p272, %s21, 1
        %s274 = smul.addr %s273, 8
        %s275 = scalar_lea.vmem %s0, %s274
      $region44: #{cost_volume_forward.3} parent=39 // pred_fallthru
        _
      // Predicated region
      $region45: #{cost_volume_forward.3} parent=39 // pred_check
        %p276 = pneg %p72
      $region46: #{cost_volume_forward.3} parent=39 // pred_check_branch
        %278 = sbr.rel (%p276) target = $region48
      $region47: #{cost_volume_forward.3} parent=39 // pred_region
        %p279 = scmp.lt.s32.totalorder %s21, 1
        %s280 = scalar_select %p279, %s21, 1
        %s281 = smul.addr %s280, 8
        %s282 = scalar_lea.vmem %s1, %s281
      $region48: #{cost_volume_forward.3} parent=39 // pred_fallthru
        _
    $region40: #{cost_volume_forward.3} parent=5 // pred_fallthru
      _
    %p283 = scmp.le.s32.totalorder 1, %s14
    %p284 = scmp.lt.s32.totalorder %s14, 9
    %p285 = pnand %p283, %p284
    %p286 = pneg %p285
    // Predicated region
    $region49: #{cost_volume_forward.3} parent=5 // pred_check
      _
    $region50: #{cost_volume_forward.3} parent=5 // pred_check_branch
      %288 = sbr.rel (%p285) target = $region52
    $region51: #{cost_volume_forward.3} parent=5 // pred_region
      %s289 = ssub.s32 %s14, 1
      %p290 = scmp.lt.s32.totalorder %s23, 1
      %s291 = scalar_select %p290, %s23, 1
      %s292 = smul.addr %s291, 8
      %s293 = scalar_lea.vmem %s0, %s292
      %p294 = pneg %p52
      %p295 = pneg %p49
      %p296 = scmp.lt.s32.totalorder %s23, 1
      %s297 = scalar_select %p296, %s23, 1
      %s298 = smul.addr %s297, 8
      %s299 = scalar_lea.vmem %s1, %s298
      %p300 = pneg %p78
      %p301 = pneg %p75
      %p302 = pneg %p99
      %p303 = pneg %p96
      %p304 = pneg %p120
      %p305 = pneg %p117
      %p306 = pneg %p141
      %p307 = pneg %p138
      %p308 = pneg %p162
      %p309 = pneg %p159
      %p310 = pneg %p183
      %p311 = pneg %p180
      %p312 = pneg %p204
      %p313 = pneg %p201
      %p314 = pneg %p232
      %p315 = pneg %p229
      %p316 = scmp.lt.s32.totalorder %s23, 1
      %s317 = scalar_select %p316, %s23, 1
      %p318 = scmp.lt.s32.totalorder %s24, 3
      %s319 = scalar_select %p318, %s24, 3
      %s320 = smul.addr %s317, 4
      %s321 = sadd.s32 %s319, %s320
      %s322 = smul.addr %s321, 8
      %s323 = scalar_lea.vmem %s8, %s322
      %p324 = scmp.lt.s32.totalorder %s23, 1
      %s325 = scalar_select %p324, %s23, 1
      %s326 = smul.addr %s325, 8
      %s327 = scalar_lea.vmem %s0, %s326
      %p328 = scmp.lt.s32.totalorder %s23, 1
      %s329 = scalar_select %p328, %s23, 1
      %s330 = smul.addr %s329, 8
      %s331 = scalar_lea.vmem %s1, %s330
      %p332 = scmp.lt.s32.totalorder %s23, 1
      %s333 = scalar_select %p332, %s23, 1
      %p334 = scmp.lt.s32.totalorder %s24, 3
      %s335 = scalar_select %p334, %s24, 3
      %s336 = smul.addr %s333, 4
      %s337 = sadd.s32 %s335, %s336
      %s338 = smul.addr %s337, 8
      %s339 = scalar_lea.vmem %s8, %s338
      %v340 = vld [vmem:[%s2] sm:$0x1]
      %v341 = vld [vmem:[%s3] sm:$0x1]
      %v342 = vadd.s32 %v340, 4294967295
      %vm343 = vcmp.ge.s32.totalorder %v342, 0
      %vm344 = vcmp.le.s32.totalorder %v342, 7
      %vm345 = vmand %vm343, %vm344
      %v346 = vadd.s32 %v341, 4294967295
      %vm347 = vcmp.ge.s32.totalorder %v346, 0
      %vm348 = vmand %vm345, %vm347
      %vm349 = vcmp.le.s32.totalorder %v346, 15
      %vm350 = vmand %vm348, %vm349
      %v351 = vsel %vm350, 1, 0
      %v352 = vcvt.s32.f32 %v351
      %vm353 = vcmp.ge.s32.totalorder %v341, 0
      %vm354 = vmand %vm345, %vm353
      %vm355 = vcmp.le.s32.totalorder %v341, 15
      %vm356 = vmand %vm354, %vm355
      %v357 = vsel %vm356, 1, 0
      %v358 = vcvt.s32.f32 %v357
      %v359 = vadd.s32 %v341, 1
      %vm360 = vcmp.ge.s32.totalorder %v359, 0
      %vm361 = vmand %vm345, %vm360
      %vm362 = vcmp.le.s32.totalorder %v359, 15
      %vm363 = vmand %vm361, %vm362
      %v364 = vsel %vm363, 1, 0
      %v365 = vcvt.s32.f32 %v364
      %vm366 = vcmp.ge.s32.totalorder %v340, 0
      %vm367 = vcmp.le.s32.totalorder %v340, 7
      %vm368 = vmand %vm366, %vm367
      %vm369 = vmand %vm368, %vm347
      %vm370 = vmand %vm369, %vm349
      %v371 = vsel %vm370, 1, 0
      %v372 = vcvt.s32.f32 %v371
      %vm373 = vmand %vm368, %vm353
      %vm374 = vmand %vm373, %vm355
      %v375 = vsel %vm374, 1, 0
      %v376 = vcvt.s32.f32 %v375
      %vm377 = vmand %vm368, %vm360
      %vm378 = vmand %vm377, %vm362
      %v379 = vsel %vm378, 1, 0
      %v380 = vcvt.s32.f32 %v379
      %v381 = vadd.s32 %v340, 1
      %vm382 = vcmp.ge.s32.totalorder %v381, 0
      %vm383 = vcmp.le.s32.totalorder %v381, 7
      %vm384 = vmand %vm382, %vm383
      %vm385 = vmand %vm384, %vm347
      %vm386 = vmand %vm385, %vm349
      %v387 = vsel %vm386, 1, 0
      %v388 = vcvt.s32.f32 %v387
      %vm389 = vmand %vm384, %vm353
      %vm390 = vmand %vm389, %vm355
      %v391 = vsel %vm390, 1, 0
      %v392 = vcvt.s32.f32 %v391
      %vm393 = vmand %vm384, %vm360
      %vm394 = vmand %vm393, %vm362
      %v395 = vsel %vm394, 1, 0
      %v396 = vcvt.s32.f32 %v395
      %v397 = vld [vmem:[%s327] sm:$0xff]
      %v398 = vld [vmem:[%s331] sm:$0xff]
      %p399 = scmp.eq.s32.totalorder %s24, 0
      // Predicated region
      $region53: #{cost_volume_forward.3} parent=51 // pred_check
        %p400 = pneg %p399
      $region54: #{cost_volume_forward.3} parent=51 // pred_check_branch
        %402 = sbr.rel (%p400) target = $region56
      $region55: #{cost_volume_forward.3} parent=51 // pred_region
        %s403 = scalar_lea.vmem [#allocation2], 16
        %404 = vst [vmem:[%s403] sm:$0xff] 0.0
        %v405 = vmul.f32 %v397, 0.0
        %406 = vrot.lane.b32.xlu0 %v398, 127
        %v407 = vpop.permute.xlu0 %406
        %v408 = vmul.f32 %v407, 0.0
        %409 = vrot.lane.b32.xlu0 %v405, 17
        %v410 = vpop.permute.xlu0 %409
        %v412 = vlaneseq
        %v413 = vshrl.u32 %v412, 7
        %v414 = vsub.s32 0, %v413
        %v415 = vrot.slane %v352, %v414
        %v417 = vmul.f32 %v410, %v415
        %418 = vst [vmem:[#allocation3] sm:$0xff] %v417
        %419 = vrot.lane.b32.xlu0 %v408, 17
        %v420 = vpop.permute.xlu0 %419
        %v421 = vmul.f32 %v420, %v415
        %422 = vst [vmem:[#allocation3 + $0x8] sm:$0xff] %v421
        %423 = vrot.lane.b32.xlu0 %v405, 16
        %v424 = vpop.permute.xlu0 %423
        %v426 = vlaneseq
        %v427 = vshrl.u32 %v426, 7
        %v428 = vsub.s32 0, %v427
        %v429 = vrot.slane %v358, %v428
        %v431 = vmul.f32 %v424, %v429
        %432 = vst [vmem:[#allocation3 + $0x10] sm:$0xff] %v431
        %433 = vrot.lane.b32.xlu0 %v408, 16
        %v434 = vpop.permute.xlu0 %433
        %v435 = vmul.f32 %v434, %v429
        %436 = vst [vmem:[#allocation3 + $0x18] sm:$0xff] %v435
        %437 = vrot.lane.b32.xlu0 %v405, 15
        %v438 = vpop.permute.xlu0 %437
        %v440 = vlaneseq
        %v441 = vshrl.u32 %v440, 7
        %v442 = vsub.s32 0, %v441
        %v443 = vrot.slane %v365, %v442
        %v445 = vmul.f32 %v438, %v443
        %446 = vst [vmem:[#allocation3 + $0x20] sm:$0xff] %v445
        %447 = vrot.lane.b32.xlu0 %v408, 15
        %v448 = vpop.permute.xlu0 %447
        %v449 = vmul.f32 %v448, %v443
        %450 = vst [vmem:[#allocation3 + $0x28] sm:$0xff] %v449
        %451 = vrot.lane.b32.xlu0 %v405, 1
        %v452 = vpop.permute.xlu0 %451
        %v454 = vlaneseq
        %v455 = vshrl.u32 %v454, 7
        %v456 = vsub.s32 0, %v455
        %v457 = vrot.slane %v372, %v456
        %v459 = vmul.f32 %v452, %v457
        %460 = vst [vmem:[#allocation3 + $0x30] sm:$0xff] %v459
        %461 = vrot.lane.b32.xlu0 %v408, 1
        %v462 = vpop.permute.xlu0 %461
        %v463 = vmul.f32 %v462, %v457
        %464 = vst [vmem:[#allocation3 + $0x38] sm:$0xff] %v463
        %v466 = vlaneseq
        %v467 = vshrl.u32 %v466, 7
        %v468 = vsub.s32 0, %v467
        %v469 = vrot.slane %v376, %v468
        %v471 = vmul.f32 %v405, %v469
        %472 = vst [vmem:[#allocation3 + $0x40] sm:$0xff] %v471
        %v473 = vmul.f32 %v408, %v469
        %474 = vst [vmem:[#allocation3 + $0x48] sm:$0xff] %v473
        %475 = vrot.lane.b32.xlu0 %v405, 127
        %v476 = vpop.permute.xlu0 %475
        %v478 = vlaneseq
        %v479 = vshrl.u32 %v478, 7
        %v480 = vsub.s32 0, %v479
        %v481 = vrot.slane %v380, %v480
        %v483 = vmul.f32 %v476, %v481
        %484 = vst [vmem:[#allocation3 + $0x50] sm:$0xff] %v483
        %485 = vrot.lane.b32.xlu0 %v408, 127
        %v486 = vpop.permute.xlu0 %485
        %v487 = vmul.f32 %v486, %v481
        %488 = vst [vmem:[#allocation3 + $0x58] sm:$0xff] %v487
        %489 = vrot.lane.b32.xlu0 %v405, 113
        %v490 = vpop.permute.xlu0 %489
        %v492 = vlaneseq
        %v493 = vshrl.u32 %v492, 7
        %v494 = vsub.s32 0, %v493
        %v495 = vrot.slane %v388, %v494
        %v497 = vmul.f32 %v490, %v495
        %498 = vst [vmem:[#allocation3 + $0x60] sm:$0xff] %v497
        %499 = vrot.lane.b32.xlu0 %v408, 113
        %v500 = vpop.permute.xlu0 %499
        %v501 = vmul.f32 %v500, %v495
        %502 = vst [vmem:[#allocation3 + $0x68] sm:$0xff] %v501
        %503 = vrot.lane.b32.xlu0 %v405, 112
        %v504 = vpop.permute.xlu0 %503
        %v506 = vlaneseq
        %v507 = vshrl.u32 %v506, 7
        %v508 = vsub.s32 0, %v507
        %v509 = vrot.slane %v392, %v508
        %v511 = vmul.f32 %v504, %v509
        %512 = vst [vmem:[#allocation3 + $0x70] sm:$0xff] %v511
        %513 = vrot.lane.b32.xlu0 %v408, 112
        %v514 = vpop.permute.xlu0 %513
        %v515 = vmul.f32 %v514, %v509
        %516 = vst [vmem:[#allocation3 + $0x78] sm:$0xff] %v515
        %517 = vrot.lane.b32.xlu0 %v405, 111
        %v518 = vpop.permute.xlu0 %517
        %v520 = vlaneseq
        %v521 = vshrl.u32 %v520, 7
        %v522 = vsub.s32 0, %v521
        %v523 = vrot.slane %v396, %v522
        %v525 = vmul.f32 %v518, %v523
        %526 = vst [vmem:[#allocation3 + $0x80] sm:$0xff] %v525
        %527 = vrot.lane.b32.xlu0 %v408, 111
        %v528 = vpop.permute.xlu0 %527
        %v529 = vmul.f32 %v528, %v523
        %530 = vst [vmem:[#allocation3 + $0x88] sm:$0xff] %v529
        %v531 = vsel %vm353, 1, 0
        %v532 = vcvt.s32.f32 %v531
        %v534 = vlaneseq
        %v535 = vshrl.u32 %v534, 7
        %v536 = vsub.s32 0, %v535
        %v537 = vrot.slane %v532, %v536
        %v539 = vmul.f32 %v397, %v537
        %v540 = vmul.f32 %v398, %v537
        %541 = vrot.lane.b32.xlu0 %v539, 17
        %v542 = vpop.permute.xlu0 %541
        %v543 = vmul.f32 %v542, %v415
        %544 = vst [vmem:[#allocation3 + $0x90] sm:$0xff] %v543
        %545 = vrot.lane.b32.xlu0 %v540, 17
        %v546 = vpop.permute.xlu0 %545
        %v547 = vmul.f32 %v546, %v415
        %548 = vst [vmem:[#allocation3 + $0x98] sm:$0xff] %v547
        %549 = vrot.lane.b32.xlu0 %v539, 16
        %v550 = vpop.permute.xlu0 %549
        %v551 = vmul.f32 %v550, %v429
        %552 = vst [vmem:[#allocation3 + $0xa0] sm:$0xff] %v551
        %553 = vrot.lane.b32.xlu0 %v540, 16
        %v554 = vpop.permute.xlu0 %553
        %v555 = vmul.f32 %v554, %v429
        %556 = vst [vmem:[#allocation3 + $0xa8] sm:$0xff] %v555
        %557 = vrot.lane.b32.xlu0 %v539, 15
        %v558 = vpop.permute.xlu0 %557
        %v559 = vmul.f32 %v558, %v443
        %560 = vst [vmem:[#allocation3 + $0xb0] sm:$0xff] %v559
        %561 = vrot.lane.b32.xlu0 %v540, 15
        %v562 = vpop.permute.xlu0 %561
        %v563 = vmul.f32 %v562, %v443
        %564 = vst [vmem:[#allocation3 + $0xb8] sm:$0xff] %v563
        %565 = vrot.lane.b32.xlu0 %v539, 1
        %v566 = vpop.permute.xlu0 %565
        %v567 = vmul.f32 %v566, %v457
        %568 = vst [vmem:[#allocation3 + $0xc0] sm:$0xff] %v567
        %569 = vrot.lane.b32.xlu0 %v540, 1
        %v570 = vpop.permute.xlu0 %569
        %v571 = vmul.f32 %v570, %v457
        %572 = vst [vmem:[#allocation3 + $0xc8] sm:$0xff] %v571
        %v573 = vmul.f32 %v539, %v469
        %574 = vst [vmem:[#allocation3 + $0xd0] sm:$0xff] %v573
        %v575 = vmul.f32 %v540, %v469
        %576 = vst [vmem:[#allocation3 + $0xd8] sm:$0xff] %v575
        %577 = vrot.lane.b32.xlu0 %v539, 127
        %v578 = vpop.permute.xlu0 %577
        %v579 = vmul.f32 %v578, %v481
        %580 = vst [vmem:[#allocation3 + $0xe0] sm:$0xff] %v579
        %581 = vrot.lane.b32.xlu0 %v540, 127
        %v582 = vpop.permute.xlu0 %581
        %v583 = vmul.f32 %v582, %v481
        %584 = vst [vmem:[#allocation3 + $0xe8] sm:$0xff] %v583
        %585 = vrot.lane.b32.xlu0 %v539, 113
        %v586 = vpop.permute.xlu0 %585
        %v587 = vmul.f32 %v586, %v495
        %588 = vst [vmem:[#allocation3 + $0xf0] sm:$0xff] %v587
        %589 = vrot.lane.b32.xlu0 %v540, 113
        %v590 = vpop.permute.xlu0 %589
        %v591 = vmul.f32 %v590, %v495
        %592 = vst [vmem:[#allocation3 + $0xf8] sm:$0xff] %v591
        %593 = vrot.lane.b32.xlu0 %v539, 112
        %v594 = vpop.permute.xlu0 %593
        %v595 = vmul.f32 %v594, %v509
        %596 = vst [vmem:[#allocation3 + $0x100] sm:$0xff] %v595
        %597 = vrot.lane.b32.xlu0 %v540, 112
        %v598 = vpop.permute.xlu0 %597
        %v599 = vmul.f32 %v598, %v509
        %600 = vst [vmem:[#allocation3 + $0x108] sm:$0xff] %v599
        %601 = vrot.lane.b32.xlu0 %v539, 111
        %v602 = vpop.permute.xlu0 %601
        %v603 = vmul.f32 %v602, %v523
        %604 = vst [vmem:[#allocation3 + $0x110] sm:$0xff] %v603
        %605 = vrot.lane.b32.xlu0 %v540, 111
        %v606 = vpop.permute.xlu0 %605
        %v607 = vmul.f32 %v606, %v523
        %608 = vst [vmem:[#allocation3 + $0x118] sm:$0xff] %v607
        %vm609 = vcmp.ge.s32.totalorder %v341, 1
        %v610 = vsel %vm609, 1, 0
        %v611 = vcvt.s32.f32 %v610
        %v613 = vlaneseq
        %v614 = vshrl.u32 %v613, 7
        %v615 = vsub.s32 0, %v614
        %v616 = vrot.slane %v611, %v615
        %v618 = vmul.f32 %v397, %v616
        %619 = vrot.lane.b32.xlu0 %v398, 1
        %v620 = vpop.permute.xlu0 %619
        %v621 = vmul.f32 %v620, %v616
        %622 = vrot.lane.b32.xlu0 %v618, 17
        %v623 = vpop.permute.xlu0 %622
        %v624 = vmul.f32 %v623, %v415
        %625 = vst [vmem:[#allocation3 + $0x120] sm:$0xff] %v624
        %626 = vrot.lane.b32.xlu0 %v621, 17
        %v627 = vpop.permute.xlu0 %626
        %v628 = vmul.f32 %v627, %v415
        %629 = vst [vmem:[#allocation3 + $0x128] sm:$0xff] %v628
        %630 = vrot.lane.b32.xlu0 %v618, 16
        %v631 = vpop.permute.xlu0 %630
        %v632 = vmul.f32 %v631, %v429
        %633 = vst [vmem:[#allocation3 + $0x130] sm:$0xff] %v632
        %634 = vrot.lane.b32.xlu0 %v621, 16
        %v635 = vpop.permute.xlu0 %634
        %v636 = vmul.f32 %v635, %v429
        %637 = vst [vmem:[#allocation3 + $0x138] sm:$0xff] %v636
        %638 = vrot.lane.b32.xlu0 %v618, 15
        %v639 = vpop.permute.xlu0 %638
        %v640 = vmul.f32 %v639, %v443
        %641 = vst [vmem:[#allocation3 + $0x140] sm:$0xff] %v640
        %642 = vrot.lane.b32.xlu0 %v621, 15
        %v643 = vpop.permute.xlu0 %642
        %v644 = vmul.f32 %v643, %v443
        %645 = vst [vmem:[#allocation3 + $0x148] sm:$0xff] %v644
        %646 = vrot.lane.b32.xlu0 %v618, 1
        %v647 = vpop.permute.xlu0 %646
        %v648 = vmul.f32 %v647, %v457
        %649 = vst [vmem:[#allocation3 + $0x150] sm:$0xff] %v648
        %650 = vrot.lane.b32.xlu0 %v621, 1
        %v651 = vpop.permute.xlu0 %650
        %v652 = vmul.f32 %v651, %v457
        %653 = vst [vmem:[#allocation3 + $0x158] sm:$0xff] %v652
        %v654 = vmul.f32 %v618, %v469
        %655 = vst [vmem:[#allocation3 + $0x160] sm:$0xff] %v654
        %v656 = vmul.f32 %v621, %v469
        %657 = vst [vmem:[#allocation3 + $0x168] sm:$0xff] %v656
        %658 = vrot.lane.b32.xlu0 %v618, 127
        %v659 = vpop.permute.xlu0 %658
        %v660 = vmul.f32 %v659, %v481
        %661 = vst [vmem:[#allocation3 + $0x170] sm:$0xff] %v660
        %662 = vrot.lane.b32.xlu0 %v621, 127
        %v663 = vpop.permute.xlu0 %662
        %v664 = vmul.f32 %v663, %v481
        %665 = vst [vmem:[#allocation3 + $0x178] sm:$0xff] %v664
        %666 = vrot.lane.b32.xlu0 %v618, 113
        %v667 = vpop.permute.xlu0 %666
        %v668 = vmul.f32 %v667, %v495
        %669 = vst [vmem:[#allocation3 + $0x180] sm:$0xff] %v668
        %670 = vrot.lane.b32.xlu0 %v621, 113
        %v671 = vpop.permute.xlu0 %670
        %v672 = vmul.f32 %v671, %v495
        %673 = vst [vmem:[#allocation3 + $0x188] sm:$0xff] %v672
        %674 = vrot.lane.b32.xlu0 %v618, 112
        %v675 = vpop.permute.xlu0 %674
        %v676 = vmul.f32 %v675, %v509
        %677 = vst [vmem:[#allocation3 + $0x190] sm:$0xff] %v676
        %678 = vrot.lane.b32.xlu0 %v621, 112
        %v679 = vpop.permute.xlu0 %678
        %v680 = vmul.f32 %v679, %v509
        %681 = vst [vmem:[#allocation3 + $0x198] sm:$0xff] %v680
        %682 = vrot.lane.b32.xlu0 %v618, 111
        %v683 = vpop.permute.xlu0 %682
        %v684 = vmul.f32 %v683, %v523
        %685 = vst [vmem:[#allocation3 + $0x1a0] sm:$0xff] %v684
        %686 = vrot.lane.b32.xlu0 %v621, 111
        %v687 = vpop.permute.xlu0 %686
        %v688 = vmul.f32 %v687, %v523
        %689 = vst [vmem:[#allocation3 + $0x1a8] sm:$0xff] %v688
        %v690 = vld [vmem:[%s4] sm:$0xff]
        %v691 = vld [vmem:[%s4 + $0x8] sm:$0xff]
        %v692 = vld [vmem:[%s4 + $0x10] sm:$0xff]
        %v693 = vld [vmem:[%s4 + $0x18] sm:$0xff]
        %v694 = vld [vmem:[#allocation3] sm:$0xff]
        %v695 = vld [vmem:[#allocation3 + $0x8] sm:$0xff]
        %v696 = vld [vmem:[#allocation3 + $0x10] sm:$0xff]
        %v697 = vld [vmem:[#allocation3 + $0x18] sm:$0xff]
        %v698 = vld [vmem:[#allocation3 + $0x20] sm:$0xff]
        %v699 = vld [vmem:[#allocation3 + $0x28] sm:$0xff]
        %v700 = vld [vmem:[#allocation3 + $0x30] sm:$0xff]
        %v701 = vld [vmem:[#allocation3 + $0x38] sm:$0xff]
        %v702 = vld [vmem:[#allocation3 + $0x40] sm:$0xff]
        %v703 = vld [vmem:[#allocation3 + $0x48] sm:$0xff]
        %v704 = vld [vmem:[#allocation3 + $0x50] sm:$0xff]
        %v705 = vld [vmem:[#allocation3 + $0x58] sm:$0xff]
        %v706 = vld [vmem:[#allocation3 + $0x60] sm:$0xff]
        %v707 = vld [vmem:[#allocation3 + $0x68] sm:$0xff]
        %v708 = vld [vmem:[#allocation3 + $0x70] sm:$0xff]
        %v709 = vld [vmem:[#allocation3 + $0x78] sm:$0xff]
        %v710 = vld [vmem:[#allocation3 + $0x80] sm:$0xff]
        %v711 = vld [vmem:[#allocation3 + $0x88] sm:$0xff]
        %v712 = vld [vmem:[#allocation3 + $0x90] sm:$0xff]
        %v713 = vld [vmem:[#allocation3 + $0x98] sm:$0xff]
        %v714 = vld [vmem:[#allocation3 + $0xa0] sm:$0xff]
        %v715 = vld [vmem:[#allocation3 + $0xa8] sm:$0xff]
        %v716 = vld [vmem:[#allocation3 + $0xb0] sm:$0xff]
        %v717 = vld [vmem:[#allocation3 + $0xb8] sm:$0xff]
        %v718 = vld [vmem:[#allocation3 + $0xc0] sm:$0xff]
        %v719 = vld [vmem:[#allocation3 + $0xc8] sm:$0xff]
        %v720 = vld [vmem:[#allocation3 + $0xd0] sm:$0xff]
        %v721 = vld [vmem:[#allocation3 + $0xd8] sm:$0xff]
        %v722 = vld [vmem:[#allocation3 + $0xe0] sm:$0xff]
        %v723 = vld [vmem:[#allocation3 + $0xe8] sm:$0xff]
        %v724 = vld [vmem:[#allocation3 + $0xf0] sm:$0xff]
        %v725 = vld [vmem:[#allocation3 + $0xf8] sm:$0xff]
        %v726 = vld [vmem:[#allocation3 + $0x100] sm:$0xff]
        %v727 = vld [vmem:[#allocation3 + $0x108] sm:$0xff]
        %v728 = vld [vmem:[#allocation3 + $0x110] sm:$0xff]
        %v729 = vld [vmem:[#allocation3 + $0x118] sm:$0xff]
        %v730 = vld [vmem:[#allocation3 + $0x120] sm:$0xff]
        %v731 = vld [vmem:[#allocation3 + $0x128] sm:$0xff]
        %v732 = vld [vmem:[#allocation3 + $0x130] sm:$0xff]
        %v733 = vld [vmem:[#allocation3 + $0x138] sm:$0xff]
        %v734 = vld [vmem:[#allocation3 + $0x140] sm:$0xff]
        %v735 = vld [vmem:[#allocation3 + $0x148] sm:$0xff]
        %v736 = vld [vmem:[#allocation3 + $0x150] sm:$0xff]
        %v737 = vld [vmem:[#allocation3 + $0x158] sm:$0xff]
        %v738 = vld [vmem:[#allocation3 + $0x160] sm:$0xff]
        %v739 = vld [vmem:[#allocation3 + $0x168] sm:$0xff]
        %v740 = vld [vmem:[#allocation3 + $0x170] sm:$0xff]
        %v741 = vld [vmem:[#allocation3 + $0x178] sm:$0xff]
        %v742 = vld [vmem:[#allocation3 + $0x180] sm:$0xff]
        %v743 = vld [vmem:[#allocation3 + $0x188] sm:$0xff]
        %v744 = vld [vmem:[#allocation3 + $0x190] sm:$0xff]
        %v745 = vld [vmem:[#allocation3 + $0x198] sm:$0xff]
        %v746 = vld [vmem:[#allocation3 + $0x1a0] sm:$0xff]
        %v747 = vld [vmem:[#allocation3 + $0x1a8] sm:$0xff]
        %v748 = vld [vmem:[%s5] sm:$0xff]
        %750 = vset.pattern.permute.xlu0 0
        %751 = vperm.xlu0 %750, %v748
        %v752 = vpop.permute.xlu0 %751
        %vm754 = vcmask 392192
        %v756 = vsel %vm754, %v693, 0
        %758 = vmatprep.subr.mxu0 0.0
        %759 = vmatpush1.msra.mxu0 %v694
        %760 = vmatprep.subr.mxu0 0.0
        %761 = vmatpush1.msra.mxu0 %v695
        %762 = vmatprep.subr.mxu0 0.0
        %763 = vmatpush1.msra.mxu0 %v696
        %764 = vmatprep.subr.mxu0 0.0
        %765 = vmatpush1.msra.mxu0 %v697
        %766 = vmatprep.subr.mxu0 0.0
        %767 = vmatpush1.msra.mxu0 %v698
        %768 = vmatprep.subr.mxu0 0.0
        %769 = vmatpush1.msra.mxu0 %v699
        %770 = vmatprep.subr.mxu0 0.0
        %771 = vmatpush1.msra.mxu0 %v700
        %772 = vmatprep.subr.mxu0 0.0
        %773 = vmatpush1.msra.mxu0 %v701
        %774 = vmatprep.subr.mxu0 0.0
        %775 = vmatpush1.msra.mxu0 %v702
        %776 = vmatprep.subr.mxu0 0.0
        %777 = vmatpush1.msra.mxu0 %v703
        %778 = vmatprep.subr.mxu0 0.0
        %779 = vmatpush1.msra.mxu0 %v704
        %780 = vmatprep.subr.mxu0 0.0
        %781 = vmatpush1.msra.mxu0 %v705
        %782 = vmatprep.subr.mxu0 0.0
        %783 = vmatpush1.msra.mxu0 %v706
        %784 = vmatprep.subr.mxu0 0.0
        %785 = vmatpush1.msra.mxu0 %v707
        %786 = vmatprep.subr.mxu0 0.0
        %787 = vmatpush1.msra.mxu0 %v708
        %788 = vmatprep.subr.mxu0 0.0
        %789 = vmatpush1.msra.mxu0 %v709
        %790 = vmatprep.subr.mxu0 0.0
        %791 = vmatpush1.msra.mxu0 %v710
        %792 = vmatprep.subr.mxu0 0.0
        %793 = vmatpush1.msra.mxu0 %v711
        %794 = vmatprep.subr.mxu0 0.0
        %795 = vmatpush1.msra.mxu0 %v712
        %796 = vmatprep.subr.mxu0 0.0
        %797 = vmatpush1.msra.mxu0 %v713
        %798 = vmatprep.subr.mxu0 0.0
        %799 = vmatpush1.msra.mxu0 %v714
        %800 = vmatprep.subr.mxu0 0.0
        %801 = vmatpush1.msra.mxu0 %v715
        %802 = vmatprep.subr.mxu0 0.0
        %803 = vmatpush1.msra.mxu0 %v716
        %804 = vmatprep.subr.mxu0 0.0
        %805 = vmatpush1.msra.mxu0 %v717
        %806 = vmatprep.subr.mxu0 0.0
        %807 = vmatpush1.msra.mxu0 %v718
        %808 = vmatprep.subr.mxu0 0.0
        %809 = vmatpush1.msra.mxu0 %v719
        %810 = vmatprep.subr.mxu0 0.0
        %811 = vmatpush1.msra.mxu0 %v720
        %812 = vmatprep.subr.mxu0 0.0
        %813 = vmatpush1.msra.mxu0 %v721
        %814 = vmatprep.subr.mxu0 0.0
        %815 = vmatpush1.msra.mxu0 %v722
        %816 = vmatprep.subr.mxu0 0.0
        %817 = vmatpush1.msra.mxu0 %v723
        %818 = vmatprep.subr.mxu0 0.0
        %819 = vmatpush1.msra.mxu0 %v724
        %820 = vmatprep.subr.mxu0 0.0
        %821 = vmatpush1.msra.mxu0 %v725
        %822 = vmatprep.mubr.f32.mxu0 %v691
        %823 = vmatmul.mubr.f32.gmra.mrb[0].mxu0 %v690
        %v824 = vpop.f32.mrb[0].mxu0
        %v825 = vadd.f32 %v752, %v824
        %v826 = vpop.f32.mrb[0].mxu0
        %827 = vdwg.mxu0
        %828 = vmatprep.subr.mxu0 0.0
        %829 = vmatpush1.msra.mxu0 %v726
        %830 = vmatprep.subr.mxu0 0.0
        %831 = vmatpush1.msra.mxu0 %v727
        %832 = vmatprep.subr.mxu0 0.0
        %833 = vmatpush1.msra.mxu0 %v728
        %834 = vmatprep.subr.mxu0 0.0
        %835 = vmatpush1.msra.mxu0 %v729
        %836 = vmatprep.subr.mxu0 0.0
        %837 = vmatpush1.msra.mxu0 %v730
        %838 = vmatprep.subr.mxu0 0.0
        %839 = vmatpush1.msra.mxu0 %v731
        %840 = vmatprep.subr.mxu0 0.0
        %841 = vmatpush1.msra.mxu0 %v732
        %842 = vmatprep.subr.mxu0 0.0
        %843 = vmatpush1.msra.mxu0 %v733
        %844 = vmatprep.subr.mxu0 0.0
        %845 = vmatpush1.msra.mxu0 %v734
        %846 = vmatprep.subr.mxu0 0.0
        %847 = vmatpush1.msra.mxu0 %v735
        %848 = vmatprep.subr.mxu0 0.0
        %849 = vmatpush1.msra.mxu0 %v736
        %850 = vmatprep.subr.mxu0 0.0
        %851 = vmatpush1.msra.mxu0 %v737
        %852 = vmatprep.subr.mxu0 0.0
        %853 = vmatpush1.msra.mxu0 %v738
        %854 = vmatprep.subr.mxu0 0.0
        %855 = vmatpush1.msra.mxu0 %v739
        %856 = vmatprep.subr.mxu0 0.0
        %857 = vmatpush1.msra.mxu0 %v740
        %858 = vmatprep.subr.mxu0 0.0
        %859 = vmatpush1.msra.mxu0 %v741
        %860 = vmatprep.subr.mxu0 0.0
        %861 = vmatpush1.msra.mxu0 %v742
        %862 = vmatprep.subr.mxu0 0.0
        %863 = vmatpush1.msra.mxu0 %v743
        %864 = vmatprep.subr.mxu0 0.0
        %865 = vmatpush1.msra.mxu0 %v744
        %866 = vmatprep.subr.mxu0 0.0
        %867 = vmatpush1.msra.mxu0 %v745
        %868 = vmatprep.subr.mxu0 0.0
        %869 = vmatpush1.msra.mxu0 %v746
        %870 = vmatprep.subr.mxu0 0.0
        %871 = vmatpush1.msra.mxu0 %v747
        %872 = vmatprep.subr.mxu0 0.0
        %873 = vmatpush1.msra.mxu0 0.0
        %874 = vmatprep.subr.mxu0 0.0
        %875 = vmatpush1.msra.mxu0 0.0
        %876 = vmatprep.subr.mxu0 0.0
        %877 = vmatpush1.msra.mxu0 0.0
        %878 = vmatprep.subr.mxu0 0.0
        %879 = vmatpush1.msra.mxu0 0.0
        %880 = vmatprep.subr.mxu0 0.0
        %881 = vmatpush1.msra.mxu0 0.0
        %882 = vmatprep.subr.mxu0 0.0
        %883 = vmatpush1.msra.mxu0 0.0
        %884 = vmatprep.subr.mxu0 0.0
        %885 = vmatpush1.msra.mxu0 0.0
        %886 = vmatprep.subr.mxu0 0.0
        %887 = vmatpush1.msra.mxu0 0.0
        %888 = vmatprep.subr.mxu0 0.0
        %889 = vmatpush1.msra.mxu0 0.0
        %890 = vmatprep.subr.mxu0 0.0
        %891 = vmatpush1.msra.mxu0 0.0
        %892 = vmatprep.mubr.f32.mxu0 %v756
        %893 = vmatmul.mubr.f32.gmra.mrb[0].mxu0 %v692
        %v894 = vpop.f32.mrb[0].mxu0
        %v895 = vadd.f32 %v825, %v894
        %v896 = vpop.f32.mrb[0].mxu0
        %897 = vdwg.mxu0
        %v898 = vmax.f32 %v895, 0.0
        %899 = vst [vmem:[#allocation2] sm:$0xff] %v898
        %900 = vrot.lane.b32.xlu0 %v620, 127
        %v901 = vpop.permute.xlu0 %900
        %v902 = vmul.f32 %v901, %v537
        %903 = vst [vmem:[#allocation3] sm:$0xff] %v543
        %904 = vrot.lane.b32.xlu0 %v902, 17
        %v905 = vpop.permute.xlu0 %904
        %v906 = vmul.f32 %v905, %v415
        %907 = vst [vmem:[#allocation3 + $0x8] sm:$0xff] %v906
        %908 = vst [vmem:[#allocation3 + $0x10] sm:$0xff] %v551
        %909 = vrot.lane.b32.xlu0 %v902, 16
        %v910 = vpop.permute.xlu0 %909
        %v911 = vmul.f32 %v910, %v429
        %912 = vst [vmem:[#allocation3 + $0x18] sm:$0xff] %v911
        %913 = vst [vmem:[#allocation3 + $0x20] sm:$0xff] %v559
        %914 = vrot.lane.b32.xlu0 %v902, 15
        %v915 = vpop.permute.xlu0 %914
        %v916 = vmul.f32 %v915, %v443
        %917 = vst [vmem:[#allocation3 + $0x28] sm:$0xff] %v916
        %918 = vst [vmem:[#allocation3 + $0x30] sm:$0xff] %v567
        %919 = vrot.lane.b32.xlu0 %v902, 1
        %v920 = vpop.permute.xlu0 %919
        %v921 = vmul.f32 %v920, %v457
        %922 = vst [vmem:[#allocation3 + $0x38] sm:$0xff] %v921
        %923 = vst [vmem:[#allocation3 + $0x40] sm:$0xff] %v573
        %v924 = vmul.f32 %v902, %v469
        %925 = vst [vmem:[#allocation3 + $0x48] sm:$0xff] %v924
        %926 = vst [vmem:[#allocation3 + $0x50] sm:$0xff] %v579
        %927 = vrot.lane.b32.xlu0 %v902, 127
        %v928 = vpop.permute.xlu0 %927
        %v929 = vmul.f32 %v928, %v481
        %930 = vst [vmem:[#allocation3 + $0x58] sm:$0xff] %v929
        %931 = vst [vmem:[#allocation3 + $0x60] sm:$0xff] %v587
        %932 = vrot.lane.b32.xlu0 %v902, 113
        %v933 = vpop.permute.xlu0 %932
        %v934 = vmul.f32 %v933, %v495
        %935 = vst [vmem:[#allocation3 + $0x68] sm:$0xff] %v934
        %936 = vst [vmem:[#allocation3 + $0x70] sm:$0xff] %v595
        %937 = vrot.lane.b32.xlu0 %v902, 112
        %v938 = vpop.permute.xlu0 %937
        %v939 = vmul.f32 %v938, %v509
        %940 = vst [vmem:[#allocation3 + $0x78] sm:$0xff] %v939
        %941 = vst [vmem:[#allocation3 + $0x80] sm:$0xff] %v603
        %942 = vrot.lane.b32.xlu0 %v902, 111
        %v943 = vpop.permute.xlu0 %942
        %v944 = vmul.f32 %v943, %v523
        %945 = vst [vmem:[#allocation3 + $0x88] sm:$0xff] %v944
        %946 = vst [vmem:[#allocation3 + $0x90] sm:$0xff] %v624
        %947 = vst [vmem:[#allocation3 + $0x98] sm:$0xff] %v628
        %948 = vst [vmem:[#allocation3 + $0xa0] sm:$0xff] %v632
        %949 = vst [vmem:[#allocation3 + $0xa8] sm:$0xff] %v636
        %950 = vst [vmem:[#allocation3 + $0xb0] sm:$0xff] %v640
        %951 = vst [vmem:[#allocation3 + $0xb8] sm:$0xff] %v644
        %952 = vst [vmem:[#allocation3 + $0xc0] sm:$0xff] %v648
        %953 = vst [vmem:[#allocation3 + $0xc8] sm:$0xff] %v652
        %954 = vst [vmem:[#allocation3 + $0xd0] sm:$0xff] %v654
        %955 = vst [vmem:[#allocation3 + $0xd8] sm:$0xff] %v656
        %956 = vst [vmem:[#allocation3 + $0xe0] sm:$0xff] %v660
        %957 = vst [vmem:[#allocation3 + $0xe8] sm:$0xff] %v664
        %958 = vst [vmem:[#allocation3 + $0xf0] sm:$0xff] %v668
        %959 = vst [vmem:[#allocation3 + $0xf8] sm:$0xff] %v672
        %960 = vst [vmem:[#allocation3 + $0x100] sm:$0xff] %v676
        %961 = vst [vmem:[#allocation3 + $0x108] sm:$0xff] %v680
        %962 = vst [vmem:[#allocation3 + $0x110] sm:$0xff] %v684
        %963 = vst [vmem:[#allocation3 + $0x118] sm:$0xff] %v688
        %vm964 = vcmp.ge.s32.totalorder %v341, 2
        %v965 = vsel %vm964, 1, 0
        %v966 = vcvt.s32.f32 %v965
        %v968 = vlaneseq
        %v969 = vshrl.u32 %v968, 7
        %v970 = vsub.s32 0, %v969
        %v971 = vrot.slane %v966, %v970
        %v973 = vmul.f32 %v397, %v971
        %974 = vrot.lane.b32.xlu0 %v620, 1
        %v975 = vpop.permute.xlu0 %974
        %v976 = vmul.f32 %v975, %v971
        %977 = vrot.lane.b32.xlu0 %v973, 17
        %v978 = vpop.permute.xlu0 %977
        %v979 = vmul.f32 %v978, %v415
        %980 = vst [vmem:[#allocation3 + $0x120] sm:$0xff] %v979
        %981 = vrot.lane.b32.xlu0 %v976, 17
        %v982 = vpop.permute.xlu0 %981
        %v983 = vmul.f32 %v982, %v415
        %984 = vst [vmem:[#allocation3 + $0x128] sm:$0xff] %v983
        %985 = vrot.lane.b32.xlu0 %v973, 16
        %v986 = vpop.permute.xlu0 %985
        %v987 = vmul.f32 %v986, %v429
        %988 = vst [vmem:[#allocation3 + $0x130] sm:$0xff] %v987
        %989 = vrot.lane.b32.xlu0 %v976, 16
        %v990 = vpop.permute.xlu0 %989
        %v991 = vmul.f32 %v990, %v429
        %992 = vst [vmem:[#allocation3 + $0x138] sm:$0xff] %v991
        %993 = vrot.lane.b32.xlu0 %v973, 15
        %v994 = vpop.permute.xlu0 %993
        %v995 = vmul.f32 %v994, %v443
        %996 = vst [vmem:[#allocation3 + $0x140] sm:$0xff] %v995
        %997 = vrot.lane.b32.xlu0 %v976, 15
        %v998 = vpop.permute.xlu0 %997
        %v999 = vmul.f32 %v998, %v443
        %1000 = vst [vmem:[#allocation3 + $0x148] sm:$0xff] %v999
        %1001 = vrot.lane.b32.xlu0 %v973, 1
        %v1002 = vpop.permute.xlu0 %1001
        %v1003 = vmul.f32 %v1002, %v457
        %1004 = vst [vmem:[#allocation3 + $0x150] sm:$0xff] %v1003
        %1005 = vrot.lane.b32.xlu0 %v976, 1
        %v1006 = vpop.permute.xlu0 %1005
        %v1007 = vmul.f32 %v1006, %v457
        %1008 = vst [vmem:[#allocation3 + $0x158] sm:$0xff] %v1007
        %v1009 = vmul.f32 %v973, %v469
        %1010 = vst [vmem:[#allocation3 + $0x160] sm:$0xff] %v1009
        %v1011 = vmul.f32 %v976, %v469
        %1012 = vst [vmem:[#allocation3 + $0x168] sm:$0xff] %v1011
        %1013 = vrot.lane.b32.xlu0 %v973, 127
        %v1014 = vpop.permute.xlu0 %1013
        %v1015 = vmul.f32 %v1014, %v481
        %1016 = vst [vmem:[#allocation3 + $0x170] sm:$0xff] %v1015
        %1017 = vrot.lane.b32.xlu0 %v976, 127
        %v1018 = vpop.permute.xlu0 %1017
        %v1019 = vmul.f32 %v1018, %v481
        %1020 = vst [vmem:[#allocation3 + $0x178] sm:$0xff] %v1019
        %1021 = vrot.lane.b32.xlu0 %v973, 113
        %v1022 = vpop.permute.xlu0 %1021
        %v1023 = vmul.f32 %v1022, %v495
        %1024 = vst [vmem:[#allocation3 + $0x180] sm:$0xff] %v1023
        %1025 = vrot.lane.b32.xlu0 %v976, 113
        %v1026 = vpop.permute.xlu0 %1025
        %v1027 = vmul.f32 %v1026, %v495
        %1028 = vst [vmem:[#allocation3 + $0x188] sm:$0xff] %v1027
        %1029 = vrot.lane.b32.xlu0 %v973, 112
        %v1030 = vpop.permute.xlu0 %1029
        %v1031 = vmul.f32 %v1030, %v509
        %1032 = vst [vmem:[#allocation3 + $0x190] sm:$0xff] %v1031
        %1033 = vrot.lane.b32.xlu0 %v976, 112
        %v1034 = vpop.permute.xlu0 %1033
        %v1035 = vmul.f32 %v1034, %v509
        %1036 = vst [vmem:[#allocation3 + $0x198] sm:$0xff] %v1035
        %1037 = vrot.lane.b32.xlu0 %v973, 111
        %v1038 = vpop.permute.xlu0 %1037
        %v1039 = vmul.f32 %v1038, %v523
        %1040 = vst [vmem:[#allocation3 + $0x1a0] sm:$0xff] %v1039
        %1041 = vrot.lane.b32.xlu0 %v976, 111
        %v1042 = vpop.permute.xlu0 %1041
        %v1043 = vmul.f32 %v1042, %v523
        %1044 = vst [vmem:[#allocation3 + $0x1a8] sm:$0xff] %v1043
        %v1045 = vld [vmem:[%s4] sm:$0xff]
        %v1046 = vld [vmem:[%s4 + $0x8] sm:$0xff]
        %v1047 = vld [vmem:[%s4 + $0x10] sm:$0xff]
        %v1048 = vld [vmem:[%s4 + $0x18] sm:$0xff]
        %v1049 = vld [vmem:[#allocation3] sm:$0xff]
        %v1050 = vld [vmem:[#allocation3 + $0x8] sm:$0xff]
        %v1051 = vld [vmem:[#allocation3 + $0x10] sm:$0xff]
        %v1052 = vld [vmem:[#allocation3 + $0x18] sm:$0xff]
        %v1053 = vld [vmem:[#allocation3 + $0x20] sm:$0xff]
        %v1054 = vld [vmem:[#allocation3 + $0x28] sm:$0xff]
        %v1055 = vld [vmem:[#allocation3 + $0x30] sm:$0xff]
        %v1056 = vld [vmem:[#allocation3 + $0x38] sm:$0xff]
        %v1057 = vld [vmem:[#allocation3 + $0x40] sm:$0xff]
        %v1058 = vld [vmem:[#allocation3 + $0x48] sm:$0xff]
        %v1059 = vld [vmem:[#allocation3 + $0x50] sm:$0xff]
        %v1060 = vld [vmem:[#allocation3 + $0x58] sm:$0xff]
        %v1061 = vld [vmem:[#allocation3 + $0x60] sm:$0xff]
        %v1062 = vld [vmem:[#allocation3 + $0x68] sm:$0xff]
        %v1063 = vld [vmem:[#allocation3 + $0x70] sm:$0xff]
        %v1064 = vld [vmem:[#allocation3 + $0x78] sm:$0xff]
        %v1065 = vld [vmem:[#allocation3 + $0x80] sm:$0xff]
        %v1066 = vld [vmem:[#allocation3 + $0x88] sm:$0xff]
        %v1067 = vld [vmem:[#allocation3 + $0x90] sm:$0xff]
        %v1068 = vld [vmem:[#allocation3 + $0x98] sm:$0xff]
        %v1069 = vld [vmem:[#allocation3 + $0xa0] sm:$0xff]
        %v1070 = vld [vmem:[#allocation3 + $0xa8] sm:$0xff]
        %v1071 = vld [vmem:[#allocation3 + $0xb0] sm:$0xff]
        %v1072 = vld [vmem:[#allocation3 + $0xb8] sm:$0xff]
        %v1073 = vld [vmem:[#allocation3 + $0xc0] sm:$0xff]
        %v1074 = vld [vmem:[#allocation3 + $0xc8] sm:$0xff]
        %v1075 = vld [vmem:[#allocation3 + $0xd0] sm:$0xff]
        %v1076 = vld [vmem:[#allocation3 + $0xd8] sm:$0xff]
        %v1077 = vld [vmem:[#allocation3 + $0xe0] sm:$0xff]
        %v1078 = vld [vmem:[#allocation3 + $0xe8] sm:$0xff]
        %v1079 = vld [vmem:[#allocation3 + $0xf0] sm:$0xff]
        %v1080 = vld [vmem:[#allocation3 + $0xf8] sm:$0xff]
        %v1081 = vld [vmem:[#allocation3 + $0x100] sm:$0xff]
        %v1082 = vld [vmem:[#allocation3 + $0x108] sm:$0xff]
        %v1083 = vld [vmem:[#allocation3 + $0x110] sm:$0xff]
        %v1084 = vld [vmem:[#allocation3 + $0x118] sm:$0xff]
        %v1085 = vld [vmem:[#allocation3 + $0x120] sm:$0xff]
        %v1086 = vld [vmem:[#allocation3 + $0x128] sm:$0xff]
        %v1087 = vld [vmem:[#allocation3 + $0x130] sm:$0xff]
        %v1088 = vld [vmem:[#allocation3 + $0x138] sm:$0xff]
        %v1089 = vld [vmem:[#allocation3 + $0x140] sm:$0xff]
        %v1090 = vld [vmem:[#allocation3 + $0x148] sm:$0xff]
        %v1091 = vld [vmem:[#allocation3 + $0x150] sm:$0xff]
        %v1092 = vld [vmem:[#allocation3 + $0x158] sm:$0xff]
        %v1093 = vld [vmem:[#allocation3 + $0x160] sm:$0xff]
        %v1094 = vld [vmem:[#allocation3 + $0x168] sm:$0xff]
        %v1095 = vld [vmem:[#allocation3 + $0x170] sm:$0xff]
        %v1096 = vld [vmem:[#allocation3 + $0x178] sm:$0xff]
        %v1097 = vld [vmem:[#allocation3 + $0x180] sm:$0xff]
        %v1098 = vld [vmem:[#allocation3 + $0x188] sm:$0xff]
        %v1099 = vld [vmem:[#allocation3 + $0x190] sm:$0xff]
        %v1100 = vld [vmem:[#allocation3 + $0x198] sm:$0xff]
        %v1101 = vld [vmem:[#allocation3 + $0x1a0] sm:$0xff]
        %v1102 = vld [vmem:[#allocation3 + $0x1a8] sm:$0xff]
        %v1103 = vld [vmem:[%s5] sm:$0xff]
        %1105 = vset.pattern.permute.xlu0 0
        %1106 = vperm.xlu0 %1105, %v1103
        %v1107 = vpop.permute.xlu0 %1106
        %v1110 = vsel %vm754, %v1048, 0
        %1112 = vmatprep.subr.mxu0 0.0
        %1113 = vmatpush1.msra.mxu0 %v1049
        %1114 = vmatprep.subr.mxu0 0.0
        %1115 = vmatpush1.msra.mxu0 %v1050
        %1116 = vmatprep.subr.mxu0 0.0
        %1117 = vmatpush1.msra.mxu0 %v1051
        %1118 = vmatprep.subr.mxu0 0.0
        %1119 = vmatpush1.msra.mxu0 %v1052
        %1120 = vmatprep.subr.mxu0 0.0
        %1121 = vmatpush1.msra.mxu0 %v1053
        %1122 = vmatprep.subr.mxu0 0.0
        %1123 = vmatpush1.msra.mxu0 %v1054
        %1124 = vmatprep.subr.mxu0 0.0
        %1125 = vmatpush1.msra.mxu0 %v1055
        %1126 = vmatprep.subr.mxu0 0.0
        %1127 = vmatpush1.msra.mxu0 %v1056
        %1128 = vmatprep.subr.mxu0 0.0
        %1129 = vmatpush1.msra.mxu0 %v1057
        %1130 = vmatprep.subr.mxu0 0.0
        %1131 = vmatpush1.msra.mxu0 %v1058
        %1132 = vmatprep.subr.mxu0 0.0
        %1133 = vmatpush1.msra.mxu0 %v1059
        %1134 = vmatprep.subr.mxu0 0.0
        %1135 = vmatpush1.msra.mxu0 %v1060
        %1136 = vmatprep.subr.mxu0 0.0
        %1137 = vmatpush1.msra.mxu0 %v1061
        %1138 = vmatprep.subr.mxu0 0.0
        %1139 = vmatpush1.msra.mxu0 %v1062
        %1140 = vmatprep.subr.mxu0 0.0
        %1141 = vmatpush1.msra.mxu0 %v1063
        %1142 = vmatprep.subr.mxu0 0.0
        %1143 = vmatpush1.msra.mxu0 %v1064
        %1144 = vmatprep.subr.mxu0 0.0
        %1145 = vmatpush1.msra.mxu0 %v1065
        %1146 = vmatprep.subr.mxu0 0.0
        %1147 = vmatpush1.msra.mxu0 %v1066
        %1148 = vmatprep.subr.mxu0 0.0
        %1149 = vmatpush1.msra.mxu0 %v1067
        %1150 = vmatprep.subr.mxu0 0.0
        %1151 = vmatpush1.msra.mxu0 %v1068
        %1152 = vmatprep.subr.mxu0 0.0
        %1153 = vmatpush1.msra.mxu0 %v1069
        %1154 = vmatprep.subr.mxu0 0.0
        %1155 = vmatpush1.msra.mxu0 %v1070
        %1156 = vmatprep.subr.mxu0 0.0
        %1157 = vmatpush1.msra.mxu0 %v1071
        %1158 = vmatprep.subr.mxu0 0.0
        %1159 = vmatpush1.msra.mxu0 %v1072
        %1160 = vmatprep.subr.mxu0 0.0
        %1161 = vmatpush1.msra.mxu0 %v1073
        %1162 = vmatprep.subr.mxu0 0.0
        %1163 = vmatpush1.msra.mxu0 %v1074
        %1164 = vmatprep.subr.mxu0 0.0
        %1165 = vmatpush1.msra.mxu0 %v1075
        %1166 = vmatprep.subr.mxu0 0.0
        %1167 = vmatpush1.msra.mxu0 %v1076
        %1168 = vmatprep.subr.mxu0 0.0
        %1169 = vmatpush1.msra.mxu0 %v1077
        %1170 = vmatprep.subr.mxu0 0.0
        %1171 = vmatpush1.msra.mxu0 %v1078
        %1172 = vmatprep.subr.mxu0 0.0
        %1173 = vmatpush1.msra.mxu0 %v1079
        %1174 = vmatprep.subr.mxu0 0.0
        %1175 = vmatpush1.msra.mxu0 %v1080
        %1176 = vmatprep.mubr.f32.mxu0 %v1046
        %1177 = vmatmul.mubr.f32.gmra.mrb[0].mxu0 %v1045
        %v1178 = vpop.f32.mrb[0].mxu0
        %v1179 = vadd.f32 %v1107, %v1178
        %v1180 = vpop.f32.mrb[0].mxu0
        %1181 = vdwg.mxu0
        %1182 = vmatprep.subr.mxu0 0.0
        %1183 = vmatpush1.msra.mxu0 %v1081
        %1184 = vmatprep.subr.mxu0 0.0
        %1185 = vmatpush1.msra.mxu0 %v1082
        %1186 = vmatprep.subr.mxu0 0.0
        %1187 = vmatpush1.msra.mxu0 %v1083
        %1188 = vmatprep.subr.mxu0 0.0
        %1189 = vmatpush1.msra.mxu0 %v1084
        %1190 = vmatprep.subr.mxu0 0.0
        %1191 = vmatpush1.msra.mxu0 %v1085
        %1192 = vmatprep.subr.mxu0 0.0
        %1193 = vmatpush1.msra.mxu0 %v1086
        %1194 = vmatprep.subr.mxu0 0.0
        %1195 = vmatpush1.msra.mxu0 %v1087
        %1196 = vmatprep.subr.mxu0 0.0
        %1197 = vmatpush1.msra.mxu0 %v1088
        %1198 = vmatprep.subr.mxu0 0.0
        %1199 = vmatpush1.msra.mxu0 %v1089
        %1200 = vmatprep.subr.mxu0 0.0
        %1201 = vmatpush1.msra.mxu0 %v1090
        %1202 = vmatprep.subr.mxu0 0.0
        %1203 = vmatpush1.msra.mxu0 %v1091
        %1204 = vmatprep.subr.mxu0 0.0
        %1205 = vmatpush1.msra.mxu0 %v1092
        %1206 = vmatprep.subr.mxu0 0.0
        %1207 = vmatpush1.msra.mxu0 %v1093
        %1208 = vmatprep.subr.mxu0 0.0
        %1209 = vmatpush1.msra.mxu0 %v1094
        %1210 = vmatprep.subr.mxu0 0.0
        %1211 = vmatpush1.msra.mxu0 %v1095
        %1212 = vmatprep.subr.mxu0 0.0
        %1213 = vmatpush1.msra.mxu0 %v1096
        %1214 = vmatprep.subr.mxu0 0.0
        %1215 = vmatpush1.msra.mxu0 %v1097
        %1216 = vmatprep.subr.mxu0 0.0
        %1217 = vmatpush1.msra.mxu0 %v1098
        %1218 = vmatprep.subr.mxu0 0.0
        %1219 = vmatpush1.msra.mxu0 %v1099
        %1220 = vmatprep.subr.mxu0 0.0
        %1221 = vmatpush1.msra.mxu0 %v1100
        %1222 = vmatprep.subr.mxu0 0.0
        %1223 = vmatpush1.msra.mxu0 %v1101
        %1224 = vmatprep.subr.mxu0 0.0
        %1225 = vmatpush1.msra.mxu0 %v1102
        %1226 = vmatprep.subr.mxu0 0.0
        %1227 = vmatpush1.msra.mxu0 0.0
        %1228 = vmatprep.subr.mxu0 0.0
        %1229 = vmatpush1.msra.mxu0 0.0
        %1230 = vmatprep.subr.mxu0 0.0
        %1231 = vmatpush1.msra.mxu0 0.0
        %1232 = vmatprep.subr.mxu0 0.0
        %1233 = vmatpush1.msra.mxu0 0.0
        %1234 = vmatprep.subr.mxu0 0.0
        %1235 = vmatpush1.msra.mxu0 0.0
        %1236 = vmatprep.subr.mxu0 0.0
        %1237 = vmatpush1.msra.mxu0 0.0
        %1238 = vmatprep.subr.mxu0 0.0
        %1239 = vmatpush1.msra.mxu0 0.0
        %1240 = vmatprep.subr.mxu0 0.0
        %1241 = vmatpush1.msra.mxu0 0.0
        %1242 = vmatprep.subr.mxu0 0.0
        %1243 = vmatpush1.msra.mxu0 0.0
        %1244 = vmatprep.subr.mxu0 0.0
        %1245 = vmatpush1.msra.mxu0 0.0
        %1246 = vmatprep.mubr.f32.mxu0 %v1110
        %1247 = vmatmul.mubr.f32.gmra.mrb[0].mxu0 %v1047
        %v1248 = vpop.f32.mrb[0].mxu0
        %v1249 = vadd.f32 %v1179, %v1248
        %v1250 = vpop.f32.mrb[0].mxu0
        %1251 = vdwg.mxu0
        %v1252 = vmax.f32 %v1249, 0.0
        %s1253 = scalar_lea.vmem [#allocation2], 8
        %1254 = vst [vmem:[%s1253] sm:$0xff] %v1252
      $region56: #{cost_volume_forward.3} parent=51 // pred_fallthru
        _
      %p1255 = scmp.gt.s32.totalorder %s24, 0
      // Predicated region
      $region57: #{cost_volume_forward.3} parent=51 // pred_check
        %p1256 = pneg %p1255
      $region58: #{cost_volume_forward.3} parent=51 // pred_check_branch
        %1258 = sbr.rel (%p1256) target = $region60
      $region59: #{cost_volume_forward.3} parent=51 // pred_region
        %s1259 = sadd.s32 %s24, 1
        %p1260 = scmp.lt.s32.totalorder %s1259, 3
        %s1261 = scalar_select %p1260, %s1259, 3
        %p1262 = scmp.le.s32.totalorder %s1259, 3
        %s1263 = scalar_select %p1262, 1, 0
        %s1264 = scvt.s32.f32 %s1263
        %s1265 = sand.u32 %s1261, 127
        %s1266 = sand.u32 %s1265, 127
        %1267 = vrot.lane.b32.xlu0 %v398, %s1266
        %v1268 = vpop.permute.xlu0 %1267
        %s1269 = sadd.s32 %s1261, 4294967295
        %p1270 = scmp.ge.s32.totalorder %s1269, 0
        %p1271 = scmp.le.s32.totalorder %s1269, 3
        %p1272 = pnand %p1270, %p1271
        %p1273 = pneg %p1272
        %v1274 = vstv %s1269
        %vm1275 = vcmp.ge.s32.totalorder %v341, %v1274
        %s1276 = scalar_select %p1273, 1, 0
        %v1277 = vstv %s1276
        %vm1278 = vcmp.eq.s32.totalorder %v1277, 1
        %vm1279 = vmand %vm1275, %vm1278
        %v1280 = vsel %vm1279, 1, 0
        %v1281 = vcvt.s32.f32 %v1280
        %v1283 = vlaneseq
        %v1284 = vshrl.u32 %v1283, 7
        %v1285 = vsub.s32 0, %v1284
        %v1286 = vrot.slane %v1281, %v1285
        %v1288 = vmul.f32 %v397, %v1286
        %1289 = vrot.lane.b32.xlu0 %v1268, 127
        %v1290 = vpop.permute.xlu0 %1289
        %v1291 = vmul.f32 %v1290, %v1286
        %1292 = vrot.lane.b32.xlu0 %v1288, 17
        %v1293 = vpop.permute.xlu0 %1292
        %v1295 = vlaneseq
        %v1296 = vshrl.u32 %v1295, 7
        %v1297 = vsub.s32 0, %v1296
        %v1298 = vrot.slane %v352, %v1297
        %v1300 = vmul.f32 %v1293, %v1298
        %1301 = vst [vmem:[#allocation3] sm:$0xff] %v1300
        %1302 = vrot.lane.b32.xlu0 %v1291, 17
        %v1303 = vpop.permute.xlu0 %1302
        %v1304 = vmul.f32 %v1303, %v1298
        %1305 = vst [vmem:[#allocation3 + $0x8] sm:$0xff] %v1304
        %1306 = vrot.lane.b32.xlu0 %v1288, 16
        %v1307 = vpop.permute.xlu0 %1306
        %v1309 = vlaneseq
        %v1310 = vshrl.u32 %v1309, 7
        %v1311 = vsub.s32 0, %v1310
        %v1312 = vrot.slane %v358, %v1311
        %v1314 = vmul.f32 %v1307, %v1312
        %1315 = vst [vmem:[#allocation3 + $0x10] sm:$0xff] %v1314
        %1316 = vrot.lane.b32.xlu0 %v1291, 16
        %v1317 = vpop.permute.xlu0 %1316
        %v1318 = vmul.f32 %v1317, %v1312
        %1319 = vst [vmem:[#allocation3 + $0x18] sm:$0xff] %v1318
        %1320 = vrot.lane.b32.xlu0 %v1288, 15
        %v1321 = vpop.permute.xlu0 %1320
        %v1323 = vlaneseq
        %v1324 = vshrl.u32 %v1323, 7
        %v1325 = vsub.s32 0, %v1324
        %v1326 = vrot.slane %v365, %v1325
        %v1328 = vmul.f32 %v1321, %v1326
        %1329 = vst [vmem:[#allocation3 + $0x20] sm:$0xff] %v1328
        %1330 = vrot.lane.b32.xlu0 %v1291, 15
        %v1331 = vpop.permute.xlu0 %1330
        %v1332 = vmul.f32 %v1331, %v1326
        %1333 = vst [vmem:[#allocation3 + $0x28] sm:$0xff] %v1332
        %1334 = vrot.lane.b32.xlu0 %v1288, 1
        %v1335 = vpop.permute.xlu0 %1334
        %v1337 = vlaneseq
        %v1338 = vshrl.u32 %v1337, 7
        %v1339 = vsub.s32 0, %v1338
        %v1340 = vrot.slane %v372, %v1339
        %v1342 = vmul.f32 %v1335, %v1340
        %1343 = vst [vmem:[#allocation3 + $0x30] sm:$0xff] %v1342
        %1344 = vrot.lane.b32.xlu0 %v1291, 1
        %v1345 = vpop.permute.xlu0 %1344
        %v1346 = vmul.f32 %v1345, %v1340
        %1347 = vst [vmem:[#allocation3 + $0x38] sm:$0xff] %v1346
        %v1349 = vlaneseq
        %v1350 = vshrl.u32 %v1349, 7
        %v1351 = vsub.s32 0, %v1350
        %v1352 = vrot.slane %v376, %v1351
        %v1354 = vmul.f32 %v1288, %v1352
        %1355 = vst [vmem:[#allocation3 + $0x40] sm:$0xff] %v1354
        %v1356 = vmul.f32 %v1291, %v1352
        %1357 = vst [vmem:[#allocation3 + $0x48] sm:$0xff] %v1356
        %1358 = vrot.lane.b32.xlu0 %v1288, 127
        %v1359 = vpop.permute.xlu0 %1358
        %v1361 = vlaneseq
        %v1362 = vshrl.u32 %v1361, 7
        %v1363 = vsub.s32 0, %v1362
        %v1364 = vrot.slane %v380, %v1363
        %v1366 = vmul.f32 %v1359, %v1364
        %1367 = vst [vmem:[#allocation3 + $0x50] sm:$0xff] %v1366
        %1368 = vrot.lane.b32.xlu0 %v1291, 127
        %v1369 = vpop.permute.xlu0 %1368
        %v1370 = vmul.f32 %v1369, %v1364
        %1371 = vst [vmem:[#allocation3 + $0x58] sm:$0xff] %v1370
        %1372 = vrot.lane.b32.xlu0 %v1288, 113
        %v1373 = vpop.permute.xlu0 %1372
        %v1375 = vlaneseq
        %v1376 = vshrl.u32 %v1375, 7
        %v1377 = vsub.s32 0, %v1376
        %v1378 = vrot.slane %v388, %v1377
        %v1380 = vmul.f32 %v1373, %v1378
        %1381 = vst [vmem:[#allocation3 + $0x60] sm:$0xff] %v1380
        %1382 = vrot.lane.b32.xlu0 %v1291, 113
        %v1383 = vpop.permute.xlu0 %1382
        %v1384 = vmul.f32 %v1383, %v1378
        %1385 = vst [vmem:[#allocation3 + $0x68] sm:$0xff] %v1384
        %1386 = vrot.lane.b32.xlu0 %v1288, 112
        %v1387 = vpop.permute.xlu0 %1386
        %v1389 = vlaneseq
        %v1390 = vshrl.u32 %v1389, 7
        %v1391 = vsub.s32 0, %v1390
        %v1392 = vrot.slane %v392, %v1391
        %v1394 = vmul.f32 %v1387, %v1392
        %1395 = vst [vmem:[#allocation3 + $0x70] sm:$0xff] %v1394
        %1396 = vrot.lane.b32.xlu0 %v1291, 112
        %v1397 = vpop.permute.xlu0 %1396
        %v1398 = vmul.f32 %v1397, %v1392
        %1399 = vst [vmem:[#allocation3 + $0x78] sm:$0xff] %v1398
        %1400 = vrot.lane.b32.xlu0 %v1288, 111
        %v1401 = vpop.permute.xlu0 %1400
        %v1403 = vlaneseq
        %v1404 = vshrl.u32 %v1403, 7
        %v1405 = vsub.s32 0, %v1404
        %v1406 = vrot.slane %v396, %v1405
        %v1408 = vmul.f32 %v1401, %v1406
        %1409 = vst [vmem:[#allocation3 + $0x80] sm:$0xff] %v1408
        %1410 = vrot.lane.b32.xlu0 %v1291, 111
        %v1411 = vpop.permute.xlu0 %1410
        %v1412 = vmul.f32 %v1411, %v1406
        %1413 = vst [vmem:[#allocation3 + $0x88] sm:$0xff] %v1412
        %p1414 = scmp.ge.s32.totalorder %s1261, 0
        %p1415 = scmp.le.s32.totalorder %s1261, 3
        %p1416 = pnand %p1414, %p1415
        %p1417 = pneg %p1416
        %v1418 = vstv %s1261
        %vm1419 = vcmp.ge.s32.totalorder %v341, %v1418
        %s1420 = scalar_select %p1417, 1, 0
        %v1421 = vstv %s1420
        %vm1422 = vcmp.eq.s32.totalorder %v1421, 1
        %vm1423 = vmand %vm1419, %vm1422
        %v1424 = vsel %vm1423, 1, 0
        %v1425 = vcvt.s32.f32 %v1424
        %v1427 = vlaneseq
        %v1428 = vshrl.u32 %v1427, 7
        %v1429 = vsub.s32 0, %v1428
        %v1430 = vrot.slane %v1425, %v1429
        %v1432 = vmul.f32 %v397, %v1430
        %v1433 = vmul.f32 %v1268, %v1430
        %1434 = vrot.lane.b32.xlu0 %v1432, 17
        %v1435 = vpop.permute.xlu0 %1434
        %v1436 = vmul.f32 %v1435, %v1298
        %1437 = vst [vmem:[#allocation3 + $0x90] sm:$0xff] %v1436
        %1438 = vrot.lane.b32.xlu0 %v1433, 17
        %v1439 = vpop.permute.xlu0 %1438
        %v1440 = vmul.f32 %v1439, %v1298
        %1441 = vst [vmem:[#allocation3 + $0x98] sm:$0xff] %v1440
        %1442 = vrot.lane.b32.xlu0 %v1432, 16
        %v1443 = vpop.permute.xlu0 %1442
        %v1444 = vmul.f32 %v1443, %v1312
        %1445 = vst [vmem:[#allocation3 + $0xa0] sm:$0xff] %v1444
        %1446 = vrot.lane.b32.xlu0 %v1433, 16
        %v1447 = vpop.permute.xlu0 %1446
        %v1448 = vmul.f32 %v1447, %v1312
        %1449 = vst [vmem:[#allocation3 + $0xa8] sm:$0xff] %v1448
        %1450 = vrot.lane.b32.xlu0 %v1432, 15
        %v1451 = vpop.permute.xlu0 %1450
        %v1452 = vmul.f32 %v1451, %v1326
        %1453 = vst [vmem:[#allocation3 + $0xb0] sm:$0xff] %v1452
        %1454 = vrot.lane.b32.xlu0 %v1433, 15
        %v1455 = vpop.permute.xlu0 %1454
        %v1456 = vmul.f32 %v1455, %v1326
        %1457 = vst [vmem:[#allocation3 + $0xb8] sm:$0xff] %v1456
        %1458 = vrot.lane.b32.xlu0 %v1432, 1
        %v1459 = vpop.permute.xlu0 %1458
        %v1460 = vmul.f32 %v1459, %v1340
        %1461 = vst [vmem:[#allocation3 + $0xc0] sm:$0xff] %v1460
        %1462 = vrot.lane.b32.xlu0 %v1433, 1
        %v1463 = vpop.permute.xlu0 %1462
        %v1464 = vmul.f32 %v1463, %v1340
        %1465 = vst [vmem:[#allocation3 + $0xc8] sm:$0xff] %v1464
        %v1466 = vmul.f32 %v1432, %v1352
        %1467 = vst [vmem:[#allocation3 + $0xd0] sm:$0xff] %v1466
        %v1468 = vmul.f32 %v1433, %v1352
        %1469 = vst [vmem:[#allocation3 + $0xd8] sm:$0xff] %v1468
        %1470 = vrot.lane.b32.xlu0 %v1432, 127
        %v1471 = vpop.permute.xlu0 %1470
        %v1472 = vmul.f32 %v1471, %v1364
        %1473 = vst [vmem:[#allocation3 + $0xe0] sm:$0xff] %v1472
        %1474 = vrot.lane.b32.xlu0 %v1433, 127
        %v1475 = vpop.permute.xlu0 %1474
        %v1476 = vmul.f32 %v1475, %v1364
        %1477 = vst [vmem:[#allocation3 + $0xe8] sm:$0xff] %v1476
        %1478 = vrot.lane.b32.xlu0 %v1432, 113
        %v1479 = vpop.permute.xlu0 %1478
        %v1480 = vmul.f32 %v1479, %v1378
        %1481 = vst [vmem:[#allocation3 + $0xf0] sm:$0xff] %v1480
        %1482 = vrot.lane.b32.xlu0 %v1433, 113
        %v1483 = vpop.permute.xlu0 %1482
        %v1484 = vmul.f32 %v1483, %v1378
        %1485 = vst [vmem:[#allocation3 + $0xf8] sm:$0xff] %v1484
        %1486 = vrot.lane.b32.xlu0 %v1432, 112
        %v1487 = vpop.permute.xlu0 %1486
        %v1488 = vmul.f32 %v1487, %v1392
        %1489 = vst [vmem:[#allocation3 + $0x100] sm:$0xff] %v1488
        %1490 = vrot.lane.b32.xlu0 %v1433, 112
        %v1491 = vpop.permute.xlu0 %1490
        %v1492 = vmul.f32 %v1491, %v1392
        %1493 = vst [vmem:[#allocation3 + $0x108] sm:$0xff] %v1492
        %1494 = vrot.lane.b32.xlu0 %v1432, 111
        %v1495 = vpop.permute.xlu0 %1494
        %v1496 = vmul.f32 %v1495, %v1406
        %1497 = vst [vmem:[#allocation3 + $0x110] sm:$0xff] %v1496
        %1498 = vrot.lane.b32.xlu0 %v1433, 111
        %v1499 = vpop.permute.xlu0 %1498
        %v1500 = vmul.f32 %v1499, %v1406
        %1501 = vst [vmem:[#allocation3 + $0x118] sm:$0xff] %v1500
        %s1502 = sadd.s32 %s1261, 1
        %p1503 = scmp.ge.s32.totalorder %s1502, 0
        %p1504 = scmp.le.s32.totalorder %s1502, 3
        %p1505 = pnand %p1503, %p1504
        %p1506 = pneg %p1505
        %v1507 = vstv %s1502
        %vm1508 = vcmp.ge.s32.totalorder %v341, %v1507
        %s1509 = scalar_select %p1506, 1, 0
        %v1510 = vstv %s1509
        %vm1511 = vcmp.eq.s32.totalorder %v1510, 1
        %vm1512 = vmand %vm1508, %vm1511
        %v1513 = vsel %vm1512, 1, 0
        %v1514 = vcvt.s32.f32 %v1513
        %v1516 = vlaneseq
        %v1517 = vshrl.u32 %v1516, 7
        %v1518 = vsub.s32 0, %v1517
        %v1519 = vrot.slane %v1514, %v1518
        %v1521 = vmul.f32 %v397, %v1519
        %1522 = vrot.lane.b32.xlu0 %v1268, 1
        %v1523 = vpop.permute.xlu0 %1522
        %v1524 = vmul.f32 %v1523, %v1519
        %1525 = vrot.lane.b32.xlu0 %v1521, 17
        %v1526 = vpop.permute.xlu0 %1525
        %v1527 = vmul.f32 %v1526, %v1298
        %1528 = vst [vmem:[#allocation3 + $0x120] sm:$0xff] %v1527
        %1529 = vrot.lane.b32.xlu0 %v1524, 17
        %v1530 = vpop.permute.xlu0 %1529
        %v1531 = vmul.f32 %v1530, %v1298
        %1532 = vst [vmem:[#allocation3 + $0x128] sm:$0xff] %v1531
        %1533 = vrot.lane.b32.xlu0 %v1521, 16
        %v1534 = vpop.permute.xlu0 %1533
        %v1535 = vmul.f32 %v1534, %v1312
        %1536 = vst [vmem:[#allocation3 + $0x130] sm:$0xff] %v1535
        %1537 = vrot.lane.b32.xlu0 %v1524, 16
        %v1538 = vpop.permute.xlu0 %1537
        %v1539 = vmul.f32 %v1538, %v1312
        %1540 = vst [vmem:[#allocation3 + $0x138] sm:$0xff] %v1539
        %1541 = vrot.lane.b32.xlu0 %v1521, 15
        %v1542 = vpop.permute.xlu0 %1541
        %v1543 = vmul.f32 %v1542, %v1326
        %1544 = vst [vmem:[#allocation3 + $0x140] sm:$0xff] %v1543
        %1545 = vrot.lane.b32.xlu0 %v1524, 15
        %v1546 = vpop.permute.xlu0 %1545
        %v1547 = vmul.f32 %v1546, %v1326
        %1548 = vst [vmem:[#allocation3 + $0x148] sm:$0xff] %v1547
        %1549 = vrot.lane.b32.xlu0 %v1521, 1
        %v1550 = vpop.permute.xlu0 %1549
        %v1551 = vmul.f32 %v1550, %v1340
        %1552 = vst [vmem:[#allocation3 + $0x150] sm:$0xff] %v1551
        %1553 = vrot.lane.b32.xlu0 %v1524, 1
        %v1554 = vpop.permute.xlu0 %1553
        %v1555 = vmul.f32 %v1554, %v1340
        %1556 = vst [vmem:[#allocation3 + $0x158] sm:$0xff] %v1555
        %v1557 = vmul.f32 %v1521, %v1352
        %1558 = vst [vmem:[#allocation3 + $0x160] sm:$0xff] %v1557
        %v1559 = vmul.f32 %v1524, %v1352
        %1560 = vst [vmem:[#allocation3 + $0x168] sm:$0xff] %v1559
        %1561 = vrot.lane.b32.xlu0 %v1521, 127
        %v1562 = vpop.permute.xlu0 %1561
        %v1563 = vmul.f32 %v1562, %v1364
        %1564 = vst [vmem:[#allocation3 + $0x170] sm:$0xff] %v1563
        %1565 = vrot.lane.b32.xlu0 %v1524, 127
        %v1566 = vpop.permute.xlu0 %1565
        %v1567 = vmul.f32 %v1566, %v1364
        %1568 = vst [vmem:[#allocation3 + $0x178] sm:$0xff] %v1567
        %1569 = vrot.lane.b32.xlu0 %v1521, 113
        %v1570 = vpop.permute.xlu0 %1569
        %v1571 = vmul.f32 %v1570, %v1378
        %1572 = vst [vmem:[#allocation3 + $0x180] sm:$0xff] %v1571
        %1573 = vrot.lane.b32.xlu0 %v1524, 113
        %v1574 = vpop.permute.xlu0 %1573
        %v1575 = vmul.f32 %v1574, %v1378
        %1576 = vst [vmem:[#allocation3 + $0x188] sm:$0xff] %v1575
        %1577 = vrot.lane.b32.xlu0 %v1521, 112
        %v1578 = vpop.permute.xlu0 %1577
        %v1579 = vmul.f32 %v1578, %v1392
        %1580 = vst [vmem:[#allocation3 + $0x190] sm:$0xff] %v1579
        %1581 = vrot.lane.b32.xlu0 %v1524, 112
        %v1582 = vpop.permute.xlu0 %1581
        %v1583 = vmul.f32 %v1582, %v1392
        %1584 = vst [vmem:[#allocation3 + $0x198] sm:$0xff] %v1583
        %1585 = vrot.lane.b32.xlu0 %v1521, 111
        %v1586 = vpop.permute.xlu0 %1585
        %v1587 = vmul.f32 %v1586, %v1406
        %1588 = vst [vmem:[#allocation3 + $0x1a0] sm:$0xff] %v1587
        %1589 = vrot.lane.b32.xlu0 %v1524, 111
        %v1590 = vpop.permute.xlu0 %1589
        %v1591 = vmul.f32 %v1590, %v1406
        %1592 = vst [vmem:[#allocation3 + $0x1a8] sm:$0xff] %v1591
        %v1593 = vld [vmem:[%s4] sm:$0xff]
        %v1594 = vld [vmem:[%s4 + $0x8] sm:$0xff]
        %v1595 = vld [vmem:[%s4 + $0x10] sm:$0xff]
        %v1596 = vld [vmem:[%s4 + $0x18] sm:$0xff]
        %v1597 = vld [vmem:[#allocation3] sm:$0xff]
        %v1598 = vld [vmem:[#allocation3 + $0x8] sm:$0xff]
        %v1599 = vld [vmem:[#allocation3 + $0x10] sm:$0xff]
        %v1600 = vld [vmem:[#allocation3 + $0x18] sm:$0xff]
        %v1601 = vld [vmem:[#allocation3 + $0x20] sm:$0xff]
        %v1602 = vld [vmem:[#allocation3 + $0x28] sm:$0xff]
        %v1603 = vld [vmem:[#allocation3 + $0x30] sm:$0xff]
        %v1604 = vld [vmem:[#allocation3 + $0x38] sm:$0xff]
        %v1605 = vld [vmem:[#allocation3 + $0x40] sm:$0xff]
        %v1606 = vld [vmem:[#allocation3 + $0x48] sm:$0xff]
        %v1607 = vld [vmem:[#allocation3 + $0x50] sm:$0xff]
        %v1608 = vld [vmem:[#allocation3 + $0x58] sm:$0xff]
        %v1609 = vld [vmem:[#allocation3 + $0x60] sm:$0xff]
        %v1610 = vld [vmem:[#allocation3 + $0x68] sm:$0xff]
        %v1611 = vld [vmem:[#allocation3 + $0x70] sm:$0xff]
        %v1612 = vld [vmem:[#allocation3 + $0x78] sm:$0xff]
        %v1613 = vld [vmem:[#allocation3 + $0x80] sm:$0xff]
        %v1614 = vld [vmem:[#allocation3 + $0x88] sm:$0xff]
        %v1615 = vld [vmem:[#allocation3 + $0x90] sm:$0xff]
        %v1616 = vld [vmem:[#allocation3 + $0x98] sm:$0xff]
        %v1617 = vld [vmem:[#allocation3 + $0xa0] sm:$0xff]
        %v1618 = vld [vmem:[#allocation3 + $0xa8] sm:$0xff]
        %v1619 = vld [vmem:[#allocation3 + $0xb0] sm:$0xff]
        %v1620 = vld [vmem:[#allocation3 + $0xb8] sm:$0xff]
        %v1621 = vld [vmem:[#allocation3 + $0xc0] sm:$0xff]
        %v1622 = vld [vmem:[#allocation3 + $0xc8] sm:$0xff]
        %v1623 = vld [vmem:[#allocation3 + $0xd0] sm:$0xff]
        %v1624 = vld [vmem:[#allocation3 + $0xd8] sm:$0xff]
        %v1625 = vld [vmem:[#allocation3 + $0xe0] sm:$0xff]
        %v1626 = vld [vmem:[#allocation3 + $0xe8] sm:$0xff]
        %v1627 = vld [vmem:[#allocation3 + $0xf0] sm:$0xff]
        %v1628 = vld [vmem:[#allocation3 + $0xf8] sm:$0xff]
        %v1629 = vld [vmem:[#allocation3 + $0x100] sm:$0xff]
        %v1630 = vld [vmem:[#allocation3 + $0x108] sm:$0xff]
        %v1631 = vld [vmem:[#allocation3 + $0x110] sm:$0xff]
        %v1632 = vld [vmem:[#allocation3 + $0x118] sm:$0xff]
        %v1633 = vld [vmem:[#allocation3 + $0x120] sm:$0xff]
        %v1634 = vld [vmem:[#allocation3 + $0x128] sm:$0xff]
        %v1635 = vld [vmem:[#allocation3 + $0x130] sm:$0xff]
        %v1636 = vld [vmem:[#allocation3 + $0x138] sm:$0xff]
        %v1637 = vld [vmem:[#allocation3 + $0x140] sm:$0xff]
        %v1638 = vld [vmem:[#allocation3 + $0x148] sm:$0xff]
        %v1639 = vld [vmem:[#allocation3 + $0x150] sm:$0xff]
        %v1640 = vld [vmem:[#allocation3 + $0x158] sm:$0xff]
        %v1641 = vld [vmem:[#allocation3 + $0x160] sm:$0xff]
        %v1642 = vld [vmem:[#allocation3 + $0x168] sm:$0xff]
        %v1643 = vld [vmem:[#allocation3 + $0x170] sm:$0xff]
        %v1644 = vld [vmem:[#allocation3 + $0x178] sm:$0xff]
        %v1645 = vld [vmem:[#allocation3 + $0x180] sm:$0xff]
        %v1646 = vld [vmem:[#allocation3 + $0x188] sm:$0xff]
        %v1647 = vld [vmem:[#allocation3 + $0x190] sm:$0xff]
        %v1648 = vld [vmem:[#allocation3 + $0x198] sm:$0xff]
        %v1649 = vld [vmem:[#allocation3 + $0x1a0] sm:$0xff]
        %v1650 = vld [vmem:[#allocation3 + $0x1a8] sm:$0xff]
        %v1651 = vld [vmem:[%s5] sm:$0xff]
        %1653 = vset.pattern.permute.xlu0 0
        %1654 = vperm.xlu0 %1653, %v1651
        %v1655 = vpop.permute.xlu0 %1654
        %vm1657 = vcmask 392192
        %v1659 = vsel %vm1657, %v1596, 0
        %1661 = vmatprep.subr.mxu0 0.0
        %1662 = vmatpush1.msra.mxu0 %v1597
        %1663 = vmatprep.subr.mxu0 0.0
        %1664 = vmatpush1.msra.mxu0 %v1598
        %1665 = vmatprep.subr.mxu0 0.0
        %1666 = vmatpush1.msra.mxu0 %v1599
        %1667 = vmatprep.subr.mxu0 0.0
        %1668 = vmatpush1.msra.mxu0 %v1600
        %1669 = vmatprep.subr.mxu0 0.0
        %1670 = vmatpush1.msra.mxu0 %v1601
        %1671 = vmatprep.subr.mxu0 0.0
        %1672 = vmatpush1.msra.mxu0 %v1602
        %1673 = vmatprep.subr.mxu0 0.0
        %1674 = vmatpush1.msra.mxu0 %v1603
        %1675 = vmatprep.subr.mxu0 0.0
        %1676 = vmatpush1.msra.mxu0 %v1604
        %1677 = vmatprep.subr.mxu0 0.0
        %1678 = vmatpush1.msra.mxu0 %v1605
        %1679 = vmatprep.subr.mxu0 0.0
        %1680 = vmatpush1.msra.mxu0 %v1606
        %1681 = vmatprep.subr.mxu0 0.0
        %1682 = vmatpush1.msra.mxu0 %v1607
        %1683 = vmatprep.subr.mxu0 0.0
        %1684 = vmatpush1.msra.mxu0 %v1608
        %1685 = vmatprep.subr.mxu0 0.0
        %1686 = vmatpush1.msra.mxu0 %v1609
        %1687 = vmatprep.subr.mxu0 0.0
        %1688 = vmatpush1.msra.mxu0 %v1610
        %1689 = vmatprep.subr.mxu0 0.0
        %1690 = vmatpush1.msra.mxu0 %v1611
        %1691 = vmatprep.subr.mxu0 0.0
        %1692 = vmatpush1.msra.mxu0 %v1612
        %1693 = vmatprep.subr.mxu0 0.0
        %1694 = vmatpush1.msra.mxu0 %v1613
        %1695 = vmatprep.subr.mxu0 0.0
        %1696 = vmatpush1.msra.mxu0 %v1614
        %1697 = vmatprep.subr.mxu0 0.0
        %1698 = vmatpush1.msra.mxu0 %v1615
        %1699 = vmatprep.subr.mxu0 0.0
        %1700 = vmatpush1.msra.mxu0 %v1616
        %1701 = vmatprep.subr.mxu0 0.0
        %1702 = vmatpush1.msra.mxu0 %v1617
        %1703 = vmatprep.subr.mxu0 0.0
        %1704 = vmatpush1.msra.mxu0 %v1618
        %1705 = vmatprep.subr.mxu0 0.0
        %1706 = vmatpush1.msra.mxu0 %v1619
        %1707 = vmatprep.subr.mxu0 0.0
        %1708 = vmatpush1.msra.mxu0 %v1620
        %1709 = vmatprep.subr.mxu0 0.0
        %1710 = vmatpush1.msra.mxu0 %v1621
        %1711 = vmatprep.subr.mxu0 0.0
        %1712 = vmatpush1.msra.mxu0 %v1622
        %1713 = vmatprep.subr.mxu0 0.0
        %1714 = vmatpush1.msra.mxu0 %v1623
        %1715 = vmatprep.subr.mxu0 0.0
        %1716 = vmatpush1.msra.mxu0 %v1624
        %1717 = vmatprep.subr.mxu0 0.0
        %1718 = vmatpush1.msra.mxu0 %v1625
        %1719 = vmatprep.subr.mxu0 0.0
        %1720 = vmatpush1.msra.mxu0 %v1626
        %1721 = vmatprep.subr.mxu0 0.0
        %1722 = vmatpush1.msra.mxu0 %v1627
        %1723 = vmatprep.subr.mxu0 0.0
        %1724 = vmatpush1.msra.mxu0 %v1628
        %1725 = vmatprep.mubr.f32.mxu0 %v1594
        %1726 = vmatmul.mubr.f32.gmra.mrb[0].mxu0 %v1593
        %v1727 = vpop.f32.mrb[0].mxu0
        %v1728 = vadd.f32 %v1655, %v1727
        %v1729 = vpop.f32.mrb[0].mxu0
        %1730 = vdwg.mxu0
        %1731 = vmatprep.subr.mxu0 0.0
        %1732 = vmatpush1.msra.mxu0 %v1629
        %1733 = vmatprep.subr.mxu0 0.0
        %1734 = vmatpush1.msra.mxu0 %v1630
        %1735 = vmatprep.subr.mxu0 0.0
        %1736 = vmatpush1.msra.mxu0 %v1631
        %1737 = vmatprep.subr.mxu0 0.0
        %1738 = vmatpush1.msra.mxu0 %v1632
        %1739 = vmatprep.subr.mxu0 0.0
        %1740 = vmatpush1.msra.mxu0 %v1633
        %1741 = vmatprep.subr.mxu0 0.0
        %1742 = vmatpush1.msra.mxu0 %v1634
        %1743 = vmatprep.subr.mxu0 0.0
        %1744 = vmatpush1.msra.mxu0 %v1635
        %1745 = vmatprep.subr.mxu0 0.0
        %1746 = vmatpush1.msra.mxu0 %v1636
        %1747 = vmatprep.subr.mxu0 0.0
        %1748 = vmatpush1.msra.mxu0 %v1637
        %1749 = vmatprep.subr.mxu0 0.0
        %1750 = vmatpush1.msra.mxu0 %v1638
        %1751 = vmatprep.subr.mxu0 0.0
        %1752 = vmatpush1.msra.mxu0 %v1639
        %1753 = vmatprep.subr.mxu0 0.0
        %1754 = vmatpush1.msra.mxu0 %v1640
        %1755 = vmatprep.subr.mxu0 0.0
        %1756 = vmatpush1.msra.mxu0 %v1641
        %1757 = vmatprep.subr.mxu0 0.0
        %1758 = vmatpush1.msra.mxu0 %v1642
        %1759 = vmatprep.subr.mxu0 0.0
        %1760 = vmatpush1.msra.mxu0 %v1643
        %1761 = vmatprep.subr.mxu0 0.0
        %1762 = vmatpush1.msra.mxu0 %v1644
        %1763 = vmatprep.subr.mxu0 0.0
        %1764 = vmatpush1.msra.mxu0 %v1645
        %1765 = vmatprep.subr.mxu0 0.0
        %1766 = vmatpush1.msra.mxu0 %v1646
        %1767 = vmatprep.subr.mxu0 0.0
        %1768 = vmatpush1.msra.mxu0 %v1647
        %1769 = vmatprep.subr.mxu0 0.0
        %1770 = vmatpush1.msra.mxu0 %v1648
        %1771 = vmatprep.subr.mxu0 0.0
        %1772 = vmatpush1.msra.mxu0 %v1649
        %1773 = vmatprep.subr.mxu0 0.0
        %1774 = vmatpush1.msra.mxu0 %v1650
        %1775 = vmatprep.subr.mxu0 0.0
        %1776 = vmatpush1.msra.mxu0 0.0
        %1777 = vmatprep.subr.mxu0 0.0
        %1778 = vmatpush1.msra.mxu0 0.0
        %1779 = vmatprep.subr.mxu0 0.0
        %1780 = vmatpush1.msra.mxu0 0.0
        %1781 = vmatprep.subr.mxu0 0.0
        %1782 = vmatpush1.msra.mxu0 0.0
        %1783 = vmatprep.subr.mxu0 0.0
        %1784 = vmatpush1.msra.mxu0 0.0
        %1785 = vmatprep.subr.mxu0 0.0
        %1786 = vmatpush1.msra.mxu0 0.0
        %1787 = vmatprep.subr.mxu0 0.0
        %1788 = vmatpush1.msra.mxu0 0.0
        %1789 = vmatprep.subr.mxu0 0.0
        %1790 = vmatpush1.msra.mxu0 0.0
        %1791 = vmatprep.subr.mxu0 0.0
        %1792 = vmatpush1.msra.mxu0 0.0
        %1793 = vmatprep.subr.mxu0 0.0
        %1794 = vmatpush1.msra.mxu0 0.0
        %1795 = vmatprep.mubr.f32.mxu0 %v1659
        %1796 = vmatmul.mubr.f32.gmra.mrb[0].mxu0 %v1595
        %v1797 = vpop.f32.mrb[0].mxu0
        %v1798 = vadd.f32 %v1728, %v1797
        %v1799 = vpop.f32.mrb[0].mxu0
        %1800 = vdwg.mxu0
        %v1801 = vmax.f32 %v1798, 0.0
        %v1802 = vstv %s1264
        %v1803 = vmul.f32 %v1801, %v1802
        %p1804 = scmp.lt.s32.totalorder %s1259, 0
        %s1805 = ssub.s32 0, %s1259
        %s1806 = scalar_select %p1804, %s1805, %s1259
        %s1807 = sdiv.u32.pop %s1806, 3
        %s1808 = srem.u32.pop %s1806, 3
        %s1809 = ssub.s32 0, %s1808
        %s1810 = scalar_select %p1804, %s1809, %s1808
        %p1811 = scmp.eq.s32.totalorder %s1810, 0
        // Predicated region
        $region61: #{cost_volume_forward.3} parent=59 // pred_check
          %p1812 = pneg %p1811
        $region62: #{cost_volume_forward.3} parent=59 // pred_check_branch
          %1814 = sbr.rel (%p1812) target = $region64
        $region63: #{cost_volume_forward.3} parent=59 // pred_region
          %1815 = vst [vmem:[#allocation2] sm:$0xff] %v1803
        $region64: #{cost_volume_forward.3} parent=59 // pred_fallthru
          _
        %p1816 = scmp.eq.s32.totalorder %s1810, 1
        // Predicated region
        $region65: #{cost_volume_forward.3} parent=59 // pred_check
          %p1817 = pneg %p1816
        $region66: #{cost_volume_forward.3} parent=59 // pred_check_branch
          %1819 = sbr.rel (%p1817) target = $region68
        $region67: #{cost_volume_forward.3} parent=59 // pred_region
          %s1820 = scalar_lea.vmem [#allocation2], 8
          %1821 = vst [vmem:[%s1820] sm:$0xff] %v1803
        $region68: #{cost_volume_forward.3} parent=59 // pred_fallthru
          _
        %p1822 = scmp.eq.s32.totalorder %s1810, 2
        // Predicated region
        $region69: #{cost_volume_forward.3} parent=59 // pred_check
          %p1823 = pneg %p1822
        $region70: #{cost_volume_forward.3} parent=59 // pred_check_branch
          %1825 = sbr.rel (%p1823) target = $region72
        $region71: #{cost_volume_forward.3} parent=59 // pred_region
          %s1826 = scalar_lea.vmem [#allocation2], 16
          %1827 = vst [vmem:[%s1826] sm:$0xff] %v1803
        $region72: #{cost_volume_forward.3} parent=59 // pred_fallthru
          _
      $region60: #{cost_volume_forward.3} parent=51 // pred_fallthru
        _
      %s1828 = sadd.s32 %s24, 2
      %p1829 = scmp.lt.s32.totalorder %s1828, 0
      %s1830 = ssub.s32 0, %s1828
      %s1831 = scalar_select %p1829, %s1830, %s1828
      %s1832 = sdiv.u32.pop %s1831, 3
      %s1833 = srem.u32.pop %s1831, 3
      %s1834 = ssub.s32 0, %s1833
      %s1835 = scalar_select %p1829, %s1834, %s1833
      %s1836 = smul.u32 %s1835, 8
      %s1837 = scalar_lea.vmem [#allocation2], %s1836
      %v1838 = vld [vmem:[%s1837] sm:$0xff]
      %1839 = vrot.lane.b32.xlu0 %v1838, 17
      %v1840 = vpop.permute.xlu0 %1839
      %v1842 = vlaneseq
      %v1843 = vshrl.u32 %v1842, 7
      %v1844 = vsub.s32 0, %v1843
      %v1845 = vrot.slane %v352, %v1844
      %v1847 = vmul.f32 %v1840, %v1845
      %1848 = vst [vmem:[#allocation4] sm:$0xff] %v1847
      %1849 = vrot.lane.b32.xlu0 %v1838, 16
      %v1850 = vpop.permute.xlu0 %1849
      %v1852 = vlaneseq
      %v1853 = vshrl.u32 %v1852, 7
      %v1854 = vsub.s32 0, %v1853
      %v1855 = vrot.slane %v358, %v1854
      %v1857 = vmul.f32 %v1850, %v1855
      %1858 = vst [vmem:[#allocation4 + $0x8] sm:$0xff] %v1857
      %1859 = vrot.lane.b32.xlu0 %v1838, 15
      %v1860 = vpop.permute.xlu0 %1859
      %v1862 = vlaneseq
      %v1863 = vshrl.u32 %v1862, 7
      %v1864 = vsub.s32 0, %v1863
      %v1865 = vrot.slane %v365, %v1864
      %v1867 = vmul.f32 %v1860, %v1865
      %1868 = vst [vmem:[#allocation4 + $0x10] sm:$0xff] %v1867
      %1869 = vrot.lane.b32.xlu0 %v1838, 1
      %v1870 = vpop.permute.xlu0 %1869
      %v1872 = vlaneseq
      %v1873 = vshrl.u32 %v1872, 7
      %v1874 = vsub.s32 0, %v1873
      %v1875 = vrot.slane %v372, %v1874
      %v1877 = vmul.f32 %v1870, %v1875
      %1878 = vst [vmem:[#allocation4 + $0x18] sm:$0xff] %v1877
      %v1880 = vlaneseq
      %v1881 = vshrl.u32 %v1880, 7
      %v1882 = vsub.s32 0, %v1881
      %v1883 = vrot.slane %v376, %v1882
      %v1885 = vmul.f32 %v1838, %v1883
      %1886 = vst [vmem:[#allocation4 + $0x20] sm:$0xff] %v1885
      %1887 = vrot.lane.b32.xlu0 %v1838, 127
      %v1888 = vpop.permute.xlu0 %1887
      %v1890 = vlaneseq
      %v1891 = vshrl.u32 %v1890, 7
      %v1892 = vsub.s32 0, %v1891
      %v1893 = vrot.slane %v380, %v1892
      %v1895 = vmul.f32 %v1888, %v1893
      %1896 = vst [vmem:[#allocation4 + $0x28] sm:$0xff] %v1895
      %1897 = vrot.lane.b32.xlu0 %v1838, 113
      %v1898 = vpop.permute.xlu0 %1897
      %v1900 = vlaneseq
      %v1901 = vshrl.u32 %v1900, 7
      %v1902 = vsub.s32 0, %v1901
      %v1903 = vrot.slane %v388, %v1902
      %v1905 = vmul.f32 %v1898, %v1903
      %1906 = vst [vmem:[#allocation4 + $0x30] sm:$0xff] %v1905
      %1907 = vrot.lane.b32.xlu0 %v1838, 112
      %v1908 = vpop.permute.xlu0 %1907
      %v1910 = vlaneseq
      %v1911 = vshrl.u32 %v1910, 7
      %v1912 = vsub.s32 0, %v1911
      %v1913 = vrot.slane %v392, %v1912
      %v1915 = vmul.f32 %v1908, %v1913
      %1916 = vst [vmem:[#allocation4 + $0x38] sm:$0xff] %v1915
      %1917 = vrot.lane.b32.xlu0 %v1838, 111
      %v1918 = vpop.permute.xlu0 %1917
      %v1920 = vlaneseq
      %v1921 = vshrl.u32 %v1920, 7
      %v1922 = vsub.s32 0, %v1921
      %v1923 = vrot.slane %v396, %v1922
      %v1925 = vmul.f32 %v1918, %v1923
      %1926 = vst [vmem:[#allocation4 + $0x40] sm:$0xff] %v1925
      %s1927 = sadd.s32 %s24, 3
      %p1928 = scmp.lt.s32.totalorder %s1927, 0
      %s1929 = ssub.s32 0, %s1927
      %s1930 = scalar_select %p1928, %s1929, %s1927
      %s1931 = sdiv.u32.pop %s1930, 3
      %s1932 = srem.u32.pop %s1930, 3
      %s1933 = ssub.s32 0, %s1932
      %s1934 = scalar_select %p1928, %s1933, %s1932
      %s1935 = smul.u32 %s1934, 8
      %s1936 = scalar_lea.vmem [#allocation2], %s1935
      %v1937 = vld [vmem:[%s1936] sm:$0xff]
      %1938 = vrot.lane.b32.xlu0 %v1937, 17
      %v1939 = vpop.permute.xlu0 %1938
      %v1940 = vmul.f32 %v1939, %v1845
      %1941 = vst [vmem:[#allocation4 + $0x48] sm:$0xff] %v1940
      %1942 = vrot.lane.b32.xlu0 %v1937, 16
      %v1943 = vpop.permute.xlu0 %1942
      %v1944 = vmul.f32 %v1943, %v1855
      %1945 = vst [vmem:[#allocation4 + $0x50] sm:$0xff] %v1944
      %1946 = vrot.lane.b32.xlu0 %v1937, 15
      %v1947 = vpop.permute.xlu0 %1946
      %v1948 = vmul.f32 %v1947, %v1865
      %1949 = vst [vmem:[#allocation4 + $0x58] sm:$0xff] %v1948
      %1950 = vrot.lane.b32.xlu0 %v1937, 1
      %v1951 = vpop.permute.xlu0 %1950
      %v1952 = vmul.f32 %v1951, %v1875
      %1953 = vst [vmem:[#allocation4 + $0x60] sm:$0xff] %v1952
      %v1954 = vmul.f32 %v1937, %v1883
      %1955 = vst [vmem:[#allocation4 + $0x68] sm:$0xff] %v1954
      %1956 = vrot.lane.b32.xlu0 %v1937, 127
      %v1957 = vpop.permute.xlu0 %1956
      %v1958 = vmul.f32 %v1957, %v1893
      %1959 = vst [vmem:[#allocation4 + $0x70] sm:$0xff] %v1958
      %1960 = vrot.lane.b32.xlu0 %v1937, 113
      %v1961 = vpop.permute.xlu0 %1960
      %v1962 = vmul.f32 %v1961, %v1903
      %1963 = vst [vmem:[#allocation4 + $0x78] sm:$0xff] %v1962
      %1964 = vrot.lane.b32.xlu0 %v1937, 112
      %v1965 = vpop.permute.xlu0 %1964
      %v1966 = vmul.f32 %v1965, %v1913
      %1967 = vst [vmem:[#allocation4 + $0x80] sm:$0xff] %v1966
      %1968 = vrot.lane.b32.xlu0 %v1937, 111
      %v1969 = vpop.permute.xlu0 %1968
      %v1970 = vmul.f32 %v1969, %v1923
      %1971 = vst [vmem:[#allocation4 + $0x88] sm:$0xff] %v1970
      %s1972 = sadd.s32 %s24, 4
      %p1973 = scmp.lt.s32.totalorder %s1972, 0
      %s1974 = ssub.s32 0, %s1972
      %s1975 = scalar_select %p1973, %s1974, %s1972
      %s1976 = sdiv.u32.pop %s1975, 3
      %s1977 = srem.u32.pop %s1975, 3
      %s1978 = ssub.s32 0, %s1977
      %s1979 = scalar_select %p1973, %s1978, %s1977
      %s1980 = smul.u32 %s1979, 8
      %s1981 = scalar_lea.vmem [#allocation2], %s1980
      %v1982 = vld [vmem:[%s1981] sm:$0xff]
      %1983 = vrot.lane.b32.xlu0 %v1982, 17
      %v1984 = vpop.permute.xlu0 %1983
      %v1985 = vmul.f32 %v1984, %v1845
      %1986 = vst [vmem:[#allocation4 + $0x90] sm:$0xff] %v1985
      %1987 = vrot.lane.b32.xlu0 %v1982, 16
      %v1988 = vpop.permute.xlu0 %1987
      %v1989 = vmul.f32 %v1988, %v1855
      %1990 = vst [vmem:[#allocation4 + $0x98] sm:$0xff] %v1989
      %1991 = vrot.lane.b32.xlu0 %v1982, 15
      %v1992 = vpop.permute.xlu0 %1991
      %v1993 = vmul.f32 %v1992, %v1865
      %1994 = vst [vmem:[#allocation4 + $0xa0] sm:$0xff] %v1993
      %1995 = vrot.lane.b32.xlu0 %v1982, 1
      %v1996 = vpop.permute.xlu0 %1995
      %v1997 = vmul.f32 %v1996, %v1875
      %1998 = vst [vmem:[#allocation4 + $0xa8] sm:$0xff] %v1997
      %v1999 = vmul.f32 %v1982, %v1883
      %2000 = vst [vmem:[#allocation4 + $0xb0] sm:$0xff] %v1999
      %2001 = vrot.lane.b32.xlu0 %v1982, 127
      %v2002 = vpop.permute.xlu0 %2001
      %v2003 = vmul.f32 %v2002, %v1893
      %2004 = vst [vmem:[#allocation4 + $0xb8] sm:$0xff] %v2003
      %2005 = vrot.lane.b32.xlu0 %v1982, 113
      %v2006 = vpop.permute.xlu0 %2005
      %v2007 = vmul.f32 %v2006, %v1903
      %2008 = vst [vmem:[#allocation4 + $0xc0] sm:$0xff] %v2007
      %2009 = vrot.lane.b32.xlu0 %v1982, 112
      %v2010 = vpop.permute.xlu0 %2009
      %v2011 = vmul.f32 %v2010, %v1913
      %2012 = vst [vmem:[#allocation4 + $0xc8] sm:$0xff] %v2011
      %2013 = vrot.lane.b32.xlu0 %v1982, 111
      %v2014 = vpop.permute.xlu0 %2013
      %v2015 = vmul.f32 %v2014, %v1923
      %2016 = vst [vmem:[#allocation4 + $0xd0] sm:$0xff] %v2015
      %v2017 = vld [vmem:[%s6] sm:$0xff]
      %v2018 = vld [vmem:[%s6 + $0x8] sm:$0xff]
      %v2019 = vld [vmem:[#allocation4] sm:$0xff]
      %v2020 = vld [vmem:[#allocation4 + $0x8] sm:$0xff]
      %v2021 = vld [vmem:[#allocation4 + $0x10] sm:$0xff]
      %v2022 = vld [vmem:[#allocation4 + $0x18] sm:$0xff]
      %v2023 = vld [vmem:[#allocation4 + $0x20] sm:$0xff]
      %v2024 = vld [vmem:[#allocation4 + $0x28] sm:$0xff]
      %v2025 = vld [vmem:[#allocation4 + $0x30] sm:$0xff]
      %v2026 = vld [vmem:[#allocation4 + $0x38] sm:$0xff]
      %v2027 = vld [vmem:[#allocation4 + $0x40] sm:$0xff]
      %v2028 = vld [vmem:[#allocation4 + $0x48] sm:$0xff]
      %v2029 = vld [vmem:[#allocation4 + $0x50] sm:$0xff]
      %v2030 = vld [vmem:[#allocation4 + $0x58] sm:$0xff]
      %v2031 = vld [vmem:[#allocation4 + $0x60] sm:$0xff]
      %v2032 = vld [vmem:[#allocation4 + $0x68] sm:$0xff]
      %v2033 = vld [vmem:[#allocation4 + $0x70] sm:$0xff]
      %v2034 = vld [vmem:[#allocation4 + $0x78] sm:$0xff]
      %v2035 = vld [vmem:[#allocation4 + $0x80] sm:$0xff]
      %v2036 = vld [vmem:[#allocation4 + $0x88] sm:$0xff]
      %v2037 = vld [vmem:[#allocation4 + $0x90] sm:$0xff]
      %v2038 = vld [vmem:[#allocation4 + $0x98] sm:$0xff]
      %v2039 = vld [vmem:[#allocation4 + $0xa0] sm:$0xff]
      %v2040 = vld [vmem:[#allocation4 + $0xa8] sm:$0xff]
      %v2041 = vld [vmem:[#allocation4 + $0xb0] sm:$0xff]
      %v2042 = vld [vmem:[#allocation4 + $0xb8] sm:$0xff]
      %v2043 = vld [vmem:[#allocation4 + $0xc0] sm:$0xff]
      %v2044 = vld [vmem:[#allocation4 + $0xc8] sm:$0xff]
      %v2045 = vld [vmem:[#allocation4 + $0xd0] sm:$0xff]
      %v2046 = vld [vmem:[%s7] sm:$0xff]
      %2048 = vset.pattern.permute.xlu0 0
      %2049 = vperm.xlu0 %2048, %v2046
      %v2050 = vpop.permute.xlu0 %2049
      %vm2052 = vcmask 719872
      %v2054 = vsel %vm2052, %v2018, 0
      %2056 = vmatprep.subr.mxu0 0.0
      %2057 = vmatpush1.msra.mxu0 %v2019
      %2058 = vmatprep.subr.mxu0 0.0
      %2059 = vmatpush1.msra.mxu0 %v2020
      %2060 = vmatprep.subr.mxu0 0.0
      %2061 = vmatpush1.msra.mxu0 %v2021
      %2062 = vmatprep.subr.mxu0 0.0
      %2063 = vmatpush1.msra.mxu0 %v2022
      %2064 = vmatprep.subr.mxu0 0.0
      %2065 = vmatpush1.msra.mxu0 %v2023
      %2066 = vmatprep.subr.mxu0 0.0
      %2067 = vmatpush1.msra.mxu0 %v2024
      %2068 = vmatprep.subr.mxu0 0.0
      %2069 = vmatpush1.msra.mxu0 %v2025
      %2070 = vmatprep.subr.mxu0 0.0
      %2071 = vmatpush1.msra.mxu0 %v2026
      %2072 = vmatprep.subr.mxu0 0.0
      %2073 = vmatpush1.msra.mxu0 %v2027
      %2074 = vmatprep.subr.mxu0 0.0
      %2075 = vmatpush1.msra.mxu0 %v2028
      %2076 = vmatprep.subr.mxu0 0.0
      %2077 = vmatpush1.msra.mxu0 %v2029
      %2078 = vmatprep.subr.mxu0 0.0
      %2079 = vmatpush1.msra.mxu0 %v2030
      %2080 = vmatprep.subr.mxu0 0.0
      %2081 = vmatpush1.msra.mxu0 %v2031
      %2082 = vmatprep.subr.mxu0 0.0
      %2083 = vmatpush1.msra.mxu0 %v2032
      %2084 = vmatprep.subr.mxu0 0.0
      %2085 = vmatpush1.msra.mxu0 %v2033
      %2086 = vmatprep.subr.mxu0 0.0
      %2087 = vmatpush1.msra.mxu0 %v2034
      %2088 = vmatprep.subr.mxu0 0.0
      %2089 = vmatpush1.msra.mxu0 %v2035
      %2090 = vmatprep.subr.mxu0 0.0
      %2091 = vmatpush1.msra.mxu0 %v2036
      %2092 = vmatprep.subr.mxu0 0.0
      %2093 = vmatpush1.msra.mxu0 %v2037
      %2094 = vmatprep.subr.mxu0 0.0
      %2095 = vmatpush1.msra.mxu0 %v2038
      %2096 = vmatprep.subr.mxu0 0.0
      %2097 = vmatpush1.msra.mxu0 %v2039
      %2098 = vmatprep.subr.mxu0 0.0
      %2099 = vmatpush1.msra.mxu0 %v2040
      %2100 = vmatprep.subr.mxu0 0.0
      %2101 = vmatpush1.msra.mxu0 %v2041
      %2102 = vmatprep.subr.mxu0 0.0
      %2103 = vmatpush1.msra.mxu0 %v2042
      %2104 = vmatprep.subr.mxu0 0.0
      %2105 = vmatpush1.msra.mxu0 %v2043
      %2106 = vmatprep.subr.mxu0 0.0
      %2107 = vmatpush1.msra.mxu0 %v2044
      %2108 = vmatprep.subr.mxu0 0.0
      %2109 = vmatpush1.msra.mxu0 %v2045
      %2110 = vmatprep.subr.mxu0 0.0
      %2111 = vmatpush1.msra.mxu0 0.0
      %2112 = vmatprep.subr.mxu0 0.0
      %2113 = vmatpush1.msra.mxu0 0.0
      %2114 = vmatprep.subr.mxu0 0.0
      %2115 = vmatpush1.msra.mxu0 0.0
      %2116 = vmatprep.subr.mxu0 0.0
      %2117 = vmatpush1.msra.mxu0 0.0
      %2118 = vmatprep.subr.mxu0 0.0
      %2119 = vmatpush1.msra.mxu0 0.0
      %2120 = vmatprep.mubr.f32.mxu0 %v2054
      %2121 = vmatmul.mubr.f32.gmra.mrb[0].mxu0 %v2017
      %v2122 = vpop.f32.mrb[0].mxu0
      %v2123 = vadd.f32 %v2050, %v2122
      %v2124 = vpop.f32.mrb[0].mxu0
      %2125 = vdwg.mxu0
      %v2126 = vmax.f32 %v2123, 0.0
      %2127 = vst [vmem:[%s339] sm:$0xff] %v2126
      %p2128 = scmp.lt.s32.totalorder %s23, 1
      %s2129 = scalar_select %p2128, %s23, 1
      %p2130 = scmp.lt.s32.totalorder %s24, 3
      %s2131 = scalar_select %p2130, %s24, 3
      %s2132 = smul.addr %s2129, 4
      %s2133 = sadd.s32 %s2131, %s2132
      %s2134 = smul.addr %s2133, 8
      %s2135 = scalar_lea.vmem %s8, %s2134
      // Predicated region
      $region73: #{cost_volume_forward.3} parent=51 // pred_check
        %p2136 = pneg %p229
      $region74: #{cost_volume_forward.3} parent=51 // pred_check_branch
        %2138 = sbr.rel (%p2136) target = $region76
      $region75: #{cost_volume_forward.3} parent=51 // pred_region
        _
      $region76: #{cost_volume_forward.3} parent=51 // pred_fallthru
        _
    $region52: #{cost_volume_forward.3} parent=5 // pred_fallthru
      _
    %p2139 = scmp.le.s32.totalorder 2, %s14
    // Predicated region
    $region77: #{cost_volume_forward.3} parent=5 // pred_check
      %p2140 = pneg %p2139
    $region78: #{cost_volume_forward.3} parent=5 // pred_check_branch
      %2142 = sbr.rel (%p2140) target = $region80
    $region79: #{cost_volume_forward.3} parent=5 // pred_region
      %s2143 = ssub.s32 %s14, 2
      // Predicated region
      $region81: #{cost_volume_forward.3} parent=79 // pred_check
        %p2144 = pneg %p235
      $region82: #{cost_volume_forward.3} parent=79 // pred_check_branch
        %2146 = sbr.rel (%p2144) target = $region84
      $region83: #{cost_volume_forward.3} parent=79 // pred_region
        %p2147 = scmp.lt.s32.totalorder %s25, 1
        %s2148 = scalar_select %p2147, %s25, 1
        %p2149 = scmp.lt.s32.totalorder %s26, 3
        %s2150 = scalar_select %p2149, %s26, 3
        %s2151 = smul.addr %s2148, 4
        %s2152 = sadd.s32 %s2150, %s2151
        %s2153 = smul.addr %s2152, 8
        %s2154 = scalar_lea.vmem %s8, %s2153
      $region84: #{cost_volume_forward.3} parent=79 // pred_fallthru
        _
    $region80: #{cost_volume_forward.3} parent=5 // pred_fallthru
      _
  $region6: #{cost_volume_forward.3} parent=0 // loop_footer
    %s18 = sadd.s32 1, %s14
  $region7: #{cost_volume_forward.3} parent=0 // loop_footer_branch
    %13 = sbr.rel target = $region3
  $region8: #{cost_volume_forward.3} parent=0 // loop_exit
    _

</llo_original>
